<compile_context>
chip_gen: v7x
topology: tpu7x:2x2x1
jax: 0.10.0
libtpu: 0.0.40
codegen_flags: <defaults>
</compile_context>

<pallas_src>
import functools

import numpy as np
import jax
import jax.numpy as jnp
from jax.experimental import pallas as pl
from jax.experimental.pallas import tpu as pltpu

EPS = 1e-5


# -----------------------------------------------------------------------------
# In-kernel helpers
# -----------------------------------------------------------------------------
def _accum_taps(a, w_ref, Wp, Lout):
    """a: (Cin, Lin) bf16 activation on a flattened padded grid with row stride
    Wp.  w_ref: (9, Cout, Cin) bf16 (tap t = dy*3 + dx).  Returns the merged
    3x3 conv as 9 constant-offset lane slices x 9 small matmuls, accumulated
    in f32 (Cout, Lout)."""
    acc = None
    for dy in range(3):
        for dx in range(3):
            t = dy * 3 + dx
            o = dy * Wp + dx
            a_t = a[:, o:o + Lout]                      # static lane-dim slice
            d = jnp.dot(w_ref[t], a_t, preferred_element_type=jnp.float32)
            acc = d if acc is None else acc + d
    return acc


def _conv1_kernel(x_ref, w_ref, mask_ref, y_ref, sum_ref, sq_ref, *, Wp, Lout):
    # x_ref   : (1, Cin, L1) bf16   padded+flattened input image
    # w_ref   : (9, C, Cin)  bf16
    # mask_ref: (1, Lout)    f32    1.0 on original HxW positions, else 0.0
    # y_ref   : (1, C, Lout) bf16   conv1 output on the offset-P padded grid
    # sum/sq  : (1, C, 1)    f32    per-image partial BN statistics
    a = x_ref[0]
    acc = _accum_taps(a, w_ref, Wp, Lout)
    y = acc * mask_ref[...]                             # zero the halo ring
    y_ref[0] = y.astype(y_ref.dtype)
    sum_ref[0] = jnp.sum(y, axis=1, keepdims=True)
    sq_ref[0] = jnp.sum(y * y, axis=1, keepdims=True)


def _conv2_kernel(y1_ref, w_ref, scale_ref, shift_ref, m_in_ref, m_out_ref,
                  y_ref, sum_ref, sq_ref, *, Wp, Lout):
    # BN1 + ReLU fused as the in-kernel prologue, then conv2 + BN2 partial stats.
    y1 = y1_ref[0].astype(jnp.float32)                  # (C, L2)
    a = jnp.maximum(y1 * scale_ref[...] + shift_ref[...], 0.0) * m_in_ref[...]
    acc = _accum_taps(a.astype(jnp.bfloat16), w_ref, Wp, Lout)
    y = acc * m_out_ref[...]
    y_ref[0] = y.astype(y_ref.dtype)
    sum_ref[0] = jnp.sum(y, axis=1, keepdims=True)
    sq_ref[0] = jnp.sum(y * y, axis=1, keepdims=True)


def _bn_relu_pool_kernel(yq_ref, scale_ref, shift_ref, o_ref):
    # yq_ref : (1, 4, C, Ho*Wo) bf16  quadrants of each 2x2 window
    # o_ref  : (1, C, Ho*Wo)    f32
    s = scale_ref[...]
    t = shift_ref[...]
    acc = jnp.maximum(yq_ref[0, 0].astype(jnp.float32) * s + t, 0.0)
    for q in range(1, 4):
        acc = acc + jnp.maximum(yq_ref[0, q].astype(jnp.float32) * s + t, 0.0)
    o_ref[0] = (acc * 0.25).astype(o_ref.dtype)


# -----------------------------------------------------------------------------
# Glue
# -----------------------------------------------------------------------------
def _bn_scale_shift(psum, psq, count, gamma, beta):
    # training-mode BatchNorm2d: per-channel batch stats, biased variance.
    mean = jnp.sum(psum, axis=0)[:, 0] / count
    msq = jnp.sum(psq, axis=0)[:, 0] / count
    var = jnp.maximum(msq - mean * mean, 0.0)
    scale = gamma * jax.lax.rsqrt(var + EPS)
    shift = beta - mean * scale
    return (scale[:, None].astype(jnp.float32),
            shift[:, None].astype(jnp.float32))


def init_conv_block_params(key, in_channels, out_channels):
    k1, k2 = jax.random.split(key)
    std1 = float(np.sqrt(2.0 / (in_channels * 9)))     # kaiming_normal_, fan_in
    std2 = float(np.sqrt(2.0 / (out_channels * 9)))
    return dict(
        w1=jax.random.normal(k1, (out_channels, in_channels, 3, 3), jnp.float32) * std1,
        b1=jnp.zeros((out_channels,), jnp.float32),
        g1=jnp.ones((out_channels,), jnp.float32),
        beta1=jnp.zeros((out_channels,), jnp.float32),
        w2=jax.random.normal(k2, (out_channels, out_channels, 3, 3), jnp.float32) * std2,
        b2=jnp.zeros((out_channels,), jnp.float32),
        g2=jnp.ones((out_channels,), jnp.float32),
        beta2=jnp.zeros((out_channels,), jnp.float32),
    )


def conv_block_forward(x_nchw, params):
    N, Cin, H, W = x_nchw.shape
    assert H % 2 == 0 and W % 2 == 0, "avg_pool2d(2) path assumes even H, W"
    C = params["w1"].shape[0]
    Hp, Wp = H + 2, W + 2
    Ho, Wo = H // 2, W // 2
    P = Wp + 1                 # halo margin on the flattened padded grid
    Lp = Hp * Wp               # pad-1 grid, flattened
    L2 = Lp + 2 * P            # conv1 output / conv2 input width
    L1 = Lp + 4 * P            # conv1 input width
    count = N * H * W

    # Static interior masks (1.0 exactly on the original HxW positions).
    def interior_mask(width, offset):
        m = np.arange(width) - offset
        i = np.floor_divide(m, Wp)
        j = m - i * Wp
        ok = (i >= 1) & (i <= H) & (j >= 1) & (j <= W)
        return jnp.asarray(ok[None, :].astype(np.float32))

    mask_p = interior_mask(L2, P)      # offset-P grid (conv1 out / conv2 in)
    mask_0 = interior_mask(Lp, 0)      # offset-0 grid (conv2 out)

    # Weights: (O, I, 3, 3) -> (9, O, I) bf16, tap index t = dy*3 + dx.
    w1 = jnp.transpose(params["w1"], (2, 3, 0, 1)).reshape(9, C, Cin).astype(jnp.bfloat16)
    w2 = jnp.transpose(params["w2"], (2, 3, 0, 1)).reshape(9, C, C).astype(jnp.bfloat16)
    # Conv biases omitted: a bias immediately followed by training-mode BN is
    # exactly cancelled by the mean subtraction (and b1/b2 are zeros here).

    # conv1 input: spatial pad 1, flatten spatial, 1-D pad 2P each side, bf16.
    xp = jnp.pad(x_nchw, ((0, 0), (0, 0), (1, 1), (1, 1)))
    xf = jnp.pad(xp.reshape(N, Cin, Lp), ((0, 0), (0, 0), (2 * P, 2 * P)))
    xf = xf.astype(jnp.bfloat16)                                  # (N, Cin, L1)

    parallel = pltpu.CompilerParams(dimension_semantics=("parallel",))

    # ---- kernel 1: conv1 + per-image BN1 partial statistics -----------------
    y1p, s1, q1 = pl.pallas_call(
        functools.partial(_conv1_kernel, Wp=Wp, Lout=L2),
        out_shape=(jax.ShapeDtypeStruct((N, C, L2), jnp.bfloat16),
                   jax.ShapeDtypeStruct((N, C, 1), jnp.float32),
                   jax.ShapeDtypeStruct((N, C, 1), jnp.float32)),
        grid=(N,),
        in_specs=[pl.BlockSpec((1, Cin, L1), lambda n: (n, 0, 0)),
                  pl.BlockSpec((9, C, Cin), lambda n: (0, 0, 0)),
                  pl.BlockSpec((1, L2), lambda n: (0, 0))],
        out_specs=(pl.BlockSpec((1, C, L2), lambda n: (n, 0, 0)),
                   pl.BlockSpec((1, C, 1), lambda n: (n, 0, 0)),
                   pl.BlockSpec((1, C, 1), lambda n: (n, 0, 0))),
        compiler_params=parallel,
    )(xf, w1, mask_p)
    scale1, shift1 = _bn_scale_shift(s1, q1, count, params["g1"], params["beta1"])

    # ---- kernel 2: fused BN1+ReLU prologue + conv2 + BN2 partial stats ------
    y2p, s2, q2 = pl.pallas_call(
        functools.partial(_conv2_kernel, Wp=Wp, Lout=Lp),
        out_shape=(jax.ShapeDtypeStruct((N, C, Lp), jnp.bfloat16),
                   jax.ShapeDtypeStruct((N, C, 1), jnp.float32),
                   jax.ShapeDtypeStruct((N, C, 1), jnp.float32)),
        grid=(N,),
        in_specs=[pl.BlockSpec((1, C, L2), lambda n: (n, 0, 0)),
                  pl.BlockSpec((9, C, C), lambda n: (0, 0, 0)),
                  pl.BlockSpec((C, 1), lambda n: (0, 0)),
                  pl.BlockSpec((C, 1), lambda n: (0, 0)),
                  pl.BlockSpec((1, L2), lambda n: (0, 0)),
                  pl.BlockSpec((1, Lp), lambda n: (0, 0))],
        out_specs=(pl.BlockSpec((1, C, Lp), lambda n: (n, 0, 0)),
                   pl.BlockSpec((1, C, 1), lambda n: (n, 0, 0)),
                   pl.BlockSpec((1, C, 1), lambda n: (n, 0, 0))),
        compiler_params=parallel,
    )(y1p, w2, scale1, shift1, mask_p, mask_0)
    scale2, shift2 = _bn_scale_shift(s2, q2, count, params["g2"], params["beta2"])

    # Quadrant-major reorder of the small bf16 y2 for the pool kernel.
    y2 = y2p.reshape(N, C, Hp, Wp)[:, :, 1:H + 1, 1:W + 1]
    y2q = y2.reshape(N, C, Ho, 2, Wo, 2).transpose(0, 3, 5, 1, 2, 4)
    y2q = y2q.reshape(N, 4, C, Ho * Wo)

    # ---- kernel 3: BN2 + ReLU + 2x2 average pool ----------------------------
    out = pl.pallas_call(
        _bn_relu_pool_kernel,
        out_shape=jax.ShapeDtypeStruct((N, C, Ho * Wo), jnp.float32),
        grid=(N,),
        in_specs=[pl.BlockSpec((1, 4, C, Ho * Wo), lambda n: (n, 0, 0, 0)),
                  pl.BlockSpec((C, 1), lambda n: (0, 0)),
                  pl.BlockSpec((C, 1), lambda n: (0, 0))],
        out_specs=pl.BlockSpec((1, C, Ho * Wo), lambda n: (n, 0, 0)),
        compiler_params=parallel,
    )(y2q, scale2, shift2)
    return out.reshape(N, C, Ho, Wo)


# -----------------------------------------------------------------------------
# Pure-JAX reference for a numerical sanity check.
# -----------------------------------------------------------------------------
def conv_block_reference(x_nchw, params):
    def conv(x, w, b):
        y = jax.lax.conv_general_dilated(
            x, w, window_strides=(1, 1), padding=((1, 1), (1, 1)),
            dimension_numbers=("NCHW", "OIHW", "NCHW"),
            precision=jax.lax.Precision.HIGHEST)
        return y + b[None, :, None, None]

    def bn_relu_ref(x, g, be):
        mean = jnp.mean(x, axis=(0, 2, 3), keepdims=True)
        var = jnp.var(x, axis=(0, 2, 3), keepdims=True)
        y = (x - mean) * jax.lax.rsqrt(var + EPS)
        y = y * g[None, :, None, None] + be[None, :, None, None]
        return jnp.maximum(y, 0.0)

    y = bn_relu_ref(conv(x_nchw, params["w1"], params["b1"]),
                    params["g1"], params["beta1"])
    z = bn_relu_ref(conv(y, params["w2"], params["b2"]),
                    params["g2"], params["beta2"])
    N, C, H, W = z.shape
    return z.reshape(N, C, H // 2, 2, W // 2, 2).mean(axis=(3, 5))


if __name__ == "__main__":
    key = jax.random.PRNGKey(0)
    kx, kp = jax.random.split(key)

    N, Cin, Cout, H, W = 2, 4, 8, 16, 16
    x = jax.random.normal(kx, (N, Cin, H, W), jnp.float32)
    params = init_conv_block_params(kp, Cin, Cout)

    fwd = jax.jit(conv_block_forward)
    out = jax.block_until_ready(fwd(x, params))
    ref = jax.block_until_ready(conv_block_reference(x, params))

    assert out.shape == (N, Cout, H // 2, W // 2), out.shape
    # Tolerance documented for the bf16 pipeline (bf16 MXU operands AND bf16
    # y1/y2 intermediates, f32 accumulation/statistics) vs an f32 HIGHEST
    # precision reference.
    max_err = float(jnp.max(jnp.abs(out - ref)))
    assert max_err < 6e-2, f"max abs error vs reference: {max_err}"
    print("KERNEL_OK")
</pallas_src>

<mosaic_0001>
module attributes {stable_mosaic.version = 11 : i64} {
  func.func @_conv1_kernel(%arg0: i32, %arg1: memref<1x4x400xbf16, #tpu.memory_space<vmem>>, %arg2: memref<9x8x4xbf16, #tpu.memory_space<vmem>>, %arg3: memref<1x362xf32, #tpu.memory_space<vmem>>, %arg4: memref<1x8x362xbf16, #tpu.memory_space<vmem>>, %arg5: memref<1x8x1xf32, #tpu.memory_space<vmem>>, %arg6: memref<1x8x1xf32, #tpu.memory_space<vmem>>) attributes {dimension_semantics = [#tpu.dimension_semantics<parallel>], iteration_bounds = array<i64: 2>, scalar_prefetch = 0 : i64, scratch_operands = 0 : i64, tpu.core_type = #tpu.core_type<tc>, window_params = [{transform_indices = @transform_0, window_bounds = array<i64: 1, 4, 400>}, {pipeline_mode = #tpu.pipeline_mode<synchronous>, transform_indices = @transform_1, window_bounds = array<i64: 9, 8, 4>}, {pipeline_mode = #tpu.pipeline_mode<synchronous>, transform_indices = @transform_2, window_bounds = array<i64: 1, 362>}, {transform_indices = @transform_3, window_bounds = array<i64: 1, 8, 362>}, {transform_indices = @transform_4, window_bounds = array<i64: 1, 8, 1>}, {transform_indices = @transform_5, window_bounds = array<i64: 1, 8, 1>}]} {
    %c0 = arith.constant 0 : index
    %c0_0 = arith.constant 0 : index
    %c0_1 = arith.constant 0 : index
    %0 = vector.load %arg1[%c0, %c0_0, %c0_1] : memref<1x4x400xbf16, #tpu.memory_space<vmem>>, vector<1x4x400xbf16>
    %1 = vector.shape_cast %0 : vector<1x4x400xbf16> to vector<4x400xbf16>
    %2 = vector.extract_strided_slice %1 {offsets = [0, 0], sizes = [4, 362], strides = [1, 1]} : vector<4x400xbf16> to vector<4x362xbf16>
    %c0_2 = arith.constant 0 : index
    %c0_3 = arith.constant 0 : index
    %c0_4 = arith.constant 0 : index
    %3 = vector.load %arg2[%c0_2, %c0_3, %c0_4] : memref<9x8x4xbf16, #tpu.memory_space<vmem>>, vector<1x8x4xbf16>
    %4 = vector.shape_cast %3 : vector<1x8x4xbf16> to vector<8x4xbf16>
    %cst = arith.constant dense<0.000000e+00> : vector<8x362xf32>
    %5 = tpu.matmul %4, %2, %cst {dimension_numbers = #tpu.dot_dimension_numbers<[1], [0], [0], [1], [0, 0, 1, 1], [], []>} : vector<8x4xbf16>, vector<4x362xbf16>, vector<8x362xf32> -> vector<8x362xf32>
    %6 = vector.extract_strided_slice %1 {offsets = [0, 1], sizes = [4, 362], strides = [1, 1]} : vector<4x400xbf16> to vector<4x362xbf16>
    %c1 = arith.constant 1 : index
    %c0_5 = arith.constant 0 : index
    %c0_6 = arith.constant 0 : index
    %7 = vector.load %arg2[%c1, %c0_5, %c0_6] : memref<9x8x4xbf16, #tpu.memory_space<vmem>>, vector<1x8x4xbf16>
    %8 = vector.shape_cast %7 : vector<1x8x4xbf16> to vector<8x4xbf16>
    %cst_7 = arith.constant dense<0.000000e+00> : vector<8x362xf32>
    %9 = tpu.matmul %8, %6, %cst_7 {dimension_numbers = #tpu.dot_dimension_numbers<[1], [0], [0], [1], [0, 0, 1, 1], [], []>} : vector<8x4xbf16>, vector<4x362xbf16>, vector<8x362xf32> -> vector<8x362xf32>
    %10 = arith.addf %5, %9 : vector<8x362xf32>
    %11 = vector.extract_strided_slice %1 {offsets = [0, 2], sizes = [4, 362], strides = [1, 1]} : vector<4x400xbf16> to vector<4x362xbf16>
    %c2 = arith.constant 2 : index
    %c0_8 = arith.constant 0 : index
    %c0_9 = arith.constant 0 : index
    %12 = vector.load %arg2[%c2, %c0_8, %c0_9] : memref<9x8x4xbf16, #tpu.memory_space<vmem>>, vector<1x8x4xbf16>
    %13 = vector.shape_cast %12 : vector<1x8x4xbf16> to vector<8x4xbf16>
    %cst_10 = arith.constant dense<0.000000e+00> : vector<8x362xf32>
    %14 = tpu.matmul %13, %11, %cst_10 {dimension_numbers = #tpu.dot_dimension_numbers<[1], [0], [0], [1], [0, 0, 1, 1], [], []>} : vector<8x4xbf16>, vector<4x362xbf16>, vector<8x362xf32> -> vector<8x362xf32>
    %15 = arith.addf %10, %14 : vector<8x362xf32>
    %16 = vector.extract_strided_slice %1 {offsets = [0, 18], sizes = [4, 362], strides = [1, 1]} : vector<4x400xbf16> to vector<4x362xbf16>
    %c3 = arith.constant 3 : index
    %c0_11 = arith.constant 0 : index
    %c0_12 = arith.constant 0 : index
    %17 = vector.load %arg2[%c3, %c0_11, %c0_12] : memref<9x8x4xbf16, #tpu.memory_space<vmem>>, vector<1x8x4xbf16>
    %18 = vector.shape_cast %17 : vector<1x8x4xbf16> to vector<8x4xbf16>
    %cst_13 = arith.constant dense<0.000000e+00> : vector<8x362xf32>
    %19 = tpu.matmul %18, %16, %cst_13 {dimension_numbers = #tpu.dot_dimension_numbers<[1], [0], [0], [1], [0, 0, 1, 1], [], []>} : vector<8x4xbf16>, vector<4x362xbf16>, vector<8x362xf32> -> vector<8x362xf32>
    %20 = arith.addf %15, %19 : vector<8x362xf32>
    %21 = vector.extract_strided_slice %1 {offsets = [0, 19], sizes = [4, 362], strides = [1, 1]} : vector<4x400xbf16> to vector<4x362xbf16>
    %c4 = arith.constant 4 : index
    %c0_14 = arith.constant 0 : index
    %c0_15 = arith.constant 0 : index
    %22 = vector.load %arg2[%c4, %c0_14, %c0_15] : memref<9x8x4xbf16, #tpu.memory_space<vmem>>, vector<1x8x4xbf16>
    %23 = vector.shape_cast %22 : vector<1x8x4xbf16> to vector<8x4xbf16>
    %cst_16 = arith.constant dense<0.000000e+00> : vector<8x362xf32>
    %24 = tpu.matmul %23, %21, %cst_16 {dimension_numbers = #tpu.dot_dimension_numbers<[1], [0], [0], [1], [0, 0, 1, 1], [], []>} : vector<8x4xbf16>, vector<4x362xbf16>, vector<8x362xf32> -> vector<8x362xf32>
    %25 = arith.addf %20, %24 : vector<8x362xf32>
    %26 = vector.extract_strided_slice %1 {offsets = [0, 20], sizes = [4, 362], strides = [1, 1]} : vector<4x400xbf16> to vector<4x362xbf16>
    %c5 = arith.constant 5 : index
    %c0_17 = arith.constant 0 : index
    %c0_18 = arith.constant 0 : index
    %27 = vector.load %arg2[%c5, %c0_17, %c0_18] : memref<9x8x4xbf16, #tpu.memory_space<vmem>>, vector<1x8x4xbf16>
    %28 = vector.shape_cast %27 : vector<1x8x4xbf16> to vector<8x4xbf16>
    %cst_19 = arith.constant dense<0.000000e+00> : vector<8x362xf32>
    %29 = tpu.matmul %28, %26, %cst_19 {dimension_numbers = #tpu.dot_dimension_numbers<[1], [0], [0], [1], [0, 0, 1, 1], [], []>} : vector<8x4xbf16>, vector<4x362xbf16>, vector<8x362xf32> -> vector<8x362xf32>
    %30 = arith.addf %25, %29 : vector<8x362xf32>
    %31 = vector.extract_strided_slice %1 {offsets = [0, 36], sizes = [4, 362], strides = [1, 1]} : vector<4x400xbf16> to vector<4x362xbf16>
    %c6 = arith.constant 6 : index
    %c0_20 = arith.constant 0 : index
    %c0_21 = arith.constant 0 : index
    %32 = vector.load %arg2[%c6, %c0_20, %c0_21] : memref<9x8x4xbf16, #tpu.memory_space<vmem>>, vector<1x8x4xbf16>
    %33 = vector.shape_cast %32 : vector<1x8x4xbf16> to vector<8x4xbf16>
    %cst_22 = arith.constant dense<0.000000e+00> : vector<8x362xf32>
    %34 = tpu.matmul %33, %31, %cst_22 {dimension_numbers = #tpu.dot_dimension_numbers<[1], [0], [0], [1], [0, 0, 1, 1], [], []>} : vector<8x4xbf16>, vector<4x362xbf16>, vector<8x362xf32> -> vector<8x362xf32>
    %35 = arith.addf %30, %34 : vector<8x362xf32>
    %36 = vector.extract_strided_slice %1 {offsets = [0, 37], sizes = [4, 362], strides = [1, 1]} : vector<4x400xbf16> to vector<4x362xbf16>
    %c7 = arith.constant 7 : index
    %c0_23 = arith.constant 0 : index
    %c0_24 = arith.constant 0 : index
    %37 = vector.load %arg2[%c7, %c0_23, %c0_24] : memref<9x8x4xbf16, #tpu.memory_space<vmem>>, vector<1x8x4xbf16>
    %38 = vector.shape_cast %37 : vector<1x8x4xbf16> to vector<8x4xbf16>
    %cst_25 = arith.constant dense<0.000000e+00> : vector<8x362xf32>
    %39 = tpu.matmul %38, %36, %cst_25 {dimension_numbers = #tpu.dot_dimension_numbers<[1], [0], [0], [1], [0, 0, 1, 1], [], []>} : vector<8x4xbf16>, vector<4x362xbf16>, vector<8x362xf32> -> vector<8x362xf32>
    %40 = arith.addf %35, %39 : vector<8x362xf32>
    %41 = vector.extract_strided_slice %1 {offsets = [0, 38], sizes = [4, 362], strides = [1, 1]} : vector<4x400xbf16> to vector<4x362xbf16>
    %c8 = arith.constant 8 : index
    %c0_26 = arith.constant 0 : index
    %c0_27 = arith.constant 0 : index
    %42 = vector.load %arg2[%c8, %c0_26, %c0_27] : memref<9x8x4xbf16, #tpu.memory_space<vmem>>, vector<1x8x4xbf16>
    %43 = vector.shape_cast %42 : vector<1x8x4xbf16> to vector<8x4xbf16>
    %cst_28 = arith.constant dense<0.000000e+00> : vector<8x362xf32>
    %44 = tpu.matmul %43, %41, %cst_28 {dimension_numbers = #tpu.dot_dimension_numbers<[1], [0], [0], [1], [0, 0, 1, 1], [], []>} : vector<8x4xbf16>, vector<4x362xbf16>, vector<8x362xf32> -> vector<8x362xf32>
    %45 = arith.addf %40, %44 : vector<8x362xf32>
    %c0_29 = arith.constant 0 : index
    %c0_30 = arith.constant 0 : index
    %46 = vector.load %arg3[%c0_29, %c0_30] : memref<1x362xf32, #tpu.memory_space<vmem>>, vector<1x362xf32>
    %47 = vector.broadcast %46 : vector<1x362xf32> to vector<8x362xf32>
    %48 = arith.mulf %45, %47 : vector<8x362xf32>
    %49 = arith.truncf %48 : vector<8x362xf32> to vector<8x362xbf16>
    %c0_31 = arith.constant 0 : index
    %c0_32 = arith.constant 0 : index
    %c0_33 = arith.constant 0 : index
    %50 = vector.load %arg4[%c0_31, %c0_32, %c0_33] : memref<1x8x362xbf16, #tpu.memory_space<vmem>>, vector<1x8x362xbf16>
    %51 = vector.shape_cast %50 : vector<1x8x362xbf16> to vector<8x362xbf16>
    %52 = vector.shape_cast %49 : vector<8x362xbf16> to vector<1x8x362xbf16>
    tpu.vector_store %arg4[%c0_31, %c0_32, %c0_33], %52 {strides = array<i32>} : memref<1x8x362xbf16, #tpu.memory_space<vmem>>, vector<1x8x362xbf16>,
    %cst_34 = arith.constant dense<0.000000e+00> : vector<8xf32>
    %53 = vector.multi_reduction <add>, %48, %cst_34 [1] : vector<8x362xf32> to vector<8xf32>
    %54 = vector.shape_cast %53 : vector<8xf32> to vector<8x1xf32>
    %c0_35 = arith.constant 0 : index
    %c0_36 = arith.constant 0 : index
    %c0_37 = arith.constant 0 : index
    %55 = vector.load %arg5[%c0_35, %c0_36, %c0_37] : memref<1x8x1xf32, #tpu.memory_space<vmem>>, vector<1x8x1xf32>
    %56 = vector.shape_cast %55 : vector<1x8x1xf32> to vector<8x1xf32>
    %57 = vector.shape_cast %54 : vector<8x1xf32> to vector<1x8x1xf32>
    tpu.vector_store %arg5[%c0_35, %c0_36, %c0_37], %57 {strides = array<i32>} : memref<1x8x1xf32, #tpu.memory_space<vmem>>, vector<1x8x1xf32>,
    %58 = arith.mulf %48, %48 : vector<8x362xf32>
    %cst_38 = arith.constant dense<0.000000e+00> : vector<8xf32>
    %59 = vector.multi_reduction <add>, %58, %cst_38 [1] : vector<8x362xf32> to vector<8xf32>
    %60 = vector.shape_cast %59 : vector<8xf32> to vector<8x1xf32>
    %c0_39 = arith.constant 0 : index
    %c0_40 = arith.constant 0 : index
    %c0_41 = arith.constant 0 : index
    %61 = vector.load %arg6[%c0_39, %c0_40, %c0_41] : memref<1x8x1xf32, #tpu.memory_space<vmem>>, vector<1x8x1xf32>
    %62 = vector.shape_cast %61 : vector<1x8x1xf32> to vector<8x1xf32>
    %63 = vector.shape_cast %60 : vector<8x1xf32> to vector<1x8x1xf32>
    tpu.vector_store %arg6[%c0_39, %c0_40, %c0_41], %63 {strides = array<i32>} : memref<1x8x1xf32, #tpu.memory_space<vmem>>, vector<1x8x1xf32>,
    return
  }
  func.func @transform_0(%arg0: i32) -> (i32, i32, i32) {
    %c0_i32 = arith.constant 0 : i32
    %c0_i32_0 = arith.constant 0 : i32
    %c0_i32_1 = arith.constant 0 : i32
    return %arg0, %c0_i32, %c0_i32_0 : i32, i32, i32
  }
  func.func @transform_1(%arg0: i32) -> (i32, i32, i32) {
    %c0_i32 = arith.constant 0 : i32
    %c0_i32_0 = arith.constant 0 : i32
    %c0_i32_1 = arith.constant 0 : i32
    %c0_i32_2 = arith.constant 0 : i32
    return %c0_i32, %c0_i32_0, %c0_i32_1 : i32, i32, i32
  }
  func.func @transform_2(%arg0: i32) -> (i32, i32) {
    %c0_i32 = arith.constant 0 : i32
    %c0_i32_0 = arith.constant 0 : i32
    %c0_i32_1 = arith.constant 0 : i32
    return %c0_i32, %c0_i32_0 : i32, i32
  }
  func.func @transform_3(%arg0: i32) -> (i32, i32, i32) {
    %c0_i32 = arith.constant 0 : i32
    %c0_i32_0 = arith.constant 0 : i32
    %c0_i32_1 = arith.constant 0 : i32
    return %arg0, %c0_i32, %c0_i32_0 : i32, i32, i32
  }
  func.func @transform_4(%arg0: i32) -> (i32, i32, i32) {
    %c0_i32 = arith.constant 0 : i32
    %c0_i32_0 = arith.constant 0 : i32
    %c0_i32_1 = arith.constant 0 : i32
    return %arg0, %c0_i32, %c0_i32_0 : i32, i32, i32
  }
  func.func @transform_5(%arg0: i32) -> (i32, i32, i32) {
    %c0_i32 = arith.constant 0 : i32
    %c0_i32_0 = arith.constant 0 : i32
    %c0_i32_1 = arith.constant 0 : i32
    return %arg0, %c0_i32, %c0_i32_0 : i32, i32, i32
  }
}

module attributes {stable_mosaic.version = 11 : i64} {
  func.func @_conv2_kernel(%arg0: i32, %arg1: memref<1x8x362xbf16, #tpu.memory_space<vmem>>, %arg2: memref<9x8x8xbf16, #tpu.memory_space<vmem>>, %arg3: memref<8x1xf32, #tpu.memory_space<vmem>>, %arg4: memref<8x1xf32, #tpu.memory_space<vmem>>, %arg5: memref<1x362xf32, #tpu.memory_space<vmem>>, %arg6: memref<1x324xf32, #tpu.memory_space<vmem>>, %arg7: memref<1x8x324xbf16, #tpu.memory_space<vmem>>, %arg8: memref<1x8x1xf32, #tpu.memory_space<vmem>>, %arg9: memref<1x8x1xf32, #tpu.memory_space<vmem>>) attributes {dimension_semantics = [#tpu.dimension_semantics<parallel>], iteration_bounds = array<i64: 2>, scalar_prefetch = 0 : i64, scratch_operands = 0 : i64, tpu.core_type = #tpu.core_type<tc>, window_params = [{transform_indices = @transform_0, window_bounds = array<i64: 1, 8, 362>}, {pipeline_mode = #tpu.pipeline_mode<synchronous>, transform_indices = @transform_1, window_bounds = array<i64: 9, 8, 8>}, {pipeline_mode = #tpu.pipeline_mode<synchronous>, transform_indices = @transform_2, window_bounds = array<i64: 8, 1>}, {pipeline_mode = #tpu.pipeline_mode<synchronous>, transform_indices = @transform_3, window_bounds = array<i64: 8, 1>}, {pipeline_mode = #tpu.pipeline_mode<synchronous>, transform_indices = @transform_4, window_bounds = array<i64: 1, 362>}, {pipeline_mode = #tpu.pipeline_mode<synchronous>, transform_indices = @transform_5, window_bounds = array<i64: 1, 324>}, {transform_indices = @transform_6, window_bounds = array<i64: 1, 8, 324>}, {transform_indices = @transform_7, window_bounds = array<i64: 1, 8, 1>}, {transform_indices = @transform_8, window_bounds = array<i64: 1, 8, 1>}]} {
    %c0 = arith.constant 0 : index
    %c0_0 = arith.constant 0 : index
    %c0_1 = arith.constant 0 : index
    %0 = vector.load %arg1[%c0, %c0_0, %c0_1] : memref<1x8x362xbf16, #tpu.memory_space<vmem>>, vector<1x8x362xbf16>
    %1 = vector.shape_cast %0 : vector<1x8x362xbf16> to vector<8x362xbf16>
    %2 = arith.extf %1 : vector<8x362xbf16> to vector<8x362xf32>
    %c0_2 = arith.constant 0 : index
    %c0_3 = arith.constant 0 : index
    %3 = vector.load %arg3[%c0_2, %c0_3] : memref<8x1xf32, #tpu.memory_space<vmem>>, vector<8x1xf32>
    %4 = vector.broadcast %3 : vector<8x1xf32> to vector<8x362xf32>
    %5 = arith.mulf %2, %4 : vector<8x362xf32>
    %c0_4 = arith.constant 0 : index
    %c0_5 = arith.constant 0 : index
    %6 = vector.load %arg4[%c0_4, %c0_5] : memref<8x1xf32, #tpu.memory_space<vmem>>, vector<8x1xf32>
    %7 = vector.broadcast %6 : vector<8x1xf32> to vector<8x362xf32>
    %8 = arith.addf %5, %7 : vector<8x362xf32>
    %cst = arith.constant 0.000000e+00 : f32
    %9 = vector.broadcast %cst : f32 to vector<8x362xf32>
    %10 = arith.maximumf %8, %9 : vector<8x362xf32>
    %c0_6 = arith.constant 0 : index
    %c0_7 = arith.constant 0 : index
    %11 = vector.load %arg5[%c0_6, %c0_7] : memref<1x362xf32, #tpu.memory_space<vmem>>, vector<1x362xf32>
    %12 = vector.broadcast %11 : vector<1x362xf32> to vector<8x362xf32>
    %13 = arith.mulf %10, %12 : vector<8x362xf32>
    %14 = arith.truncf %13 : vector<8x362xf32> to vector<8x362xbf16>
    %15 = vector.extract_strided_slice %14 {offsets = [0, 0], sizes = [8, 324], strides = [1, 1]} : vector<8x362xbf16> to vector<8x324xbf16>
    %c0_8 = arith.constant 0 : index
    %c0_9 = arith.constant 0 : index
    %c0_10 = arith.constant 0 : index
    %16 = vector.load %arg2[%c0_8, %c0_9, %c0_10] : memref<9x8x8xbf16, #tpu.memory_space<vmem>>, vector<1x8x8xbf16>
    %17 = vector.shape_cast %16 : vector<1x8x8xbf16> to vector<8x8xbf16>
    %cst_11 = arith.constant dense<0.000000e+00> : vector<8x324xf32>
    %18 = tpu.matmul %17, %15, %cst_11 {dimension_numbers = #tpu.dot_dimension_numbers<[1], [0], [0], [1], [0, 0, 1, 1], [], []>} : vector<8x8xbf16>, vector<8x324xbf16>, vector<8x324xf32> -> vector<8x324xf32>
    %19 = vector.extract_strided_slice %14 {offsets = [0, 1], sizes = [8, 324], strides = [1, 1]} : vector<8x362xbf16> to vector<8x324xbf16>
    %c1 = arith.constant 1 : index
    %c0_12 = arith.constant 0 : index
    %c0_13 = arith.constant 0 : index
    %20 = vector.load %arg2[%c1, %c0_12, %c0_13] : memref<9x8x8xbf16, #tpu.memory_space<vmem>>, vector<1x8x8xbf16>
    %21 = vector.shape_cast %20 : vector<1x8x8xbf16> to vector<8x8xbf16>
    %cst_14 = arith.constant dense<0.000000e+00> : vector<8x324xf32>
    %22 = tpu.matmul %21, %19, %cst_14 {dimension_numbers = #tpu.dot_dimension_numbers<[1], [0], [0], [1], [0, 0, 1, 1], [], []>} : vector<8x8xbf16>, vector<8x324xbf16>, vector<8x324xf32> -> vector<8x324xf32>
    %23 = arith.addf %18, %22 : vector<8x324xf32>
    %24 = vector.extract_strided_slice %14 {offsets = [0, 2], sizes = [8, 324], strides = [1, 1]} : vector<8x362xbf16> to vector<8x324xbf16>
    %c2 = arith.constant 2 : index
    %c0_15 = arith.constant 0 : index
    %c0_16 = arith.constant 0 : index
    %25 = vector.load %arg2[%c2, %c0_15, %c0_16] : memref<9x8x8xbf16, #tpu.memory_space<vmem>>, vector<1x8x8xbf16>
    %26 = vector.shape_cast %25 : vector<1x8x8xbf16> to vector<8x8xbf16>
    %cst_17 = arith.constant dense<0.000000e+00> : vector<8x324xf32>
    %27 = tpu.matmul %26, %24, %cst_17 {dimension_numbers = #tpu.dot_dimension_numbers<[1], [0], [0], [1], [0, 0, 1, 1], [], []>} : vector<8x8xbf16>, vector<8x324xbf16>, vector<8x324xf32> -> vector<8x324xf32>
    %28 = arith.addf %23, %27 : vector<8x324xf32>
    %29 = vector.extract_strided_slice %14 {offsets = [0, 18], sizes = [8, 324], strides = [1, 1]} : vector<8x362xbf16> to vector<8x324xbf16>
    %c3 = arith.constant 3 : index
    %c0_18 = arith.constant 0 : index
    %c0_19 = arith.constant 0 : index
    %30 = vector.load %arg2[%c3, %c0_18, %c0_19] : memref<9x8x8xbf16, #tpu.memory_space<vmem>>, vector<1x8x8xbf16>
    %31 = vector.shape_cast %30 : vector<1x8x8xbf16> to vector<8x8xbf16>
    %cst_20 = arith.constant dense<0.000000e+00> : vector<8x324xf32>
    %32 = tpu.matmul %31, %29, %cst_20 {dimension_numbers = #tpu.dot_dimension_numbers<[1], [0], [0], [1], [0, 0, 1, 1], [], []>} : vector<8x8xbf16>, vector<8x324xbf16>, vector<8x324xf32> -> vector<8x324xf32>
    %33 = arith.addf %28, %32 : vector<8x324xf32>
    %34 = vector.extract_strided_slice %14 {offsets = [0, 19], sizes = [8, 324], strides = [1, 1]} : vector<8x362xbf16> to vector<8x324xbf16>
    %c4 = arith.constant 4 : index
    %c0_21 = arith.constant 0 : index
    %c0_22 = arith.constant 0 : index
    %35 = vector.load %arg2[%c4, %c0_21, %c0_22] : memref<9x8x8xbf16, #tpu.memory_space<vmem>>, vector<1x8x8xbf16>
    %36 = vector.shape_cast %35 : vector<1x8x8xbf16> to vector<8x8xbf16>
    %cst_23 = arith.constant dense<0.000000e+00> : vector<8x324xf32>
    %37 = tpu.matmul %36, %34, %cst_23 {dimension_numbers = #tpu.dot_dimension_numbers<[1], [0], [0], [1], [0, 0, 1, 1], [], []>} : vector<8x8xbf16>, vector<8x324xbf16>, vector<8x324xf32> -> vector<8x324xf32>
    %38 = arith.addf %33, %37 : vector<8x324xf32>
    %39 = vector.extract_strided_slice %14 {offsets = [0, 20], sizes = [8, 324], strides = [1, 1]} : vector<8x362xbf16> to vector<8x324xbf16>
    %c5 = arith.constant 5 : index
    %c0_24 = arith.constant 0 : index
    %c0_25 = arith.constant 0 : index
    %40 = vector.load %arg2[%c5, %c0_24, %c0_25] : memref<9x8x8xbf16, #tpu.memory_space<vmem>>, vector<1x8x8xbf16>
    %41 = vector.shape_cast %40 : vector<1x8x8xbf16> to vector<8x8xbf16>
    %cst_26 = arith.constant dense<0.000000e+00> : vector<8x324xf32>
    %42 = tpu.matmul %41, %39, %cst_26 {dimension_numbers = #tpu.dot_dimension_numbers<[1], [0], [0], [1], [0, 0, 1, 1], [], []>} : vector<8x8xbf16>, vector<8x324xbf16>, vector<8x324xf32> -> vector<8x324xf32>
    %43 = arith.addf %38, %42 : vector<8x324xf32>
    %44 = vector.extract_strided_slice %14 {offsets = [0, 36], sizes = [8, 324], strides = [1, 1]} : vector<8x362xbf16> to vector<8x324xbf16>
    %c6 = arith.constant 6 : index
    %c0_27 = arith.constant 0 : index
    %c0_28 = arith.constant 0 : index
    %45 = vector.load %arg2[%c6, %c0_27, %c0_28] : memref<9x8x8xbf16, #tpu.memory_space<vmem>>, vector<1x8x8xbf16>
    %46 = vector.shape_cast %45 : vector<1x8x8xbf16> to vector<8x8xbf16>
    %cst_29 = arith.constant dense<0.000000e+00> : vector<8x324xf32>
    %47 = tpu.matmul %46, %44, %cst_29 {dimension_numbers = #tpu.dot_dimension_numbers<[1], [0], [0], [1], [0, 0, 1, 1], [], []>} : vector<8x8xbf16>, vector<8x324xbf16>, vector<8x324xf32> -> vector<8x324xf32>
    %48 = arith.addf %43, %47 : vector<8x324xf32>
    %49 = vector.extract_strided_slice %14 {offsets = [0, 37], sizes = [8, 324], strides = [1, 1]} : vector<8x362xbf16> to vector<8x324xbf16>
    %c7 = arith.constant 7 : index
    %c0_30 = arith.constant 0 : index
    %c0_31 = arith.constant 0 : index
    %50 = vector.load %arg2[%c7, %c0_30, %c0_31] : memref<9x8x8xbf16, #tpu.memory_space<vmem>>, vector<1x8x8xbf16>
    %51 = vector.shape_cast %50 : vector<1x8x8xbf16> to vector<8x8xbf16>
    %cst_32 = arith.constant dense<0.000000e+00> : vector<8x324xf32>
    %52 = tpu.matmul %51, %49, %cst_32 {dimension_numbers = #tpu.dot_dimension_numbers<[1], [0], [0], [1], [0, 0, 1, 1], [], []>} : vector<8x8xbf16>, vector<8x324xbf16>, vector<8x324xf32> -> vector<8x324xf32>
    %53 = arith.addf %48, %52 : vector<8x324xf32>
    %54 = vector.extract_strided_slice %14 {offsets = [0, 38], sizes = [8, 324], strides = [1, 1]} : vector<8x362xbf16> to vector<8x324xbf16>
    %c8 = arith.constant 8 : index
    %c0_33 = arith.constant 0 : index
    %c0_34 = arith.constant 0 : index
    %55 = vector.load %arg2[%c8, %c0_33, %c0_34] : memref<9x8x8xbf16, #tpu.memory_space<vmem>>, vector<1x8x8xbf16>
    %56 = vector.shape_cast %55 : vector<1x8x8xbf16> to vector<8x8xbf16>
    %cst_35 = arith.constant dense<0.000000e+00> : vector<8x324xf32>
    %57 = tpu.matmul %56, %54, %cst_35 {dimension_numbers = #tpu.dot_dimension_numbers<[1], [0], [0], [1], [0, 0, 1, 1], [], []>} : vector<8x8xbf16>, vector<8x324xbf16>, vector<8x324xf32> -> vector<8x324xf32>
    %58 = arith.addf %53, %57 : vector<8x324xf32>
    %c0_36 = arith.constant 0 : index
    %c0_37 = arith.constant 0 : index
    %59 = vector.load %arg6[%c0_36, %c0_37] : memref<1x324xf32, #tpu.memory_space<vmem>>, vector<1x324xf32>
    %60 = vector.broadcast %59 : vector<1x324xf32> to vector<8x324xf32>
    %61 = arith.mulf %58, %60 : vector<8x324xf32>
    %62 = arith.truncf %61 : vector<8x324xf32> to vector<8x324xbf16>
    %c0_38 = arith.constant 0 : index
    %c0_39 = arith.constant 0 : index
    %c0_40 = arith.constant 0 : index
    %63 = vector.load %arg7[%c0_38, %c0_39, %c0_40] : memref<1x8x324xbf16, #tpu.memory_space<vmem>>, vector<1x8x324xbf16>
    %64 = vector.shape_cast %63 : vector<1x8x324xbf16> to vector<8x324xbf16>
    %65 = vector.shape_cast %62 : vector<8x324xbf16> to vector<1x8x324xbf16>
    tpu.vector_store %arg7[%c0_38, %c0_39, %c0_40], %65 {strides = array<i32>} : memref<1x8x324xbf16, #tpu.memory_space<vmem>>, vector<1x8x324xbf16>,
    %cst_41 = arith.constant dense<0.000000e+00> : vector<8xf32>
    %66 = vector.multi_reduction <add>, %61, %cst_41 [1] : vector<8x324xf32> to vector<8xf32>
    %67 = vector.shape_cast %66 : vector<8xf32> to vector<8x1xf32>
    %c0_42 = arith.constant 0 : index
    %c0_43 = arith.constant 0 : index
    %c0_44 = arith.constant 0 : index
    %68 = vector.load %arg8[%c0_42, %c0_43, %c0_44] : memref<1x8x1xf32, #tpu.memory_space<vmem>>, vector<1x8x1xf32>
    %69 = vector.shape_cast %68 : vector<1x8x1xf32> to vector<8x1xf32>
    %70 = vector.shape_cast %67 : vector<8x1xf32> to vector<1x8x1xf32>
    tpu.vector_store %arg8[%c0_42, %c0_43, %c0_44], %70 {strides = array<i32>} : memref<1x8x1xf32, #tpu.memory_space<vmem>>, vector<1x8x1xf32>,
    %71 = arith.mulf %61, %61 : vector<8x324xf32>
    %cst_45 = arith.constant dense<0.000000e+00> : vector<8xf32>
    %72 = vector.multi_reduction <add>, %71, %cst_45 [1] : vector<8x324xf32> to vector<8xf32>
    %73 = vector.shape_cast %72 : vector<8xf32> to vector<8x1xf32>
    %c0_46 = arith.constant 0 : index
    %c0_47 = arith.constant 0 : index
    %c0_48 = arith.constant 0 : index
    %74 = vector.load %arg9[%c0_46, %c0_47, %c0_48] : memref<1x8x1xf32, #tpu.memory_space<vmem>>, vector<1x8x1xf32>
    %75 = vector.shape_cast %74 : vector<1x8x1xf32> to vector<8x1xf32>
    %76 = vector.shape_cast %73 : vector<8x1xf32> to vector<1x8x1xf32>
    tpu.vector_store %arg9[%c0_46, %c0_47, %c0_48], %76 {strides = array<i32>} : memref<1x8x1xf32, #tpu.memory_space<vmem>>, vector<1x8x1xf32>,
    return
  }
  func.func @transform_0(%arg0: i32) -> (i32, i32, i32) {
    %c0_i32 = arith.constant 0 : i32
    %c0_i32_0 = arith.constant 0 : i32
    %c0_i32_1 = arith.constant 0 : i32
    return %arg0, %c0_i32, %c0_i32_0 : i32, i32, i32
  }
  func.func @transform_1(%arg0: i32) -> (i32, i32, i32) {
    %c0_i32 = arith.constant 0 : i32
    %c0_i32_0 = arith.constant 0 : i32
    %c0_i32_1 = arith.constant 0 : i32
    %c0_i32_2 = arith.constant 0 : i32
    return %c0_i32, %c0_i32_0, %c0_i32_1 : i32, i32, i32
  }
  func.func @transform_2(%arg0: i32) -> (i32, i32) {
    %c0_i32 = arith.constant 0 : i32
    %c0_i32_0 = arith.constant 0 : i32
    %c0_i32_1 = arith.constant 0 : i32
    return %c0_i32, %c0_i32_0 : i32, i32
  }
  func.func @transform_3(%arg0: i32) -> (i32, i32) {
    %c0_i32 = arith.constant 0 : i32
    %c0_i32_0 = arith.constant 0 : i32
    %c0_i32_1 = arith.constant 0 : i32
    return %c0_i32, %c0_i32_0 : i32, i32
  }
  func.func @transform_4(%arg0: i32) -> (i32, i32) {
    %c0_i32 = arith.constant 0 : i32
    %c0_i32_0 = arith.constant 0 : i32
    %c0_i32_1 = arith.constant 0 : i32
    return %c0_i32, %c0_i32_0 : i32, i32
  }
  func.func @transform_5(%arg0: i32) -> (i32, i32) {
    %c0_i32 = arith.constant 0 : i32
    %c0_i32_0 = arith.constant 0 : i32
    %c0_i32_1 = arith.constant 0 : i32
    return %c0_i32, %c0_i32_0 : i32, i32
  }
  func.func @transform_6(%arg0: i32) -> (i32, i32, i32) {
    %c0_i32 = arith.constant 0 : i32
    %c0_i32_0 = arith.constant 0 : i32
    %c0_i32_1 = arith.constant 0 : i32
    return %arg0, %c0_i32, %c0_i32_0 : i32, i32, i32
  }
  func.func @transform_7(%arg0: i32) -> (i32, i32, i32) {
    %c0_i32 = arith.constant 0 : i32
    %c0_i32_0 = arith.constant 0 : i32
    %c0_i32_1 = arith.constant 0 : i32
    return %arg0, %c0_i32, %c0_i32_0 : i32, i32, i32
  }
  func.func @transform_8(%arg0: i32) -> (i32, i32, i32) {
    %c0_i32 = arith.constant 0 : i32
    %c0_i32_0 = arith.constant 0 : i32
    %c0_i32_1 = arith.constant 0 : i32
    return %arg0, %c0_i32, %c0_i32_0 : i32, i32, i32
  }
}

module attributes {stable_mosaic.version = 11 : i64} {
  func.func @_bn_relu_pool_kernel(%arg0: i32, %arg1: memref<1x4x8x64xbf16, #tpu.memory_space<vmem>>, %arg2: memref<8x1xf32, #tpu.memory_space<vmem>>, %arg3: memref<8x1xf32, #tpu.memory_space<vmem>>, %arg4: memref<1x8x64xf32, #tpu.memory_space<vmem>>) attributes {dimension_semantics = [#tpu.dimension_semantics<parallel>], iteration_bounds = array<i64: 2>, scalar_prefetch = 0 : i64, scratch_operands = 0 : i64, tpu.core_type = #tpu.core_type<tc>, window_params = [{transform_indices = @transform_0, window_bounds = array<i64: 1, 4, 8, 64>}, {pipeline_mode = #tpu.pipeline_mode<synchronous>, transform_indices = @transform_1, window_bounds = array<i64: 8, 1>}, {pipeline_mode = #tpu.pipeline_mode<synchronous>, transform_indices = @transform_2, window_bounds = array<i64: 8, 1>}, {transform_indices = @transform_3, window_bounds = array<i64: 1, 8, 64>}]} {
    %c0 = arith.constant 0 : index
    %c0_0 = arith.constant 0 : index
    %0 = vector.load %arg2[%c0, %c0_0] : memref<8x1xf32, #tpu.memory_space<vmem>>, vector<8x1xf32>
    %c0_1 = arith.constant 0 : index
    %c0_2 = arith.constant 0 : index
    %1 = vector.load %arg3[%c0_1, %c0_2] : memref<8x1xf32, #tpu.memory_space<vmem>>, vector<8x1xf32>
    %c0_3 = arith.constant 0 : index
    %c0_4 = arith.constant 0 : index
    %c0_5 = arith.constant 0 : index
    %c0_6 = arith.constant 0 : index
    %2 = vector.load %arg1[%c0_3, %c0_4, %c0_5, %c0_6] : memref<1x4x8x64xbf16, #tpu.memory_space<vmem>>, vector<1x1x8x64xbf16>
    %3 = vector.shape_cast %2 : vector<1x1x8x64xbf16> to vector<8x64xbf16>
    %4 = arith.extf %3 : vector<8x64xbf16> to vector<8x64xf32>
    %5 = vector.broadcast %0 : vector<8x1xf32> to vector<8x64xf32>
    %6 = arith.mulf %4, %5 : vector<8x64xf32>
    %7 = vector.broadcast %1 : vector<8x1xf32> to vector<8x64xf32>
    %8 = arith.addf %6, %7 : vector<8x64xf32>
    %cst = arith.constant 0.000000e+00 : f32
    %9 = vector.broadcast %cst : f32 to vector<8x64xf32>
    %10 = arith.maximumf %8, %9 : vector<8x64xf32>
    %c0_7 = arith.constant 0 : index
    %c1 = arith.constant 1 : index
    %c0_8 = arith.constant 0 : index
    %c0_9 = arith.constant 0 : index
    %11 = vector.load %arg1[%c0_7, %c1, %c0_8, %c0_9] : memref<1x4x8x64xbf16, #tpu.memory_space<vmem>>, vector<1x1x8x64xbf16>
    %12 = vector.shape_cast %11 : vector<1x1x8x64xbf16> to vector<8x64xbf16>
    %13 = arith.extf %12 : vector<8x64xbf16> to vector<8x64xf32>
    %14 = vector.broadcast %0 : vector<8x1xf32> to vector<8x64xf32>
    %15 = arith.mulf %13, %14 : vector<8x64xf32>
    %16 = vector.broadcast %1 : vector<8x1xf32> to vector<8x64xf32>
    %17 = arith.addf %15, %16 : vector<8x64xf32>
    %cst_10 = arith.constant 0.000000e+00 : f32
    %18 = vector.broadcast %cst_10 : f32 to vector<8x64xf32>
    %19 = arith.maximumf %17, %18 : vector<8x64xf32>
    %20 = arith.addf %10, %19 : vector<8x64xf32>
    %c0_11 = arith.constant 0 : index
    %c2 = arith.constant 2 : index
    %c0_12 = arith.constant 0 : index
    %c0_13 = arith.constant 0 : index
    %21 = vector.load %arg1[%c0_11, %c2, %c0_12, %c0_13] : memref<1x4x8x64xbf16, #tpu.memory_space<vmem>>, vector<1x1x8x64xbf16>
    %22 = vector.shape_cast %21 : vector<1x1x8x64xbf16> to vector<8x64xbf16>
    %23 = arith.extf %22 : vector<8x64xbf16> to vector<8x64xf32>
    %24 = vector.broadcast %0 : vector<8x1xf32> to vector<8x64xf32>
    %25 = arith.mulf %23, %24 : vector<8x64xf32>
    %26 = vector.broadcast %1 : vector<8x1xf32> to vector<8x64xf32>
    %27 = arith.addf %25, %26 : vector<8x64xf32>
    %cst_14 = arith.constant 0.000000e+00 : f32
    %28 = vector.broadcast %cst_14 : f32 to vector<8x64xf32>
    %29 = arith.maximumf %27, %28 : vector<8x64xf32>
    %30 = arith.addf %20, %29 : vector<8x64xf32>
    %c0_15 = arith.constant 0 : index
    %c3 = arith.constant 3 : index
    %c0_16 = arith.constant 0 : index
    %c0_17 = arith.constant 0 : index
    %31 = vector.load %arg1[%c0_15, %c3, %c0_16, %c0_17] : memref<1x4x8x64xbf16, #tpu.memory_space<vmem>>, vector<1x1x8x64xbf16>
    %32 = vector.shape_cast %31 : vector<1x1x8x64xbf16> to vector<8x64xbf16>
    %33 = arith.extf %32 : vector<8x64xbf16> to vector<8x64xf32>
    %34 = vector.broadcast %0 : vector<8x1xf32> to vector<8x64xf32>
    %35 = arith.mulf %33, %34 : vector<8x64xf32>
    %36 = vector.broadcast %1 : vector<8x1xf32> to vector<8x64xf32>
    %37 = arith.addf %35, %36 : vector<8x64xf32>
    %cst_18 = arith.constant 0.000000e+00 : f32
    %38 = vector.broadcast %cst_18 : f32 to vector<8x64xf32>
    %39 = arith.maximumf %37, %38 : vector<8x64xf32>
    %40 = arith.addf %30, %39 : vector<8x64xf32>
    %cst_19 = arith.constant 2.500000e-01 : f32
    %41 = vector.broadcast %cst_19 : f32 to vector<8x64xf32>
    %42 = arith.mulf %40, %41 : vector<8x64xf32>
    %c0_20 = arith.constant 0 : index
    %c0_21 = arith.constant 0 : index
    %c0_22 = arith.constant 0 : index
    %43 = vector.load %arg4[%c0_20, %c0_21, %c0_22] : memref<1x8x64xf32, #tpu.memory_space<vmem>>, vector<1x8x64xf32>
    %44 = vector.shape_cast %43 : vector<1x8x64xf32> to vector<8x64xf32>
    %45 = vector.shape_cast %42 : vector<8x64xf32> to vector<1x8x64xf32>
    tpu.vector_store %arg4[%c0_20, %c0_21, %c0_22], %45 {strides = array<i32>} : memref<1x8x64xf32, #tpu.memory_space<vmem>>, vector<1x8x64xf32>,
    return
  }
  func.func @transform_0(%arg0: i32) -> (i32, i32, i32, i32) {
    %c0_i32 = arith.constant 0 : i32
    %c0_i32_0 = arith.constant 0 : i32
    %c0_i32_1 = arith.constant 0 : i32
    %c0_i32_2 = arith.constant 0 : i32
    return %arg0, %c0_i32, %c0_i32_0, %c0_i32_1 : i32, i32, i32, i32
  }
  func.func @transform_1(%arg0: i32) -> (i32, i32) {
    %c0_i32 = arith.constant 0 : i32
    %c0_i32_0 = arith.constant 0 : i32
    %c0_i32_1 = arith.constant 0 : i32
    return %c0_i32, %c0_i32_0 : i32, i32
  }
  func.func @transform_2(%arg0: i32) -> (i32, i32) {
    %c0_i32 = arith.constant 0 : i32
    %c0_i32_0 = arith.constant 0 : i32
    %c0_i32_1 = arith.constant 0 : i32
    return %c0_i32, %c0_i32_0 : i32, i32
  }
  func.func @transform_3(%arg0: i32) -> (i32, i32, i32) {
    %c0_i32 = arith.constant 0 : i32
    %c0_i32_0 = arith.constant 0 : i32
    %c0_i32_1 = arith.constant 0 : i32
    return %arg0, %c0_i32, %c0_i32_0 : i32, i32, i32
  }
}

</mosaic_0001>

<llo_original>
// kernel: conv_block_forward.4
$region0: #{conv_block_forward.4}
  #allocation0 [shape = 'u32[]', space=smem, size = 0x4, offset = 0x4, fixed_abs, tag = 'smem constant byte address 0x4 - core index']
  #allocation1 [shape = 'u32[144,128]{1,0:T(1,128)}', space=vmem, size = 0x12000, scoped, tag = 'internal scratch']
  %s0 = inlined_call_operand.vmem [shape: bf16[2,8,362], index: 0, kind: input, shape index: {}]
  %s1 = inlined_call_operand.vmem [shape: bf16[9,8,8], index: 1, kind: input, shape index: {}]
  %s2 = inlined_call_operand.vmem [shape: f32[8,1], index: 2, kind: input, shape index: {}]
  %s3 = inlined_call_operand.vmem [shape: f32[8,1], index: 3, kind: input, shape index: {}]
  %s4 = inlined_call_operand.vmem [shape: f32[1,362], index: 4, kind: input, shape index: {}]
  %s5 = inlined_call_operand.vmem [shape: f32[1,324], index: 5, kind: input, shape index: {}]
  %s6 = inlined_call_operand.vmem [shape: bf16[2,8,324], index: 6, kind: output, shape index: {0}]
  %s7 = inlined_call_operand.vmem [shape: f32[2,8,1], index: 7, kind: output, shape index: {1}]
  %s8 = inlined_call_operand.vmem [shape: f32[2,8,1], index: 8, kind: output, shape index: {2}]
  %9 = xla_tuple %s6, %s7, %s8
  %s10 = sld [smem:[#allocation0]]
  $region73: #{conv_block_forward.4} parent=0
    _
  %s12 = ssub.s32 1, %s10
  %s13 = scalar_select 0, %s12, %s10
  loop: start=0, step=1, limit=4
  $region2: #{conv_block_forward.4} parent=0 // loop_pre_header
    _
  $region3: #{conv_block_forward.4} parent=0 // loop_header
    %s15 = sphi 0, %s19
    %p16 = scmp.ge.s32.totalorder %s15, 4
    %s25 = sphi 0, %s27
    %s28 = sphi 0, %s25
    %s29 = sphi 0, %s28
    %s45 = sphi 0, %s29
    %s49 = sphi 0, %s49
    %s51 = sphi 0, %s49
    %s52 = sphi 0, %s51
    %s66 = sphi 0, %s52
    %s70 = sphi 0, %s70
    %s72 = sphi 0, %s70
    %s73 = sphi 0, %s72
    %s87 = sphi 0, %s73
    %s91 = sphi 0, %s91
    %s93 = sphi 0, %s91
    %s94 = sphi 0, %s93
    %s108 = sphi 0, %s94
    %s112 = sphi 0, %s112
    %s114 = sphi 0, %s112
    %s115 = sphi 0, %s114
    %s129 = sphi 0, %s115
    %s133 = sphi 0, %s133
    %s135 = sphi 0, %s133
    %s136 = sphi 0, %s135
    %s150 = sphi 0, %s136
    %s156 = sphi 0, %s158
    %s159 = sphi 0, %s156
    %s160 = sphi 0, %s159
    %s176 = sphi 0, %s160
    %s182 = sphi 0, %s184
    %s185 = sphi 0, %s182
    %s186 = sphi 0, %s185
    %s202 = sphi 0, %s186
    %s208 = sphi 0, %s210
    %s211 = sphi 0, %s208
    %s212 = sphi 0, %s211
    %s228 = sphi 0, %s212
  $region4: #{conv_block_forward.4} parent=0 // loop_header_branch
    %18 = sbr.rel (%p16) target = $region8
  $region5: #{conv_block_forward.4} parent=0 // loop_body
    %s20 = ssub.s32 %s15, 1
    %s21 = ssub.s32 %s15, 2
    %s22 = sadd.s32 %s15, 1
    %s23 = ssub.s32 %s15, %s22
    %p24 = scmp.eq.s32.totalorder %s23, 0
    %s26 = sadd.s32 %s25, 1
    %s27 = scalar_select %p24, %s25, %s26
    %p30 = pneg %p24
    %p31 = scmp.eq.s32.totalorder %s15, 1
    %p32 = por %p30, %p31
    %p33 = scmp.ne.s32.totalorder %s25, %s28
    %p34 = scmp.eq.s32.totalorder %s15, 0
    %p35 = por %p33, %p34
    %p36 = scmp.ne.s32.totalorder %s25, %s28
    %p37 = scmp.eq.s32.totalorder %s20, 1
    %p38 = por %p36, %p37
    %p39 = scmp.ne.s32.totalorder %s28, %s29
    %p40 = scmp.eq.s32.totalorder %s20, 0
    %p41 = por %p39, %p40
    %p42 = scmp.ne.s32.totalorder %s28, %s29
    %p43 = scmp.eq.s32.totalorder %s21, 1
    %p44 = por %p42, %p43
    %p46 = scmp.ne.s32.totalorder %s29, %s45
    %p47 = scmp.eq.s32.totalorder %s21, 0
    %p48 = por %p46, %p47
    %s50 = sadd.s32 %s49, 1
    %p53 = scmp.eq.s32.totalorder %s15, 1
    %p54 = scmp.ne.s32.totalorder %s49, %s51
    %p55 = scmp.eq.s32.totalorder %s15, 0
    %p56 = por %p54, %p55
    %p57 = scmp.ne.s32.totalorder %s49, %s51
    %p58 = scmp.eq.s32.totalorder %s20, 1
    %p59 = por %p57, %p58
    %p60 = scmp.ne.s32.totalorder %s51, %s52
    %p61 = scmp.eq.s32.totalorder %s20, 0
    %p62 = por %p60, %p61
    %p63 = scmp.ne.s32.totalorder %s51, %s52
    %p64 = scmp.eq.s32.totalorder %s21, 1
    %p65 = por %p63, %p64
    %p67 = scmp.ne.s32.totalorder %s52, %s66
    %p68 = scmp.eq.s32.totalorder %s21, 0
    %p69 = por %p67, %p68
    %s71 = sadd.s32 %s70, 1
    %p74 = scmp.eq.s32.totalorder %s15, 1
    %p75 = scmp.ne.s32.totalorder %s70, %s72
    %p76 = scmp.eq.s32.totalorder %s15, 0
    %p77 = por %p75, %p76
    %p78 = scmp.ne.s32.totalorder %s70, %s72
    %p79 = scmp.eq.s32.totalorder %s20, 1
    %p80 = por %p78, %p79
    %p81 = scmp.ne.s32.totalorder %s72, %s73
    %p82 = scmp.eq.s32.totalorder %s20, 0
    %p83 = por %p81, %p82
    %p84 = scmp.ne.s32.totalorder %s72, %s73
    %p85 = scmp.eq.s32.totalorder %s21, 1
    %p86 = por %p84, %p85
    %p88 = scmp.ne.s32.totalorder %s73, %s87
    %p89 = scmp.eq.s32.totalorder %s21, 0
    %p90 = por %p88, %p89
    %s92 = sadd.s32 %s91, 1
    %p95 = scmp.eq.s32.totalorder %s15, 1
    %p96 = scmp.ne.s32.totalorder %s91, %s93
    %p97 = scmp.eq.s32.totalorder %s15, 0
    %p98 = por %p96, %p97
    %p99 = scmp.ne.s32.totalorder %s91, %s93
    %p100 = scmp.eq.s32.totalorder %s20, 1
    %p101 = por %p99, %p100
    %p102 = scmp.ne.s32.totalorder %s93, %s94
    %p103 = scmp.eq.s32.totalorder %s20, 0
    %p104 = por %p102, %p103
    %p105 = scmp.ne.s32.totalorder %s93, %s94
    %p106 = scmp.eq.s32.totalorder %s21, 1
    %p107 = por %p105, %p106
    %p109 = scmp.ne.s32.totalorder %s94, %s108
    %p110 = scmp.eq.s32.totalorder %s21, 0
    %p111 = por %p109, %p110
    %s113 = sadd.s32 %s112, 1
    %p116 = scmp.eq.s32.totalorder %s15, 1
    %p117 = scmp.ne.s32.totalorder %s112, %s114
    %p118 = scmp.eq.s32.totalorder %s15, 0
    %p119 = por %p117, %p118
    %p120 = scmp.ne.s32.totalorder %s112, %s114
    %p121 = scmp.eq.s32.totalorder %s20, 1
    %p122 = por %p120, %p121
    %p123 = scmp.ne.s32.totalorder %s114, %s115
    %p124 = scmp.eq.s32.totalorder %s20, 0
    %p125 = por %p123, %p124
    %p126 = scmp.ne.s32.totalorder %s114, %s115
    %p127 = scmp.eq.s32.totalorder %s21, 1
    %p128 = por %p126, %p127
    %p130 = scmp.ne.s32.totalorder %s115, %s129
    %p131 = scmp.eq.s32.totalorder %s21, 0
    %p132 = por %p130, %p131
    %s134 = sadd.s32 %s133, 1
    %p137 = scmp.eq.s32.totalorder %s15, 1
    %p138 = scmp.ne.s32.totalorder %s133, %s135
    %p139 = scmp.eq.s32.totalorder %s15, 0
    %p140 = por %p138, %p139
    %p141 = scmp.ne.s32.totalorder %s133, %s135
    %p142 = scmp.eq.s32.totalorder %s20, 1
    %p143 = por %p141, %p142
    %p144 = scmp.ne.s32.totalorder %s135, %s136
    %p145 = scmp.eq.s32.totalorder %s20, 0
    %p146 = por %p144, %p145
    %p147 = scmp.ne.s32.totalorder %s135, %s136
    %p148 = scmp.eq.s32.totalorder %s21, 1
    %p149 = por %p147, %p148
    %p151 = scmp.ne.s32.totalorder %s136, %s150
    %p152 = scmp.eq.s32.totalorder %s21, 0
    %p153 = por %p151, %p152
    %s154 = ssub.s32 %s15, %s22
    %p155 = scmp.eq.s32.totalorder %s154, 0
    %s157 = sadd.s32 %s156, 1
    %s158 = scalar_select %p155, %s156, %s157
    %p161 = pneg %p155
    %p162 = scmp.eq.s32.totalorder %s15, 1
    %p163 = por %p161, %p162
    %p164 = scmp.ne.s32.totalorder %s156, %s159
    %p165 = scmp.eq.s32.totalorder %s15, 0
    %p166 = por %p164, %p165
    %p167 = scmp.ne.s32.totalorder %s156, %s159
    %p168 = scmp.eq.s32.totalorder %s20, 1
    %p169 = por %p167, %p168
    %p170 = scmp.ne.s32.totalorder %s159, %s160
    %p171 = scmp.eq.s32.totalorder %s20, 0
    %p172 = por %p170, %p171
    %p173 = scmp.ne.s32.totalorder %s159, %s160
    %p174 = scmp.eq.s32.totalorder %s21, 1
    %p175 = por %p173, %p174
    %p177 = scmp.ne.s32.totalorder %s160, %s176
    %p178 = scmp.eq.s32.totalorder %s21, 0
    %p179 = por %p177, %p178
    %s180 = ssub.s32 %s15, %s22
    %p181 = scmp.eq.s32.totalorder %s180, 0
    %s183 = sadd.s32 %s182, 1
    %s184 = scalar_select %p181, %s182, %s183
    %p187 = pneg %p181
    %p188 = scmp.eq.s32.totalorder %s15, 1
    %p189 = por %p187, %p188
    %p190 = scmp.ne.s32.totalorder %s182, %s185
    %p191 = scmp.eq.s32.totalorder %s15, 0
    %p192 = por %p190, %p191
    %p193 = scmp.ne.s32.totalorder %s182, %s185
    %p194 = scmp.eq.s32.totalorder %s20, 1
    %p195 = por %p193, %p194
    %p196 = scmp.ne.s32.totalorder %s185, %s186
    %p197 = scmp.eq.s32.totalorder %s20, 0
    %p198 = por %p196, %p197
    %p199 = scmp.ne.s32.totalorder %s185, %s186
    %p200 = scmp.eq.s32.totalorder %s21, 1
    %p201 = por %p199, %p200
    %p203 = scmp.ne.s32.totalorder %s186, %s202
    %p204 = scmp.eq.s32.totalorder %s21, 0
    %p205 = por %p203, %p204
    %s206 = ssub.s32 %s15, %s22
    %p207 = scmp.eq.s32.totalorder %s206, 0
    %s209 = sadd.s32 %s208, 1
    %s210 = scalar_select %p207, %s208, %s209
    %p213 = pneg %p207
    %p214 = scmp.eq.s32.totalorder %s15, 1
    %p215 = por %p213, %p214
    %p216 = scmp.ne.s32.totalorder %s208, %s211
    %p217 = scmp.eq.s32.totalorder %s15, 0
    %p218 = por %p216, %p217
    %p219 = scmp.ne.s32.totalorder %s208, %s211
    %p220 = scmp.eq.s32.totalorder %s20, 1
    %p221 = por %p219, %p220
    %p222 = scmp.ne.s32.totalorder %s211, %s212
    %p223 = scmp.eq.s32.totalorder %s20, 0
    %p224 = por %p222, %p223
    %p225 = scmp.ne.s32.totalorder %s211, %s212
    %p226 = scmp.eq.s32.totalorder %s21, 1
    %p227 = por %p225, %p226
    %p229 = scmp.ne.s32.totalorder %s212, %s228
    %p230 = scmp.eq.s32.totalorder %s21, 0
    %p231 = por %p229, %p230
    %p232 = scmp.le.s32.totalorder 1, %s15
    %p233 = scmp.lt.s32.totalorder %s15, 3
    %p234 = pnand %p232, %p233
    %p235 = pneg %p234
    // Predicated region
    $region9: #{conv_block_forward.4} parent=5 // pred_check
      _
    $region10: #{conv_block_forward.4} parent=5 // pred_check_branch
      %237 = sbr.rel (%p234) target = $region12
    $region11: #{conv_block_forward.4} parent=5 // pred_region
      %s238 = ssub.s32 %s15, 1
      // Predicated region
      $region13: #{conv_block_forward.4} parent=11 // pred_check
        %p239 = pneg %p62
      $region14: #{conv_block_forward.4} parent=11 // pred_check_branch
        %241 = sbr.rel (%p239) target = $region16
      $region15: #{conv_block_forward.4} parent=11 // pred_region
        _
      $region16: #{conv_block_forward.4} parent=11 // pred_fallthru
        _
      // Predicated region
      $region17: #{conv_block_forward.4} parent=11 // pred_check
        %p242 = pneg %p83
      $region18: #{conv_block_forward.4} parent=11 // pred_check_branch
        %244 = sbr.rel (%p242) target = $region20
      $region19: #{conv_block_forward.4} parent=11 // pred_region
        _
      $region20: #{conv_block_forward.4} parent=11 // pred_fallthru
        _
      // Predicated region
      $region21: #{conv_block_forward.4} parent=11 // pred_check
        %p245 = pneg %p104
      $region22: #{conv_block_forward.4} parent=11 // pred_check_branch
        %247 = sbr.rel (%p245) target = $region24
      $region23: #{conv_block_forward.4} parent=11 // pred_region
        _
      $region24: #{conv_block_forward.4} parent=11 // pred_fallthru
        _
      // Predicated region
      $region25: #{conv_block_forward.4} parent=11 // pred_check
        %p248 = pneg %p125
      $region26: #{conv_block_forward.4} parent=11 // pred_check_branch
        %250 = sbr.rel (%p248) target = $region28
      $region27: #{conv_block_forward.4} parent=11 // pred_region
        _
      $region28: #{conv_block_forward.4} parent=11 // pred_fallthru
        _
      // Predicated region
      $region29: #{conv_block_forward.4} parent=11 // pred_check
        %p251 = pneg %p146
      $region30: #{conv_block_forward.4} parent=11 // pred_check_branch
        %253 = sbr.rel (%p251) target = $region32
      $region31: #{conv_block_forward.4} parent=11 // pred_region
        _
      $region32: #{conv_block_forward.4} parent=11 // pred_fallthru
        _
    $region12: #{conv_block_forward.4} parent=5 // pred_fallthru
      _
    %p254 = scmp.lt.s32.totalorder %s15, 2
    // Predicated region
    $region33: #{conv_block_forward.4} parent=5 // pred_check
      %p255 = pneg %p254
    $region34: #{conv_block_forward.4} parent=5 // pred_check_branch
      %257 = sbr.rel (%p255) target = $region36
    $region35: #{conv_block_forward.4} parent=5 // pred_region
      // Predicated region
      $region37: #{conv_block_forward.4} parent=35 // pred_check
        %p258 = pneg %p35
      $region38: #{conv_block_forward.4} parent=35 // pred_check_branch
        %260 = sbr.rel (%p258) target = $region40
      $region39: #{conv_block_forward.4} parent=35 // pred_region
        %p261 = scmp.lt.s32.totalorder %s15, 1
        %s262 = scalar_select %p261, %s15, 1
        %s263 = smul.addr %s262, 3
        %s264 = smul.addr %s263, 4
        %s265 = scalar_lea.vmem %s0, %s264
      $region40: #{conv_block_forward.4} parent=35 // pred_fallthru
        _
    $region36: #{conv_block_forward.4} parent=5 // pred_fallthru
      _
    %p266 = scmp.le.s32.totalorder 1, %s15
    %p267 = scmp.lt.s32.totalorder %s15, 3
    %p268 = pnand %p266, %p267
    %p269 = pneg %p268
    // Predicated region
    $region41: #{conv_block_forward.4} parent=5 // pred_check
      _
    $region42: #{conv_block_forward.4} parent=5 // pred_check_branch
      %271 = sbr.rel (%p268) target = $region44
    $region43: #{conv_block_forward.4} parent=5 // pred_region
      %s272 = ssub.s32 %s15, 1
      %p273 = scmp.lt.s32.totalorder %s20, 1
      %s274 = scalar_select %p273, %s20, 1
      %s275 = smul.addr %s274, 3
      %s276 = smul.addr %s275, 4
      %s277 = scalar_lea.vmem %s0, %s276
      %p278 = pneg %p41
      %p279 = pneg %p38
      %p280 = pneg %p62
      %p281 = pneg %p59
      %p282 = pneg %p83
      %p283 = pneg %p80
      %p284 = pneg %p104
      %p285 = pneg %p101
      %p286 = pneg %p125
      %p287 = pneg %p122
      %p288 = pneg %p146
      %p289 = pneg %p143
      %p290 = pneg %p172
      %p291 = pneg %p169
      %p292 = scmp.lt.s32.totalorder %s20, 1
      %s293 = scalar_select %p292, %s20, 1
      %s294 = smul.addr %s293, 3
      %s295 = smul.addr %s294, 4
      %s296 = scalar_lea.vmem %s6, %s295
      %p297 = pneg %p198
      %p298 = pneg %p195
      %p299 = scmp.lt.s32.totalorder %s20, 1
      %s300 = scalar_select %p299, %s20, 1
      %s301 = smul.addr %s300, 8
      %s302 = scalar_lea.vmem %s7, %s301
      %p303 = pneg %p224
      %p304 = pneg %p221
      %p305 = scmp.lt.s32.totalorder %s20, 1
      %s306 = scalar_select %p305, %s20, 1
      %s307 = smul.addr %s306, 8
      %s308 = scalar_lea.vmem %s8, %s307
      %p309 = scmp.lt.s32.totalorder %s20, 1
      %s310 = scalar_select %p309, %s20, 1
      %s311 = smul.addr %s310, 3
      %s312 = smul.addr %s311, 4
      %s313 = scalar_lea.vmem %s0, %s312
      %p314 = scmp.lt.s32.totalorder %s20, 1
      %s315 = scalar_select %p314, %s20, 1
      %s316 = smul.addr %s315, 3
      %s317 = smul.addr %s316, 4
      %s318 = scalar_lea.vmem %s6, %s317
      %p319 = scmp.lt.s32.totalorder %s20, 1
      %s320 = scalar_select %p319, %s20, 1
      %s321 = smul.addr %s320, 8
      %s322 = scalar_lea.vmem %s7, %s321
      %p323 = scmp.lt.s32.totalorder %s20, 1
      %s324 = scalar_select %p323, %s20, 1
      %s325 = smul.addr %s324, 8
      %s326 = scalar_lea.vmem %s8, %s325
      %v328 = vld [vmem:[%s313] sm:$0xff]
      %v329 = vld [vmem:[%s313 + $0x8] sm:$0xf]
      %v330 = vunpack.c.l.bf16 %v328
      %v331 = vunpack.c.h.bf16 %v328
      %v332 = vunpack.c.l.bf16 %v329
      %v333 = vld [vmem:[%s2] sm:$0xff]
      %335 = vset.pattern.permute.xlu0 0
      %336 = vperm.xlu0 %335, %v333
      %v337 = vpop.permute.xlu0 %336
      %v339 = vmul.f32 %v330, %v337
      %v340 = vmul.f32 %v331, %v337
      %v341 = vmul.f32 %v332, %v337
      %v342 = vld [vmem:[%s3] sm:$0xff]
      %344 = vset.pattern.permute.xlu0 0
      %345 = vperm.xlu0 %344, %v342
      %v346 = vpop.permute.xlu0 %345
      %v348 = vadd.f32 %v339, %v346
      %v349 = vadd.f32 %v340, %v346
      %v350 = vadd.f32 %v341, %v346
      %v351 = vmax.f32 %v348, 0.0
      %v352 = vmax.f32 %v349, 0.0
      %v353 = vmax.f32 %v350, 0.0
      %v354 = vld [vmem:[%s4] sm:$0x7]
      %v356 = vlaneseq
      %v357 = vshrl.u32 %v356, 7
      %v358 = vsub.s32 0, %v357
      %v359 = vrot.slane %v354, %v358
      %v360 = vlaneseq
      %v361 = vshrl.u32 %v360, 7
      %v362 = vsub.s32 1, %v361
      %v363 = vrot.slane %v354, %v362
      %v364 = vlaneseq
      %v365 = vshrl.u32 %v364, 7
      %v366 = vsub.s32 2, %v365
      %v367 = vrot.slane %v354, %v366
      %v371 = vmul.f32 %v351, %v359
      %v372 = vmul.f32 %v352, %v363
      %v373 = vmul.f32 %v353, %v367
      %v374 = vpack.c.bf16 %v371, %v371
      %v375 = vpack.c.bf16 %v372, %v372
      %v376 = vpack.c.bf16 %v373, %v373
      %v377 = vld [vmem:[%s1] sm:$0xf]
      %s378 = scalar_lea.vmem %s1, 4
      %v379 = vld [vmem:[%s378] sm:$0xf]
      %383 = vrot.lane.b32.xlu0 %v374, 127
      %v384 = vpop.permute.xlu0 %383
      %385 = vrot.lane.b32.xlu0 %v375, 127
      %v386 = vpop.permute.xlu0 %385
      %387 = vrot.lane.b32.xlu0 %v376, 127
      %v388 = vpop.permute.xlu0 %387
      %vm389 = vcmask 1039360
      %v390 = vsel %vm389, %v384, %v386
      %v391 = vsel %vm389, %v386, %v388
      %vm392 = vcmask 64512
      %v394 = vsel %vm392, %v379, 0
      %vm396 = vcmask 1043456
      %v398 = vsel %vm396, %v390, 0
      %v401 = vsel %vm396, %v391, 0
      %v404 = vsel %vm396, %v388, 0
      %406 = vmatprep.subr.bf16.mxu0 %v401
      %407 = vmatpush1.bf16.msra.mxu0 %v398
      %408 = vmatprep.subr.bf16.mxu0 0
      %409 = vmatpush1.bf16.msra.mxu0 0
      %410 = vmatprep.subr.bf16.mxu0 0
      %411 = vmatpush1.bf16.msra.mxu0 0
      %412 = vmatprep.subr.bf16.mxu0 0
      %413 = vmatpush1.bf16.msra.mxu0 0
      %414 = vmatprep.subr.bf16.mxu0 0
      %415 = vmatpush1.bf16.msra.mxu0 0
      %416 = vmatprep.subr.bf16.mxu0 0
      %417 = vmatpush1.bf16.msra.mxu0 0
      %418 = vmatprep.subr.bf16.mxu0 0
      %419 = vmatpush1.bf16.msra.mxu0 0
      %420 = vmatprep.subr.bf16.mxu0 0
      %421 = vmatpush1.bf16.msra.mxu0 0
      %422 = vmatprep.subr.bf16.mxu0 0
      %423 = vmatpush1.bf16.msra.mxu0 0
      %424 = vmatprep.subr.bf16.mxu0 0
      %425 = vmatpush1.bf16.msra.mxu0 0
      %426 = vmatprep.subr.bf16.mxu0 0
      %427 = vmatpush1.bf16.msra.mxu0 0
      %428 = vmatprep.subr.bf16.mxu0 0
      %429 = vmatpush1.bf16.msra.mxu0 0
      %430 = vmatprep.subr.bf16.mxu0 0
      %431 = vmatpush1.bf16.msra.mxu0 0
      %432 = vmatprep.subr.bf16.mxu0 0
      %433 = vmatpush1.bf16.msra.mxu0 0
      %434 = vmatprep.subr.bf16.mxu0 0
      %435 = vmatpush1.bf16.msra.mxu0 0
      %436 = vmatprep.subr.bf16.mxu0 0
      %437 = vmatpush1.bf16.msra.mxu0 0
      %438 = vmatprep.mubr.bf16.mxu0 0
      %439 = vmatmul.mubr.bf16.gmra.mrb[0].mxu0 %v394
      %v440 = vpop.f32.mrb[0].mxu0
      %v441 = vadd.f32 0.0, %v440
      %v442 = vpop.f32.mrb[0].mxu0
      %v443 = vadd.f32 0.0, %v442
      %v444 = vpop.f32.mrb[0].mxu0
      %v445 = vpop.f32.mrb[0].mxu0
      %446 = vdwg.mxu0
      %447 = vmatprep.subr.bf16.mxu0 0
      %448 = vmatpush1.bf16.msra.mxu0 %v404
      %449 = vmatprep.subr.bf16.mxu0 0
      %450 = vmatpush1.bf16.msra.mxu0 0
      %451 = vmatprep.subr.bf16.mxu0 0
      %452 = vmatpush1.bf16.msra.mxu0 0
      %453 = vmatprep.subr.bf16.mxu0 0
      %454 = vmatpush1.bf16.msra.mxu0 0
      %455 = vmatprep.subr.bf16.mxu0 0
      %456 = vmatpush1.bf16.msra.mxu0 0
      %457 = vmatprep.subr.bf16.mxu0 0
      %458 = vmatpush1.bf16.msra.mxu0 0
      %459 = vmatprep.subr.bf16.mxu0 0
      %460 = vmatpush1.bf16.msra.mxu0 0
      %461 = vmatprep.subr.bf16.mxu0 0
      %462 = vmatpush1.bf16.msra.mxu0 0
      %463 = vmatprep.subr.bf16.mxu0 0
      %464 = vmatpush1.bf16.msra.mxu0 0
      %465 = vmatprep.subr.bf16.mxu0 0
      %466 = vmatpush1.bf16.msra.mxu0 0
      %467 = vmatprep.subr.bf16.mxu0 0
      %468 = vmatpush1.bf16.msra.mxu0 0
      %469 = vmatprep.subr.bf16.mxu0 0
      %470 = vmatpush1.bf16.msra.mxu0 0
      %471 = vmatprep.subr.bf16.mxu0 0
      %472 = vmatpush1.bf16.msra.mxu0 0
      %473 = vmatprep.subr.bf16.mxu0 0
      %474 = vmatpush1.bf16.msra.mxu0 0
      %475 = vmatprep.subr.bf16.mxu0 0
      %476 = vmatpush1.bf16.msra.mxu0 0
      %477 = vmatprep.subr.bf16.mxu0 0
      %478 = vmatpush1.bf16.msra.mxu0 0
      %479 = vmatprep.mubr.bf16.mxu0 0
      %480 = vmatmul.mubr.bf16.gmra.mrb[0].mxu0 %v394
      %v481 = vpop.f32.mrb[0].mxu0
      %v482 = vadd.f32 0.0, %v481
      %v483 = vpop.f32.mrb[0].mxu0
      %v484 = vpop.f32.mrb[0].mxu0
      %v485 = vpop.f32.mrb[0].mxu0
      %486 = vdwg.mxu0
      %v488 = vsel %vm392, %v377, 0
      %v491 = vsel %vm396, %v374, 0
      %v494 = vsel %vm396, %v375, 0
      %v497 = vsel %vm396, %v376, 0
      %499 = vmatprep.subr.bf16.mxu0 %v494
      %500 = vmatpush1.bf16.msra.mxu0 %v491
      %501 = vmatprep.subr.bf16.mxu0 0
      %502 = vmatpush1.bf16.msra.mxu0 0
      %503 = vmatprep.subr.bf16.mxu0 0
      %504 = vmatpush1.bf16.msra.mxu0 0
      %505 = vmatprep.subr.bf16.mxu0 0
      %506 = vmatpush1.bf16.msra.mxu0 0
      %507 = vmatprep.subr.bf16.mxu0 0
      %508 = vmatpush1.bf16.msra.mxu0 0
      %509 = vmatprep.subr.bf16.mxu0 0
      %510 = vmatpush1.bf16.msra.mxu0 0
      %511 = vmatprep.subr.bf16.mxu0 0
      %512 = vmatpush1.bf16.msra.mxu0 0
      %513 = vmatprep.subr.bf16.mxu0 0
      %514 = vmatpush1.bf16.msra.mxu0 0
      %515 = vmatprep.subr.bf16.mxu0 0
      %516 = vmatpush1.bf16.msra.mxu0 0
      %517 = vmatprep.subr.bf16.mxu0 0
      %518 = vmatpush1.bf16.msra.mxu0 0
      %519 = vmatprep.subr.bf16.mxu0 0
      %520 = vmatpush1.bf16.msra.mxu0 0
      %521 = vmatprep.subr.bf16.mxu0 0
      %522 = vmatpush1.bf16.msra.mxu0 0
      %523 = vmatprep.subr.bf16.mxu0 0
      %524 = vmatpush1.bf16.msra.mxu0 0
      %525 = vmatprep.subr.bf16.mxu0 0
      %526 = vmatpush1.bf16.msra.mxu0 0
      %527 = vmatprep.subr.bf16.mxu0 0
      %528 = vmatpush1.bf16.msra.mxu0 0
      %529 = vmatprep.subr.bf16.mxu0 0
      %530 = vmatpush1.bf16.msra.mxu0 0
      %531 = vmatprep.mubr.bf16.mxu0 0
      %532 = vmatmul.mubr.bf16.gmra.mrb[0].mxu0 %v488
      %v533 = vpop.f32.mrb[0].mxu0
      %v534 = vadd.f32 %v441, %v533
      %v535 = vpop.f32.mrb[0].mxu0
      %v536 = vadd.f32 %v443, %v535
      %v537 = vpop.f32.mrb[0].mxu0
      %v538 = vpop.f32.mrb[0].mxu0
      %539 = vdwg.mxu0
      %540 = vmatprep.subr.bf16.mxu0 0
      %541 = vmatpush1.bf16.msra.mxu0 %v497
      %542 = vmatprep.subr.bf16.mxu0 0
      %543 = vmatpush1.bf16.msra.mxu0 0
      %544 = vmatprep.subr.bf16.mxu0 0
      %545 = vmatpush1.bf16.msra.mxu0 0
      %546 = vmatprep.subr.bf16.mxu0 0
      %547 = vmatpush1.bf16.msra.mxu0 0
      %548 = vmatprep.subr.bf16.mxu0 0
      %549 = vmatpush1.bf16.msra.mxu0 0
      %550 = vmatprep.subr.bf16.mxu0 0
      %551 = vmatpush1.bf16.msra.mxu0 0
      %552 = vmatprep.subr.bf16.mxu0 0
      %553 = vmatpush1.bf16.msra.mxu0 0
      %554 = vmatprep.subr.bf16.mxu0 0
      %555 = vmatpush1.bf16.msra.mxu0 0
      %556 = vmatprep.subr.bf16.mxu0 0
      %557 = vmatpush1.bf16.msra.mxu0 0
      %558 = vmatprep.subr.bf16.mxu0 0
      %559 = vmatpush1.bf16.msra.mxu0 0
      %560 = vmatprep.subr.bf16.mxu0 0
      %561 = vmatpush1.bf16.msra.mxu0 0
      %562 = vmatprep.subr.bf16.mxu0 0
      %563 = vmatpush1.bf16.msra.mxu0 0
      %564 = vmatprep.subr.bf16.mxu0 0
      %565 = vmatpush1.bf16.msra.mxu0 0
      %566 = vmatprep.subr.bf16.mxu0 0
      %567 = vmatpush1.bf16.msra.mxu0 0
      %568 = vmatprep.subr.bf16.mxu0 0
      %569 = vmatpush1.bf16.msra.mxu0 0
      %570 = vmatprep.subr.bf16.mxu0 0
      %571 = vmatpush1.bf16.msra.mxu0 0
      %572 = vmatprep.mubr.bf16.mxu0 0
      %573 = vmatmul.mubr.bf16.gmra.mrb[0].mxu0 %v488
      %v574 = vpop.f32.mrb[0].mxu0
      %v575 = vadd.f32 %v482, %v574
      %v576 = vpop.f32.mrb[0].mxu0
      %v577 = vpop.f32.mrb[0].mxu0
      %v578 = vpop.f32.mrb[0].mxu0
      %579 = vdwg.mxu0
      %s580 = scalar_lea.vmem %s1, 8
      %v581 = vld [vmem:[%s580] sm:$0xf]
      %582 = vrot.lane.b32.xlu0 %v374, 126
      %v583 = vpop.permute.xlu0 %582
      %584 = vrot.lane.b32.xlu0 %v375, 126
      %v585 = vpop.permute.xlu0 %584
      %586 = vrot.lane.b32.xlu0 %v376, 126
      %v587 = vpop.permute.xlu0 %586
      %vm588 = vcmask 1031168
      %v589 = vsel %vm588, %v583, %v585
      %v590 = vsel %vm588, %v585, %v587
      %v592 = vsel %vm392, %v581, 0
      %v595 = vsel %vm396, %v589, 0
      %v598 = vsel %vm396, %v590, 0
      %v601 = vsel %vm396, %v587, 0
      %603 = vmatprep.subr.bf16.mxu0 %v598
      %604 = vmatpush1.bf16.msra.mxu0 %v595
      %605 = vmatprep.subr.bf16.mxu0 0
      %606 = vmatpush1.bf16.msra.mxu0 0
      %607 = vmatprep.subr.bf16.mxu0 0
      %608 = vmatpush1.bf16.msra.mxu0 0
      %609 = vmatprep.subr.bf16.mxu0 0
      %610 = vmatpush1.bf16.msra.mxu0 0
      %611 = vmatprep.subr.bf16.mxu0 0
      %612 = vmatpush1.bf16.msra.mxu0 0
      %613 = vmatprep.subr.bf16.mxu0 0
      %614 = vmatpush1.bf16.msra.mxu0 0
      %615 = vmatprep.subr.bf16.mxu0 0
      %616 = vmatpush1.bf16.msra.mxu0 0
      %617 = vmatprep.subr.bf16.mxu0 0
      %618 = vmatpush1.bf16.msra.mxu0 0
      %619 = vmatprep.subr.bf16.mxu0 0
      %620 = vmatpush1.bf16.msra.mxu0 0
      %621 = vmatprep.subr.bf16.mxu0 0
      %622 = vmatpush1.bf16.msra.mxu0 0
      %623 = vmatprep.subr.bf16.mxu0 0
      %624 = vmatpush1.bf16.msra.mxu0 0
      %625 = vmatprep.subr.bf16.mxu0 0
      %626 = vmatpush1.bf16.msra.mxu0 0
      %627 = vmatprep.subr.bf16.mxu0 0
      %628 = vmatpush1.bf16.msra.mxu0 0
      %629 = vmatprep.subr.bf16.mxu0 0
      %630 = vmatpush1.bf16.msra.mxu0 0
      %631 = vmatprep.subr.bf16.mxu0 0
      %632 = vmatpush1.bf16.msra.mxu0 0
      %633 = vmatprep.subr.bf16.mxu0 0
      %634 = vmatpush1.bf16.msra.mxu0 0
      %635 = vmatprep.mubr.bf16.mxu0 0
      %636 = vmatmul.mubr.bf16.gmra.mrb[0].mxu0 %v592
      %v637 = vpop.f32.mrb[0].mxu0
      %v638 = vadd.f32 0.0, %v637
      %v639 = vpop.f32.mrb[0].mxu0
      %v640 = vadd.f32 0.0, %v639
      %v641 = vpop.f32.mrb[0].mxu0
      %v642 = vpop.f32.mrb[0].mxu0
      %643 = vdwg.mxu0
      %644 = vmatprep.subr.bf16.mxu0 0
      %645 = vmatpush1.bf16.msra.mxu0 %v601
      %646 = vmatprep.subr.bf16.mxu0 0
      %647 = vmatpush1.bf16.msra.mxu0 0
      %648 = vmatprep.subr.bf16.mxu0 0
      %649 = vmatpush1.bf16.msra.mxu0 0
      %650 = vmatprep.subr.bf16.mxu0 0
      %651 = vmatpush1.bf16.msra.mxu0 0
      %652 = vmatprep.subr.bf16.mxu0 0
      %653 = vmatpush1.bf16.msra.mxu0 0
      %654 = vmatprep.subr.bf16.mxu0 0
      %655 = vmatpush1.bf16.msra.mxu0 0
      %656 = vmatprep.subr.bf16.mxu0 0
      %657 = vmatpush1.bf16.msra.mxu0 0
      %658 = vmatprep.subr.bf16.mxu0 0
      %659 = vmatpush1.bf16.msra.mxu0 0
      %660 = vmatprep.subr.bf16.mxu0 0
      %661 = vmatpush1.bf16.msra.mxu0 0
      %662 = vmatprep.subr.bf16.mxu0 0
      %663 = vmatpush1.bf16.msra.mxu0 0
      %664 = vmatprep.subr.bf16.mxu0 0
      %665 = vmatpush1.bf16.msra.mxu0 0
      %666 = vmatprep.subr.bf16.mxu0 0
      %667 = vmatpush1.bf16.msra.mxu0 0
      %668 = vmatprep.subr.bf16.mxu0 0
      %669 = vmatpush1.bf16.msra.mxu0 0
      %670 = vmatprep.subr.bf16.mxu0 0
      %671 = vmatpush1.bf16.msra.mxu0 0
      %672 = vmatprep.subr.bf16.mxu0 0
      %673 = vmatpush1.bf16.msra.mxu0 0
      %674 = vmatprep.subr.bf16.mxu0 0
      %675 = vmatpush1.bf16.msra.mxu0 0
      %676 = vmatprep.mubr.bf16.mxu0 0
      %677 = vmatmul.mubr.bf16.gmra.mrb[0].mxu0 %v592
      %v678 = vpop.f32.mrb[0].mxu0
      %v679 = vadd.f32 0.0, %v678
      %v680 = vpop.f32.mrb[0].mxu0
      %v681 = vpop.f32.mrb[0].mxu0
      %v682 = vpop.f32.mrb[0].mxu0
      %683 = vdwg.mxu0
      %v684 = vadd.f32 %v534, %v638
      %v685 = vadd.f32 %v536, %v640
      %v686 = vadd.f32 %v575, %v679
      %s687 = scalar_lea.vmem %s1, 12
      %v688 = vld [vmem:[%s687] sm:$0xf]
      %689 = vrot.lane.b32.xlu0 %v374, 110
      %v690 = vpop.permute.xlu0 %689
      %691 = vrot.lane.b32.xlu0 %v375, 110
      %v692 = vpop.permute.xlu0 %691
      %693 = vrot.lane.b32.xlu0 %v376, 110
      %v694 = vpop.permute.xlu0 %693
      %vm695 = vcmask 900096
      %v696 = vsel %vm695, %v690, %v692
      %v697 = vsel %vm695, %v692, %v694
      %v699 = vsel %vm392, %v688, 0
      %v702 = vsel %vm396, %v696, 0
      %v705 = vsel %vm396, %v697, 0
      %v708 = vsel %vm396, %v694, 0
      %710 = vmatprep.subr.bf16.mxu0 %v705
      %711 = vmatpush1.bf16.msra.mxu0 %v702
      %712 = vmatprep.subr.bf16.mxu0 0
      %713 = vmatpush1.bf16.msra.mxu0 0
      %714 = vmatprep.subr.bf16.mxu0 0
      %715 = vmatpush1.bf16.msra.mxu0 0
      %716 = vmatprep.subr.bf16.mxu0 0
      %717 = vmatpush1.bf16.msra.mxu0 0
      %718 = vmatprep.subr.bf16.mxu0 0
      %719 = vmatpush1.bf16.msra.mxu0 0
      %720 = vmatprep.subr.bf16.mxu0 0
      %721 = vmatpush1.bf16.msra.mxu0 0
      %722 = vmatprep.subr.bf16.mxu0 0
      %723 = vmatpush1.bf16.msra.mxu0 0
      %724 = vmatprep.subr.bf16.mxu0 0
      %725 = vmatpush1.bf16.msra.mxu0 0
      %726 = vmatprep.subr.bf16.mxu0 0
      %727 = vmatpush1.bf16.msra.mxu0 0
      %728 = vmatprep.subr.bf16.mxu0 0
      %729 = vmatpush1.bf16.msra.mxu0 0
      %730 = vmatprep.subr.bf16.mxu0 0
      %731 = vmatpush1.bf16.msra.mxu0 0
      %732 = vmatprep.subr.bf16.mxu0 0
      %733 = vmatpush1.bf16.msra.mxu0 0
      %734 = vmatprep.subr.bf16.mxu0 0
      %735 = vmatpush1.bf16.msra.mxu0 0
      %736 = vmatprep.subr.bf16.mxu0 0
      %737 = vmatpush1.bf16.msra.mxu0 0
      %738 = vmatprep.subr.bf16.mxu0 0
      %739 = vmatpush1.bf16.msra.mxu0 0
      %740 = vmatprep.subr.bf16.mxu0 0
      %741 = vmatpush1.bf16.msra.mxu0 0
      %742 = vmatprep.mubr.bf16.mxu0 0
      %743 = vmatmul.mubr.bf16.gmra.mrb[0].mxu0 %v699
      %v744 = vpop.f32.mrb[0].mxu0
      %v745 = vadd.f32 0.0, %v744
      %v746 = vpop.f32.mrb[0].mxu0
      %v747 = vadd.f32 0.0, %v746
      %v748 = vpop.f32.mrb[0].mxu0
      %v749 = vpop.f32.mrb[0].mxu0
      %750 = vdwg.mxu0
      %751 = vmatprep.subr.bf16.mxu0 0
      %752 = vmatpush1.bf16.msra.mxu0 %v708
      %753 = vmatprep.subr.bf16.mxu0 0
      %754 = vmatpush1.bf16.msra.mxu0 0
      %755 = vmatprep.subr.bf16.mxu0 0
      %756 = vmatpush1.bf16.msra.mxu0 0
      %757 = vmatprep.subr.bf16.mxu0 0
      %758 = vmatpush1.bf16.msra.mxu0 0
      %759 = vmatprep.subr.bf16.mxu0 0
      %760 = vmatpush1.bf16.msra.mxu0 0
      %761 = vmatprep.subr.bf16.mxu0 0
      %762 = vmatpush1.bf16.msra.mxu0 0
      %763 = vmatprep.subr.bf16.mxu0 0
      %764 = vmatpush1.bf16.msra.mxu0 0
      %765 = vmatprep.subr.bf16.mxu0 0
      %766 = vmatpush1.bf16.msra.mxu0 0
      %767 = vmatprep.subr.bf16.mxu0 0
      %768 = vmatpush1.bf16.msra.mxu0 0
      %769 = vmatprep.subr.bf16.mxu0 0
      %770 = vmatpush1.bf16.msra.mxu0 0
      %771 = vmatprep.subr.bf16.mxu0 0
      %772 = vmatpush1.bf16.msra.mxu0 0
      %773 = vmatprep.subr.bf16.mxu0 0
      %774 = vmatpush1.bf16.msra.mxu0 0
      %775 = vmatprep.subr.bf16.mxu0 0
      %776 = vmatpush1.bf16.msra.mxu0 0
      %777 = vmatprep.subr.bf16.mxu0 0
      %778 = vmatpush1.bf16.msra.mxu0 0
      %779 = vmatprep.subr.bf16.mxu0 0
      %780 = vmatpush1.bf16.msra.mxu0 0
      %781 = vmatprep.subr.bf16.mxu0 0
      %782 = vmatpush1.bf16.msra.mxu0 0
      %783 = vmatprep.mubr.bf16.mxu0 0
      %784 = vmatmul.mubr.bf16.gmra.mrb[0].mxu0 %v699
      %v785 = vpop.f32.mrb[0].mxu0
      %v786 = vadd.f32 0.0, %v785
      %v787 = vpop.f32.mrb[0].mxu0
      %v788 = vpop.f32.mrb[0].mxu0
      %v789 = vpop.f32.mrb[0].mxu0
      %790 = vdwg.mxu0
      %v791 = vadd.f32 %v684, %v745
      %v792 = vadd.f32 %v685, %v747
      %v793 = vadd.f32 %v686, %v786
      %s794 = scalar_lea.vmem %s1, 16
      %v795 = vld [vmem:[%s794] sm:$0xf]
      %796 = vrot.lane.b32.xlu0 %v374, 109
      %v797 = vpop.permute.xlu0 %796
      %798 = vrot.lane.b32.xlu0 %v375, 109
      %v799 = vpop.permute.xlu0 %798
      %800 = vrot.lane.b32.xlu0 %v376, 109
      %v801 = vpop.permute.xlu0 %800
      %vm802 = vcmask 891904
      %v803 = vsel %vm802, %v797, %v799
      %v804 = vsel %vm802, %v799, %v801
      %v806 = vsel %vm392, %v795, 0
      %v809 = vsel %vm396, %v803, 0
      %v812 = vsel %vm396, %v804, 0
      %v815 = vsel %vm396, %v801, 0
      %817 = vmatprep.subr.bf16.mxu0 %v812
      %818 = vmatpush1.bf16.msra.mxu0 %v809
      %819 = vmatprep.subr.bf16.mxu0 0
      %820 = vmatpush1.bf16.msra.mxu0 0
      %821 = vmatprep.subr.bf16.mxu0 0
      %822 = vmatpush1.bf16.msra.mxu0 0
      %823 = vmatprep.subr.bf16.mxu0 0
      %824 = vmatpush1.bf16.msra.mxu0 0
      %825 = vmatprep.subr.bf16.mxu0 0
      %826 = vmatpush1.bf16.msra.mxu0 0
      %827 = vmatprep.subr.bf16.mxu0 0
      %828 = vmatpush1.bf16.msra.mxu0 0
      %829 = vmatprep.subr.bf16.mxu0 0
      %830 = vmatpush1.bf16.msra.mxu0 0
      %831 = vmatprep.subr.bf16.mxu0 0
      %832 = vmatpush1.bf16.msra.mxu0 0
      %833 = vmatprep.subr.bf16.mxu0 0
      %834 = vmatpush1.bf16.msra.mxu0 0
      %835 = vmatprep.subr.bf16.mxu0 0
      %836 = vmatpush1.bf16.msra.mxu0 0
      %837 = vmatprep.subr.bf16.mxu0 0
      %838 = vmatpush1.bf16.msra.mxu0 0
      %839 = vmatprep.subr.bf16.mxu0 0
      %840 = vmatpush1.bf16.msra.mxu0 0
      %841 = vmatprep.subr.bf16.mxu0 0
      %842 = vmatpush1.bf16.msra.mxu0 0
      %843 = vmatprep.subr.bf16.mxu0 0
      %844 = vmatpush1.bf16.msra.mxu0 0
      %845 = vmatprep.subr.bf16.mxu0 0
      %846 = vmatpush1.bf16.msra.mxu0 0
      %847 = vmatprep.subr.bf16.mxu0 0
      %848 = vmatpush1.bf16.msra.mxu0 0
      %849 = vmatprep.mubr.bf16.mxu0 0
      %850 = vmatmul.mubr.bf16.gmra.mrb[0].mxu0 %v806
      %v851 = vpop.f32.mrb[0].mxu0
      %v852 = vadd.f32 0.0, %v851
      %v853 = vpop.f32.mrb[0].mxu0
      %v854 = vadd.f32 0.0, %v853
      %v855 = vpop.f32.mrb[0].mxu0
      %v856 = vpop.f32.mrb[0].mxu0
      %857 = vdwg.mxu0
      %858 = vmatprep.subr.bf16.mxu0 0
      %859 = vmatpush1.bf16.msra.mxu0 %v815
      %860 = vmatprep.subr.bf16.mxu0 0
      %861 = vmatpush1.bf16.msra.mxu0 0
      %862 = vmatprep.subr.bf16.mxu0 0
      %863 = vmatpush1.bf16.msra.mxu0 0
      %864 = vmatprep.subr.bf16.mxu0 0
      %865 = vmatpush1.bf16.msra.mxu0 0
      %866 = vmatprep.subr.bf16.mxu0 0
      %867 = vmatpush1.bf16.msra.mxu0 0
      %868 = vmatprep.subr.bf16.mxu0 0
      %869 = vmatpush1.bf16.msra.mxu0 0
      %870 = vmatprep.subr.bf16.mxu0 0
      %871 = vmatpush1.bf16.msra.mxu0 0
      %872 = vmatprep.subr.bf16.mxu0 0
      %873 = vmatpush1.bf16.msra.mxu0 0
      %874 = vmatprep.subr.bf16.mxu0 0
      %875 = vmatpush1.bf16.msra.mxu0 0
      %876 = vmatprep.subr.bf16.mxu0 0
      %877 = vmatpush1.bf16.msra.mxu0 0
      %878 = vmatprep.subr.bf16.mxu0 0
      %879 = vmatpush1.bf16.msra.mxu0 0
      %880 = vmatprep.subr.bf16.mxu0 0
      %881 = vmatpush1.bf16.msra.mxu0 0
      %882 = vmatprep.subr.bf16.mxu0 0
      %883 = vmatpush1.bf16.msra.mxu0 0
      %884 = vmatprep.subr.bf16.mxu0 0
      %885 = vmatpush1.bf16.msra.mxu0 0
      %886 = vmatprep.subr.bf16.mxu0 0
      %887 = vmatpush1.bf16.msra.mxu0 0
      %888 = vmatprep.subr.bf16.mxu0 0
      %889 = vmatpush1.bf16.msra.mxu0 0
      %890 = vmatprep.mubr.bf16.mxu0 0
      %891 = vmatmul.mubr.bf16.gmra.mrb[0].mxu0 %v806
      %v892 = vpop.f32.mrb[0].mxu0
      %v893 = vadd.f32 0.0, %v892
      %v894 = vpop.f32.mrb[0].mxu0
      %v895 = vpop.f32.mrb[0].mxu0
      %v896 = vpop.f32.mrb[0].mxu0
      %897 = vdwg.mxu0
      %v898 = vadd.f32 %v791, %v852
      %v899 = vadd.f32 %v792, %v854
      %v900 = vadd.f32 %v793, %v893
      %s901 = scalar_lea.vmem %s1, 20
      %v902 = vld [vmem:[%s901] sm:$0xf]
      %903 = vrot.lane.b32.xlu0 %v374, 108
      %v904 = vpop.permute.xlu0 %903
      %905 = vrot.lane.b32.xlu0 %v375, 108
      %v906 = vpop.permute.xlu0 %905
      %907 = vrot.lane.b32.xlu0 %v376, 108
      %v908 = vpop.permute.xlu0 %907
      %vm909 = vcmask 883712
      %v910 = vsel %vm909, %v904, %v906
      %v911 = vsel %vm909, %v906, %v908
      %v913 = vsel %vm392, %v902, 0
      %v916 = vsel %vm396, %v910, 0
      %v919 = vsel %vm396, %v911, 0
      %v922 = vsel %vm396, %v908, 0
      %924 = vmatprep.subr.bf16.mxu0 %v919
      %925 = vmatpush1.bf16.msra.mxu0 %v916
      %926 = vmatprep.subr.bf16.mxu0 0
      %927 = vmatpush1.bf16.msra.mxu0 0
      %928 = vmatprep.subr.bf16.mxu0 0
      %929 = vmatpush1.bf16.msra.mxu0 0
      %930 = vmatprep.subr.bf16.mxu0 0
      %931 = vmatpush1.bf16.msra.mxu0 0
      %932 = vmatprep.subr.bf16.mxu0 0
      %933 = vmatpush1.bf16.msra.mxu0 0
      %934 = vmatprep.subr.bf16.mxu0 0
      %935 = vmatpush1.bf16.msra.mxu0 0
      %936 = vmatprep.subr.bf16.mxu0 0
      %937 = vmatpush1.bf16.msra.mxu0 0
      %938 = vmatprep.subr.bf16.mxu0 0
      %939 = vmatpush1.bf16.msra.mxu0 0
      %940 = vmatprep.subr.bf16.mxu0 0
      %941 = vmatpush1.bf16.msra.mxu0 0
      %942 = vmatprep.subr.bf16.mxu0 0
      %943 = vmatpush1.bf16.msra.mxu0 0
      %944 = vmatprep.subr.bf16.mxu0 0
      %945 = vmatpush1.bf16.msra.mxu0 0
      %946 = vmatprep.subr.bf16.mxu0 0
      %947 = vmatpush1.bf16.msra.mxu0 0
      %948 = vmatprep.subr.bf16.mxu0 0
      %949 = vmatpush1.bf16.msra.mxu0 0
      %950 = vmatprep.subr.bf16.mxu0 0
      %951 = vmatpush1.bf16.msra.mxu0 0
      %952 = vmatprep.subr.bf16.mxu0 0
      %953 = vmatpush1.bf16.msra.mxu0 0
      %954 = vmatprep.subr.bf16.mxu0 0
      %955 = vmatpush1.bf16.msra.mxu0 0
      %956 = vmatprep.mubr.bf16.mxu0 0
      %957 = vmatmul.mubr.bf16.gmra.mrb[0].mxu0 %v913
      %v958 = vpop.f32.mrb[0].mxu0
      %v959 = vadd.f32 0.0, %v958
      %v960 = vpop.f32.mrb[0].mxu0
      %v961 = vadd.f32 0.0, %v960
      %v962 = vpop.f32.mrb[0].mxu0
      %v963 = vpop.f32.mrb[0].mxu0
      %964 = vdwg.mxu0
      %965 = vmatprep.subr.bf16.mxu0 0
      %966 = vmatpush1.bf16.msra.mxu0 %v922
      %967 = vmatprep.subr.bf16.mxu0 0
      %968 = vmatpush1.bf16.msra.mxu0 0
      %969 = vmatprep.subr.bf16.mxu0 0
      %970 = vmatpush1.bf16.msra.mxu0 0
      %971 = vmatprep.subr.bf16.mxu0 0
      %972 = vmatpush1.bf16.msra.mxu0 0
      %973 = vmatprep.subr.bf16.mxu0 0
      %974 = vmatpush1.bf16.msra.mxu0 0
      %975 = vmatprep.subr.bf16.mxu0 0
      %976 = vmatpush1.bf16.msra.mxu0 0
      %977 = vmatprep.subr.bf16.mxu0 0
      %978 = vmatpush1.bf16.msra.mxu0 0
      %979 = vmatprep.subr.bf16.mxu0 0
      %980 = vmatpush1.bf16.msra.mxu0 0
      %981 = vmatprep.subr.bf16.mxu0 0
      %982 = vmatpush1.bf16.msra.mxu0 0
      %983 = vmatprep.subr.bf16.mxu0 0
      %984 = vmatpush1.bf16.msra.mxu0 0
      %985 = vmatprep.subr.bf16.mxu0 0
      %986 = vmatpush1.bf16.msra.mxu0 0
      %987 = vmatprep.subr.bf16.mxu0 0
      %988 = vmatpush1.bf16.msra.mxu0 0
      %989 = vmatprep.subr.bf16.mxu0 0
      %990 = vmatpush1.bf16.msra.mxu0 0
      %991 = vmatprep.subr.bf16.mxu0 0
      %992 = vmatpush1.bf16.msra.mxu0 0
      %993 = vmatprep.subr.bf16.mxu0 0
      %994 = vmatpush1.bf16.msra.mxu0 0
      %995 = vmatprep.subr.bf16.mxu0 0
      %996 = vmatpush1.bf16.msra.mxu0 0
      %997 = vmatprep.mubr.bf16.mxu0 0
      %998 = vmatmul.mubr.bf16.gmra.mrb[0].mxu0 %v913
      %v999 = vpop.f32.mrb[0].mxu0
      %v1000 = vadd.f32 0.0, %v999
      %v1001 = vpop.f32.mrb[0].mxu0
      %v1002 = vpop.f32.mrb[0].mxu0
      %v1003 = vpop.f32.mrb[0].mxu0
      %1004 = vdwg.mxu0
      %v1005 = vadd.f32 %v898, %v959
      %v1006 = vadd.f32 %v899, %v961
      %v1007 = vadd.f32 %v900, %v1000
      %s1008 = scalar_lea.vmem %s1, 24
      %v1009 = vld [vmem:[%s1008] sm:$0xf]
      %1010 = vrot.lane.b32.xlu0 %v374, 92
      %v1011 = vpop.permute.xlu0 %1010
      %1012 = vrot.lane.b32.xlu0 %v375, 92
      %v1013 = vpop.permute.xlu0 %1012
      %1014 = vrot.lane.b32.xlu0 %v376, 92
      %v1015 = vpop.permute.xlu0 %1014
      %vm1016 = vcmask 752640
      %v1017 = vsel %vm1016, %v1011, %v1013
      %v1018 = vsel %vm1016, %v1013, %v1015
      %v1020 = vsel %vm392, %v1009, 0
      %v1023 = vsel %vm396, %v1017, 0
      %v1026 = vsel %vm396, %v1018, 0
      %v1029 = vsel %vm396, %v1015, 0
      %1031 = vmatprep.subr.bf16.mxu0 %v1026
      %1032 = vmatpush1.bf16.msra.mxu0 %v1023
      %1033 = vmatprep.subr.bf16.mxu0 0
      %1034 = vmatpush1.bf16.msra.mxu0 0
      %1035 = vmatprep.subr.bf16.mxu0 0
      %1036 = vmatpush1.bf16.msra.mxu0 0
      %1037 = vmatprep.subr.bf16.mxu0 0
      %1038 = vmatpush1.bf16.msra.mxu0 0
      %1039 = vmatprep.subr.bf16.mxu0 0
      %1040 = vmatpush1.bf16.msra.mxu0 0
      %1041 = vmatprep.subr.bf16.mxu0 0
      %1042 = vmatpush1.bf16.msra.mxu0 0
      %1043 = vmatprep.subr.bf16.mxu0 0
      %1044 = vmatpush1.bf16.msra.mxu0 0
      %1045 = vmatprep.subr.bf16.mxu0 0
      %1046 = vmatpush1.bf16.msra.mxu0 0
      %1047 = vmatprep.subr.bf16.mxu0 0
      %1048 = vmatpush1.bf16.msra.mxu0 0
      %1049 = vmatprep.subr.bf16.mxu0 0
      %1050 = vmatpush1.bf16.msra.mxu0 0
      %1051 = vmatprep.subr.bf16.mxu0 0
      %1052 = vmatpush1.bf16.msra.mxu0 0
      %1053 = vmatprep.subr.bf16.mxu0 0
      %1054 = vmatpush1.bf16.msra.mxu0 0
      %1055 = vmatprep.subr.bf16.mxu0 0
      %1056 = vmatpush1.bf16.msra.mxu0 0
      %1057 = vmatprep.subr.bf16.mxu0 0
      %1058 = vmatpush1.bf16.msra.mxu0 0
      %1059 = vmatprep.subr.bf16.mxu0 0
      %1060 = vmatpush1.bf16.msra.mxu0 0
      %1061 = vmatprep.subr.bf16.mxu0 0
      %1062 = vmatpush1.bf16.msra.mxu0 0
      %1063 = vmatprep.mubr.bf16.mxu0 0
      %1064 = vmatmul.mubr.bf16.gmra.mrb[0].mxu0 %v1020
      %v1065 = vpop.f32.mrb[0].mxu0
      %v1066 = vadd.f32 0.0, %v1065
      %v1067 = vpop.f32.mrb[0].mxu0
      %v1068 = vadd.f32 0.0, %v1067
      %v1069 = vpop.f32.mrb[0].mxu0
      %v1070 = vpop.f32.mrb[0].mxu0
      %1071 = vdwg.mxu0
      %1072 = vmatprep.subr.bf16.mxu0 0
      %1073 = vmatpush1.bf16.msra.mxu0 %v1029
      %1074 = vmatprep.subr.bf16.mxu0 0
      %1075 = vmatpush1.bf16.msra.mxu0 0
      %1076 = vmatprep.subr.bf16.mxu0 0
      %1077 = vmatpush1.bf16.msra.mxu0 0
      %1078 = vmatprep.subr.bf16.mxu0 0
      %1079 = vmatpush1.bf16.msra.mxu0 0
      %1080 = vmatprep.subr.bf16.mxu0 0
      %1081 = vmatpush1.bf16.msra.mxu0 0
      %1082 = vmatprep.subr.bf16.mxu0 0
      %1083 = vmatpush1.bf16.msra.mxu0 0
      %1084 = vmatprep.subr.bf16.mxu0 0
      %1085 = vmatpush1.bf16.msra.mxu0 0
      %1086 = vmatprep.subr.bf16.mxu0 0
      %1087 = vmatpush1.bf16.msra.mxu0 0
      %1088 = vmatprep.subr.bf16.mxu0 0
      %1089 = vmatpush1.bf16.msra.mxu0 0
      %1090 = vmatprep.subr.bf16.mxu0 0
      %1091 = vmatpush1.bf16.msra.mxu0 0
      %1092 = vmatprep.subr.bf16.mxu0 0
      %1093 = vmatpush1.bf16.msra.mxu0 0
      %1094 = vmatprep.subr.bf16.mxu0 0
      %1095 = vmatpush1.bf16.msra.mxu0 0
      %1096 = vmatprep.subr.bf16.mxu0 0
      %1097 = vmatpush1.bf16.msra.mxu0 0
      %1098 = vmatprep.subr.bf16.mxu0 0
      %1099 = vmatpush1.bf16.msra.mxu0 0
      %1100 = vmatprep.subr.bf16.mxu0 0
      %1101 = vmatpush1.bf16.msra.mxu0 0
      %1102 = vmatprep.subr.bf16.mxu0 0
      %1103 = vmatpush1.bf16.msra.mxu0 0
      %1104 = vmatprep.mubr.bf16.mxu0 0
      %1105 = vmatmul.mubr.bf16.gmra.mrb[0].mxu0 %v1020
      %v1106 = vpop.f32.mrb[0].mxu0
      %v1107 = vadd.f32 0.0, %v1106
      %v1108 = vpop.f32.mrb[0].mxu0
      %v1109 = vpop.f32.mrb[0].mxu0
      %v1110 = vpop.f32.mrb[0].mxu0
      %1111 = vdwg.mxu0
      %v1112 = vadd.f32 %v1005, %v1066
      %v1113 = vadd.f32 %v1006, %v1068
      %v1114 = vadd.f32 %v1007, %v1107
      %s1115 = scalar_lea.vmem %s1, 28
      %v1116 = vld [vmem:[%s1115] sm:$0xf]
      %1117 = vrot.lane.b32.xlu0 %v374, 91
      %v1118 = vpop.permute.xlu0 %1117
      %1119 = vrot.lane.b32.xlu0 %v375, 91
      %v1120 = vpop.permute.xlu0 %1119
      %1121 = vrot.lane.b32.xlu0 %v376, 91
      %v1122 = vpop.permute.xlu0 %1121
      %vm1123 = vcmask 744448
      %v1124 = vsel %vm1123, %v1118, %v1120
      %v1125 = vsel %vm1123, %v1120, %v1122
      %v1127 = vsel %vm392, %v1116, 0
      %v1130 = vsel %vm396, %v1124, 0
      %v1133 = vsel %vm396, %v1125, 0
      %v1136 = vsel %vm396, %v1122, 0
      %1138 = vmatprep.subr.bf16.mxu0 %v1133
      %1139 = vmatpush1.bf16.msra.mxu0 %v1130
      %1140 = vmatprep.subr.bf16.mxu0 0
      %1141 = vmatpush1.bf16.msra.mxu0 0
      %1142 = vmatprep.subr.bf16.mxu0 0
      %1143 = vmatpush1.bf16.msra.mxu0 0
      %1144 = vmatprep.subr.bf16.mxu0 0
      %1145 = vmatpush1.bf16.msra.mxu0 0
      %1146 = vmatprep.subr.bf16.mxu0 0
      %1147 = vmatpush1.bf16.msra.mxu0 0
      %1148 = vmatprep.subr.bf16.mxu0 0
      %1149 = vmatpush1.bf16.msra.mxu0 0
      %1150 = vmatprep.subr.bf16.mxu0 0
      %1151 = vmatpush1.bf16.msra.mxu0 0
      %1152 = vmatprep.subr.bf16.mxu0 0
      %1153 = vmatpush1.bf16.msra.mxu0 0
      %1154 = vmatprep.subr.bf16.mxu0 0
      %1155 = vmatpush1.bf16.msra.mxu0 0
      %1156 = vmatprep.subr.bf16.mxu0 0
      %1157 = vmatpush1.bf16.msra.mxu0 0
      %1158 = vmatprep.subr.bf16.mxu0 0
      %1159 = vmatpush1.bf16.msra.mxu0 0
      %1160 = vmatprep.subr.bf16.mxu0 0
      %1161 = vmatpush1.bf16.msra.mxu0 0
      %1162 = vmatprep.subr.bf16.mxu0 0
      %1163 = vmatpush1.bf16.msra.mxu0 0
      %1164 = vmatprep.subr.bf16.mxu0 0
      %1165 = vmatpush1.bf16.msra.mxu0 0
      %1166 = vmatprep.subr.bf16.mxu0 0
      %1167 = vmatpush1.bf16.msra.mxu0 0
      %1168 = vmatprep.subr.bf16.mxu0 0
      %1169 = vmatpush1.bf16.msra.mxu0 0
      %1170 = vmatprep.mubr.bf16.mxu0 0
      %1171 = vmatmul.mubr.bf16.gmra.mrb[0].mxu0 %v1127
      %v1172 = vpop.f32.mrb[0].mxu0
      %v1173 = vadd.f32 0.0, %v1172
      %v1174 = vpop.f32.mrb[0].mxu0
      %v1175 = vadd.f32 0.0, %v1174
      %v1176 = vpop.f32.mrb[0].mxu0
      %v1177 = vpop.f32.mrb[0].mxu0
      %1178 = vdwg.mxu0
      %1179 = vmatprep.subr.bf16.mxu0 0
      %1180 = vmatpush1.bf16.msra.mxu0 %v1136
      %1181 = vmatprep.subr.bf16.mxu0 0
      %1182 = vmatpush1.bf16.msra.mxu0 0
      %1183 = vmatprep.subr.bf16.mxu0 0
      %1184 = vmatpush1.bf16.msra.mxu0 0
      %1185 = vmatprep.subr.bf16.mxu0 0
      %1186 = vmatpush1.bf16.msra.mxu0 0
      %1187 = vmatprep.subr.bf16.mxu0 0
      %1188 = vmatpush1.bf16.msra.mxu0 0
      %1189 = vmatprep.subr.bf16.mxu0 0
      %1190 = vmatpush1.bf16.msra.mxu0 0
      %1191 = vmatprep.subr.bf16.mxu0 0
      %1192 = vmatpush1.bf16.msra.mxu0 0
      %1193 = vmatprep.subr.bf16.mxu0 0
      %1194 = vmatpush1.bf16.msra.mxu0 0
      %1195 = vmatprep.subr.bf16.mxu0 0
      %1196 = vmatpush1.bf16.msra.mxu0 0
      %1197 = vmatprep.subr.bf16.mxu0 0
      %1198 = vmatpush1.bf16.msra.mxu0 0
      %1199 = vmatprep.subr.bf16.mxu0 0
      %1200 = vmatpush1.bf16.msra.mxu0 0
      %1201 = vmatprep.subr.bf16.mxu0 0
      %1202 = vmatpush1.bf16.msra.mxu0 0
      %1203 = vmatprep.subr.bf16.mxu0 0
      %1204 = vmatpush1.bf16.msra.mxu0 0
      %1205 = vmatprep.subr.bf16.mxu0 0
      %1206 = vmatpush1.bf16.msra.mxu0 0
      %1207 = vmatprep.subr.bf16.mxu0 0
      %1208 = vmatpush1.bf16.msra.mxu0 0
      %1209 = vmatprep.subr.bf16.mxu0 0
      %1210 = vmatpush1.bf16.msra.mxu0 0
      %1211 = vmatprep.mubr.bf16.mxu0 0
      %1212 = vmatmul.mubr.bf16.gmra.mrb[0].mxu0 %v1127
      %v1213 = vpop.f32.mrb[0].mxu0
      %v1214 = vadd.f32 0.0, %v1213
      %v1215 = vpop.f32.mrb[0].mxu0
      %v1216 = vpop.f32.mrb[0].mxu0
      %v1217 = vpop.f32.mrb[0].mxu0
      %1218 = vdwg.mxu0
      %v1219 = vadd.f32 %v1112, %v1173
      %v1220 = vadd.f32 %v1113, %v1175
      %v1221 = vadd.f32 %v1114, %v1214
      %s1222 = scalar_lea.vmem %s1, 32
      %v1223 = vld [vmem:[%s1222] sm:$0xf]
      %1224 = vrot.lane.b32.xlu0 %v374, 90
      %v1225 = vpop.permute.xlu0 %1224
      %1226 = vrot.lane.b32.xlu0 %v375, 90
      %v1227 = vpop.permute.xlu0 %1226
      %1228 = vrot.lane.b32.xlu0 %v376, 90
      %v1229 = vpop.permute.xlu0 %1228
      %vm1230 = vcmask 736256
      %v1231 = vsel %vm1230, %v1225, %v1227
      %v1232 = vsel %vm1230, %v1227, %v1229
      %v1234 = vsel %vm392, %v1223, 0
      %v1237 = vsel %vm396, %v1231, 0
      %v1240 = vsel %vm396, %v1232, 0
      %v1243 = vsel %vm396, %v1229, 0
      %1245 = vmatprep.subr.bf16.mxu0 %v1240
      %1246 = vmatpush1.bf16.msra.mxu0 %v1237
      %1247 = vmatprep.subr.bf16.mxu0 0
      %1248 = vmatpush1.bf16.msra.mxu0 0
      %1249 = vmatprep.subr.bf16.mxu0 0
      %1250 = vmatpush1.bf16.msra.mxu0 0
      %1251 = vmatprep.subr.bf16.mxu0 0
      %1252 = vmatpush1.bf16.msra.mxu0 0
      %1253 = vmatprep.subr.bf16.mxu0 0
      %1254 = vmatpush1.bf16.msra.mxu0 0
      %1255 = vmatprep.subr.bf16.mxu0 0
      %1256 = vmatpush1.bf16.msra.mxu0 0
      %1257 = vmatprep.subr.bf16.mxu0 0
      %1258 = vmatpush1.bf16.msra.mxu0 0
      %1259 = vmatprep.subr.bf16.mxu0 0
      %1260 = vmatpush1.bf16.msra.mxu0 0
      %1261 = vmatprep.subr.bf16.mxu0 0
      %1262 = vmatpush1.bf16.msra.mxu0 0
      %1263 = vmatprep.subr.bf16.mxu0 0
      %1264 = vmatpush1.bf16.msra.mxu0 0
      %1265 = vmatprep.subr.bf16.mxu0 0
      %1266 = vmatpush1.bf16.msra.mxu0 0
      %1267 = vmatprep.subr.bf16.mxu0 0
      %1268 = vmatpush1.bf16.msra.mxu0 0
      %1269 = vmatprep.subr.bf16.mxu0 0
      %1270 = vmatpush1.bf16.msra.mxu0 0
      %1271 = vmatprep.subr.bf16.mxu0 0
      %1272 = vmatpush1.bf16.msra.mxu0 0
      %1273 = vmatprep.subr.bf16.mxu0 0
      %1274 = vmatpush1.bf16.msra.mxu0 0
      %1275 = vmatprep.subr.bf16.mxu0 0
      %1276 = vmatpush1.bf16.msra.mxu0 0
      %1277 = vmatprep.mubr.bf16.mxu0 0
      %1278 = vmatmul.mubr.bf16.gmra.mrb[0].mxu0 %v1234
      %v1279 = vpop.f32.mrb[0].mxu0
      %v1280 = vadd.f32 0.0, %v1279
      %v1281 = vpop.f32.mrb[0].mxu0
      %v1282 = vadd.f32 0.0, %v1281
      %v1283 = vpop.f32.mrb[0].mxu0
      %v1284 = vpop.f32.mrb[0].mxu0
      %1285 = vdwg.mxu0
      %1286 = vmatprep.subr.bf16.mxu0 0
      %1287 = vmatpush1.bf16.msra.mxu0 %v1243
      %1288 = vmatprep.subr.bf16.mxu0 0
      %1289 = vmatpush1.bf16.msra.mxu0 0
      %1290 = vmatprep.subr.bf16.mxu0 0
      %1291 = vmatpush1.bf16.msra.mxu0 0
      %1292 = vmatprep.subr.bf16.mxu0 0
      %1293 = vmatpush1.bf16.msra.mxu0 0
      %1294 = vmatprep.subr.bf16.mxu0 0
      %1295 = vmatpush1.bf16.msra.mxu0 0
      %1296 = vmatprep.subr.bf16.mxu0 0
      %1297 = vmatpush1.bf16.msra.mxu0 0
      %1298 = vmatprep.subr.bf16.mxu0 0
      %1299 = vmatpush1.bf16.msra.mxu0 0
      %1300 = vmatprep.subr.bf16.mxu0 0
      %1301 = vmatpush1.bf16.msra.mxu0 0
      %1302 = vmatprep.subr.bf16.mxu0 0
      %1303 = vmatpush1.bf16.msra.mxu0 0
      %1304 = vmatprep.subr.bf16.mxu0 0
      %1305 = vmatpush1.bf16.msra.mxu0 0
      %1306 = vmatprep.subr.bf16.mxu0 0
      %1307 = vmatpush1.bf16.msra.mxu0 0
      %1308 = vmatprep.subr.bf16.mxu0 0
      %1309 = vmatpush1.bf16.msra.mxu0 0
      %1310 = vmatprep.subr.bf16.mxu0 0
      %1311 = vmatpush1.bf16.msra.mxu0 0
      %1312 = vmatprep.subr.bf16.mxu0 0
      %1313 = vmatpush1.bf16.msra.mxu0 0
      %1314 = vmatprep.subr.bf16.mxu0 0
      %1315 = vmatpush1.bf16.msra.mxu0 0
      %1316 = vmatprep.subr.bf16.mxu0 0
      %1317 = vmatpush1.bf16.msra.mxu0 0
      %1318 = vmatprep.mubr.bf16.mxu0 0
      %1319 = vmatmul.mubr.bf16.gmra.mrb[0].mxu0 %v1234
      %v1320 = vpop.f32.mrb[0].mxu0
      %v1321 = vadd.f32 0.0, %v1320
      %v1322 = vpop.f32.mrb[0].mxu0
      %v1323 = vpop.f32.mrb[0].mxu0
      %v1324 = vpop.f32.mrb[0].mxu0
      %1325 = vdwg.mxu0
      %v1326 = vadd.f32 %v1219, %v1280
      %v1327 = vadd.f32 %v1220, %v1282
      %v1328 = vadd.f32 %v1221, %v1321
      %v1329 = vld [vmem:[%s5] sm:$0x7]
      %v1331 = vlaneseq
      %v1332 = vshrl.u32 %v1331, 7
      %v1333 = vsub.s32 0, %v1332
      %v1334 = vrot.slane %v1329, %v1333
      %v1335 = vlaneseq
      %v1336 = vshrl.u32 %v1335, 7
      %v1337 = vsub.s32 1, %v1336
      %v1338 = vrot.slane %v1329, %v1337
      %v1339 = vlaneseq
      %v1340 = vshrl.u32 %v1339, 7
      %v1341 = vsub.s32 2, %v1340
      %v1342 = vrot.slane %v1329, %v1341
      %v1346 = vmul.f32 %v1326, %v1334
      %v1347 = vmul.f32 %v1327, %v1338
      %v1348 = vmul.f32 %v1328, %v1342
      %v1349 = vpack.c.bf16 %v1346, %v1346
      %v1350 = vpack.c.bf16 %v1347, %v1347
      %v1351 = vpack.c.bf16 %v1348, %v1348
      %v1355 = vunpack.c.l.b16 %v1349
      %v1356 = vunpack.c.l.b16 %v1350
      %v1357 = vunpack.c.l.b16 %v1351
      %v1358 = vpack.c.b16 %v1356, %v1355
      %v1359 = vpack.c.b16 %v1357, %v1357
      %1362 = vst [vmem:[%s318] sm:$0xff] %v1358
      %vm1363 = vcmask 551936
      %1364 = vst.msk [vmem:[%s318 + $0x8] sm:$0xf] %vm1363, %v1359
      %v1365 = vadd.f32 %v1346, %v1347
      %vm1366 = vcmask 556032
      %v1367 = vsel %vm1366, %v1348, 0.0
      %v1368 = vadd.f32 %v1365, %v1367
      %1369 = vadd.xlane.f32.xlu0 %v1368
      %v1370 = vpop.xlane.xlu0 %1369
      %vm1371 = vcmask 7168
      %1372 = vst.msk [vmem:[%s322] sm:$0xff] %vm1371, %v1370
      %v1373 = vmul.f32 %v1346, %v1346
      %v1374 = vmul.f32 %v1347, %v1347
      %v1375 = vmul.f32 %v1348, %v1348
      %v1376 = vadd.f32 %v1373, %v1374
      %v1377 = vsel %vm1366, %v1375, 0.0
      %v1378 = vadd.f32 %v1376, %v1377
      %1379 = vadd.xlane.f32.xlu0 %v1378
      %v1380 = vpop.xlane.xlu0 %1379
      %1381 = vst.msk [vmem:[%s326] sm:$0xff] %vm1371, %v1380
      %p1382 = scmp.lt.s32.totalorder %s20, 1
      %s1383 = scalar_select %p1382, %s20, 1
      %s1384 = smul.addr %s1383, 3
      %s1385 = smul.addr %s1384, 4
      %s1386 = scalar_lea.vmem %s6, %s1385
      %p1387 = scmp.lt.s32.totalorder %s20, 1
      %s1388 = scalar_select %p1387, %s20, 1
      %s1389 = smul.addr %s1388, 8
      %s1390 = scalar_lea.vmem %s7, %s1389
      %p1391 = scmp.lt.s32.totalorder %s20, 1
      %s1392 = scalar_select %p1391, %s20, 1
      %s1393 = smul.addr %s1392, 8
      %s1394 = scalar_lea.vmem %s8, %s1393
      // Predicated region
      $region45: #{conv_block_forward.4} parent=43 // pred_check
        %p1395 = pneg %p169
      $region46: #{conv_block_forward.4} parent=43 // pred_check_branch
        %1397 = sbr.rel (%p1395) target = $region48
      $region47: #{conv_block_forward.4} parent=43 // pred_region
        _
      $region48: #{conv_block_forward.4} parent=43 // pred_fallthru
        _
      // Predicated region
      $region49: #{conv_block_forward.4} parent=43 // pred_check
        %p1398 = pneg %p195
      $region50: #{conv_block_forward.4} parent=43 // pred_check_branch
        %1400 = sbr.rel (%p1398) target = $region52
      $region51: #{conv_block_forward.4} parent=43 // pred_region
        _
      $region52: #{conv_block_forward.4} parent=43 // pred_fallthru
        _
      // Predicated region
      $region53: #{conv_block_forward.4} parent=43 // pred_check
        %p1401 = pneg %p221
      $region54: #{conv_block_forward.4} parent=43 // pred_check_branch
        %1403 = sbr.rel (%p1401) target = $region56
      $region55: #{conv_block_forward.4} parent=43 // pred_region
        _
      $region56: #{conv_block_forward.4} parent=43 // pred_fallthru
        _
    $region44: #{conv_block_forward.4} parent=5 // pred_fallthru
      _
    %p1404 = scmp.le.s32.totalorder 2, %s15
    // Predicated region
    $region57: #{conv_block_forward.4} parent=5 // pred_check
      %p1405 = pneg %p1404
    $region58: #{conv_block_forward.4} parent=5 // pred_check_branch
      %1407 = sbr.rel (%p1405) target = $region60
    $region59: #{conv_block_forward.4} parent=5 // pred_region
      %s1408 = ssub.s32 %s15, 2
      // Predicated region
      $region61: #{conv_block_forward.4} parent=59 // pred_check
        %p1409 = pneg %p175
      $region62: #{conv_block_forward.4} parent=59 // pred_check_branch
        %1411 = sbr.rel (%p1409) target = $region64
      $region63: #{conv_block_forward.4} parent=59 // pred_region
        %p1412 = scmp.lt.s32.totalorder %s21, 1
        %s1413 = scalar_select %p1412, %s21, 1
        %s1414 = smul.addr %s1413, 3
        %s1415 = smul.addr %s1414, 4
        %s1416 = scalar_lea.vmem %s6, %s1415
      $region64: #{conv_block_forward.4} parent=59 // pred_fallthru
        _
      // Predicated region
      $region65: #{conv_block_forward.4} parent=59 // pred_check
        %p1417 = pneg %p201
      $region66: #{conv_block_forward.4} parent=59 // pred_check_branch
        %1419 = sbr.rel (%p1417) target = $region68
      $region67: #{conv_block_forward.4} parent=59 // pred_region
        %p1420 = scmp.lt.s32.totalorder %s21, 1
        %s1421 = scalar_select %p1420, %s21, 1
        %s1422 = smul.addr %s1421, 8
        %s1423 = scalar_lea.vmem %s7, %s1422
      $region68: #{conv_block_forward.4} parent=59 // pred_fallthru
        _
      // Predicated region
      $region69: #{conv_block_forward.4} parent=59 // pred_check
        %p1424 = pneg %p227
      $region70: #{conv_block_forward.4} parent=59 // pred_check_branch
        %1426 = sbr.rel (%p1424) target = $region72
      $region71: #{conv_block_forward.4} parent=59 // pred_region
        %p1427 = scmp.lt.s32.totalorder %s21, 1
        %s1428 = scalar_select %p1427, %s21, 1
        %s1429 = smul.addr %s1428, 8
        %s1430 = scalar_lea.vmem %s8, %s1429
      $region72: #{conv_block_forward.4} parent=59 // pred_fallthru
        _
    $region60: #{conv_block_forward.4} parent=5 // pred_fallthru
      _
  $region6: #{conv_block_forward.4} parent=0 // loop_footer
    %s19 = sadd.s32 1, %s15
  $region7: #{conv_block_forward.4} parent=0 // loop_footer_branch
    %14 = sbr.rel target = $region3
  $region8: #{conv_block_forward.4} parent=0 // loop_exit
    _

// kernel: conv_block_forward.3
$region0: #{conv_block_forward.3}
  #allocation0 [shape = 'u32[]', space=smem, size = 0x4, offset = 0x4, fixed_abs, tag = 'smem constant byte address 0x4 - core index']
  #allocation1 [shape = 'u32[144,128]{1,0:T(1,128)}', space=vmem, size = 0x12000, scoped, tag = 'internal scratch']
  %s0 = inlined_call_operand.vmem [shape: bf16[2,4,400], index: 0, kind: input, shape index: {}]
  %s1 = inlined_call_operand.vmem [shape: bf16[9,8,4], index: 1, kind: input, shape index: {}]
  %s2 = inlined_call_operand.vmem [shape: f32[1,362], index: 2, kind: input, shape index: {}]
  %s3 = inlined_call_operand.vmem [shape: bf16[2,8,362], index: 3, kind: output, shape index: {0}]
  %s4 = inlined_call_operand.vmem [shape: f32[2,8,1], index: 4, kind: output, shape index: {1}]
  %s5 = inlined_call_operand.vmem [shape: f32[2,8,1], index: 5, kind: output, shape index: {2}]
  %6 = xla_tuple %s3, %s4, %s5
  %s7 = sld [smem:[#allocation0]]
  $region61: #{conv_block_forward.3} parent=0
    _
  %s9 = ssub.s32 1, %s7
  %s10 = scalar_select 0, %s9, %s7
  loop: start=0, step=1, limit=4
  $region2: #{conv_block_forward.3} parent=0 // loop_pre_header
    _
  $region3: #{conv_block_forward.3} parent=0 // loop_header
    %s12 = sphi 0, %s16
    %p13 = scmp.ge.s32.totalorder %s12, 4
    %s22 = sphi 0, %s24
    %s25 = sphi 0, %s22
    %s26 = sphi 0, %s25
    %s42 = sphi 0, %s26
    %s46 = sphi 0, %s46
    %s48 = sphi 0, %s46
    %s49 = sphi 0, %s48
    %s63 = sphi 0, %s49
    %s67 = sphi 0, %s67
    %s69 = sphi 0, %s67
    %s70 = sphi 0, %s69
    %s84 = sphi 0, %s70
    %s90 = sphi 0, %s92
    %s93 = sphi 0, %s90
    %s94 = sphi 0, %s93
    %s110 = sphi 0, %s94
    %s116 = sphi 0, %s118
    %s119 = sphi 0, %s116
    %s120 = sphi 0, %s119
    %s136 = sphi 0, %s120
    %s142 = sphi 0, %s144
    %s145 = sphi 0, %s142
    %s146 = sphi 0, %s145
    %s162 = sphi 0, %s146
  $region4: #{conv_block_forward.3} parent=0 // loop_header_branch
    %15 = sbr.rel (%p13) target = $region8
  $region5: #{conv_block_forward.3} parent=0 // loop_body
    %s17 = ssub.s32 %s12, 1
    %s18 = ssub.s32 %s12, 2
    %s19 = sadd.s32 %s12, 1
    %s20 = ssub.s32 %s12, %s19
    %p21 = scmp.eq.s32.totalorder %s20, 0
    %s23 = sadd.s32 %s22, 1
    %s24 = scalar_select %p21, %s22, %s23
    %p27 = pneg %p21
    %p28 = scmp.eq.s32.totalorder %s12, 1
    %p29 = por %p27, %p28
    %p30 = scmp.ne.s32.totalorder %s22, %s25
    %p31 = scmp.eq.s32.totalorder %s12, 0
    %p32 = por %p30, %p31
    %p33 = scmp.ne.s32.totalorder %s22, %s25
    %p34 = scmp.eq.s32.totalorder %s17, 1
    %p35 = por %p33, %p34
    %p36 = scmp.ne.s32.totalorder %s25, %s26
    %p37 = scmp.eq.s32.totalorder %s17, 0
    %p38 = por %p36, %p37
    %p39 = scmp.ne.s32.totalorder %s25, %s26
    %p40 = scmp.eq.s32.totalorder %s18, 1
    %p41 = por %p39, %p40
    %p43 = scmp.ne.s32.totalorder %s26, %s42
    %p44 = scmp.eq.s32.totalorder %s18, 0
    %p45 = por %p43, %p44
    %s47 = sadd.s32 %s46, 1
    %p50 = scmp.eq.s32.totalorder %s12, 1
    %p51 = scmp.ne.s32.totalorder %s46, %s48
    %p52 = scmp.eq.s32.totalorder %s12, 0
    %p53 = por %p51, %p52
    %p54 = scmp.ne.s32.totalorder %s46, %s48
    %p55 = scmp.eq.s32.totalorder %s17, 1
    %p56 = por %p54, %p55
    %p57 = scmp.ne.s32.totalorder %s48, %s49
    %p58 = scmp.eq.s32.totalorder %s17, 0
    %p59 = por %p57, %p58
    %p60 = scmp.ne.s32.totalorder %s48, %s49
    %p61 = scmp.eq.s32.totalorder %s18, 1
    %p62 = por %p60, %p61
    %p64 = scmp.ne.s32.totalorder %s49, %s63
    %p65 = scmp.eq.s32.totalorder %s18, 0
    %p66 = por %p64, %p65
    %s68 = sadd.s32 %s67, 1
    %p71 = scmp.eq.s32.totalorder %s12, 1
    %p72 = scmp.ne.s32.totalorder %s67, %s69
    %p73 = scmp.eq.s32.totalorder %s12, 0
    %p74 = por %p72, %p73
    %p75 = scmp.ne.s32.totalorder %s67, %s69
    %p76 = scmp.eq.s32.totalorder %s17, 1
    %p77 = por %p75, %p76
    %p78 = scmp.ne.s32.totalorder %s69, %s70
    %p79 = scmp.eq.s32.totalorder %s17, 0
    %p80 = por %p78, %p79
    %p81 = scmp.ne.s32.totalorder %s69, %s70
    %p82 = scmp.eq.s32.totalorder %s18, 1
    %p83 = por %p81, %p82
    %p85 = scmp.ne.s32.totalorder %s70, %s84
    %p86 = scmp.eq.s32.totalorder %s18, 0
    %p87 = por %p85, %p86
    %s88 = ssub.s32 %s12, %s19
    %p89 = scmp.eq.s32.totalorder %s88, 0
    %s91 = sadd.s32 %s90, 1
    %s92 = scalar_select %p89, %s90, %s91
    %p95 = pneg %p89
    %p96 = scmp.eq.s32.totalorder %s12, 1
    %p97 = por %p95, %p96
    %p98 = scmp.ne.s32.totalorder %s90, %s93
    %p99 = scmp.eq.s32.totalorder %s12, 0
    %p100 = por %p98, %p99
    %p101 = scmp.ne.s32.totalorder %s90, %s93
    %p102 = scmp.eq.s32.totalorder %s17, 1
    %p103 = por %p101, %p102
    %p104 = scmp.ne.s32.totalorder %s93, %s94
    %p105 = scmp.eq.s32.totalorder %s17, 0
    %p106 = por %p104, %p105
    %p107 = scmp.ne.s32.totalorder %s93, %s94
    %p108 = scmp.eq.s32.totalorder %s18, 1
    %p109 = por %p107, %p108
    %p111 = scmp.ne.s32.totalorder %s94, %s110
    %p112 = scmp.eq.s32.totalorder %s18, 0
    %p113 = por %p111, %p112
    %s114 = ssub.s32 %s12, %s19
    %p115 = scmp.eq.s32.totalorder %s114, 0
    %s117 = sadd.s32 %s116, 1
    %s118 = scalar_select %p115, %s116, %s117
    %p121 = pneg %p115
    %p122 = scmp.eq.s32.totalorder %s12, 1
    %p123 = por %p121, %p122
    %p124 = scmp.ne.s32.totalorder %s116, %s119
    %p125 = scmp.eq.s32.totalorder %s12, 0
    %p126 = por %p124, %p125
    %p127 = scmp.ne.s32.totalorder %s116, %s119
    %p128 = scmp.eq.s32.totalorder %s17, 1
    %p129 = por %p127, %p128
    %p130 = scmp.ne.s32.totalorder %s119, %s120
    %p131 = scmp.eq.s32.totalorder %s17, 0
    %p132 = por %p130, %p131
    %p133 = scmp.ne.s32.totalorder %s119, %s120
    %p134 = scmp.eq.s32.totalorder %s18, 1
    %p135 = por %p133, %p134
    %p137 = scmp.ne.s32.totalorder %s120, %s136
    %p138 = scmp.eq.s32.totalorder %s18, 0
    %p139 = por %p137, %p138
    %s140 = ssub.s32 %s12, %s19
    %p141 = scmp.eq.s32.totalorder %s140, 0
    %s143 = sadd.s32 %s142, 1
    %s144 = scalar_select %p141, %s142, %s143
    %p147 = pneg %p141
    %p148 = scmp.eq.s32.totalorder %s12, 1
    %p149 = por %p147, %p148
    %p150 = scmp.ne.s32.totalorder %s142, %s145
    %p151 = scmp.eq.s32.totalorder %s12, 0
    %p152 = por %p150, %p151
    %p153 = scmp.ne.s32.totalorder %s142, %s145
    %p154 = scmp.eq.s32.totalorder %s17, 1
    %p155 = por %p153, %p154
    %p156 = scmp.ne.s32.totalorder %s145, %s146
    %p157 = scmp.eq.s32.totalorder %s17, 0
    %p158 = por %p156, %p157
    %p159 = scmp.ne.s32.totalorder %s145, %s146
    %p160 = scmp.eq.s32.totalorder %s18, 1
    %p161 = por %p159, %p160
    %p163 = scmp.ne.s32.totalorder %s146, %s162
    %p164 = scmp.eq.s32.totalorder %s18, 0
    %p165 = por %p163, %p164
    %p166 = scmp.le.s32.totalorder 1, %s12
    %p167 = scmp.lt.s32.totalorder %s12, 3
    %p168 = pnand %p166, %p167
    %p169 = pneg %p168
    // Predicated region
    $region9: #{conv_block_forward.3} parent=5 // pred_check
      _
    $region10: #{conv_block_forward.3} parent=5 // pred_check_branch
      %171 = sbr.rel (%p168) target = $region12
    $region11: #{conv_block_forward.3} parent=5 // pred_region
      %s172 = ssub.s32 %s12, 1
      // Predicated region
      $region13: #{conv_block_forward.3} parent=11 // pred_check
        %p173 = pneg %p59
      $region14: #{conv_block_forward.3} parent=11 // pred_check_branch
        %175 = sbr.rel (%p173) target = $region16
      $region15: #{conv_block_forward.3} parent=11 // pred_region
        _
      $region16: #{conv_block_forward.3} parent=11 // pred_fallthru
        _
      // Predicated region
      $region17: #{conv_block_forward.3} parent=11 // pred_check
        %p176 = pneg %p80
      $region18: #{conv_block_forward.3} parent=11 // pred_check_branch
        %178 = sbr.rel (%p176) target = $region20
      $region19: #{conv_block_forward.3} parent=11 // pred_region
        _
      $region20: #{conv_block_forward.3} parent=11 // pred_fallthru
        _
    $region12: #{conv_block_forward.3} parent=5 // pred_fallthru
      _
    %p179 = scmp.lt.s32.totalorder %s12, 2
    // Predicated region
    $region21: #{conv_block_forward.3} parent=5 // pred_check
      %p180 = pneg %p179
    $region22: #{conv_block_forward.3} parent=5 // pred_check_branch
      %182 = sbr.rel (%p180) target = $region24
    $region23: #{conv_block_forward.3} parent=5 // pred_region
      // Predicated region
      $region25: #{conv_block_forward.3} parent=23 // pred_check
        %p183 = pneg %p32
      $region26: #{conv_block_forward.3} parent=23 // pred_check_branch
        %185 = sbr.rel (%p183) target = $region28
      $region27: #{conv_block_forward.3} parent=23 // pred_region
        %p186 = scmp.lt.s32.totalorder %s12, 1
        %s187 = scalar_select %p186, %s12, 1
        %s188 = smul.addr %s187, 4
        %s189 = smul.addr %s188, 2
        %s190 = scalar_lea.vmem %s0, %s189
      $region28: #{conv_block_forward.3} parent=23 // pred_fallthru
        _
    $region24: #{conv_block_forward.3} parent=5 // pred_fallthru
      _
    %p191 = scmp.le.s32.totalorder 1, %s12
    %p192 = scmp.lt.s32.totalorder %s12, 3
    %p193 = pnand %p191, %p192
    %p194 = pneg %p193
    // Predicated region
    $region29: #{conv_block_forward.3} parent=5 // pred_check
      _
    $region30: #{conv_block_forward.3} parent=5 // pred_check_branch
      %196 = sbr.rel (%p193) target = $region32
    $region31: #{conv_block_forward.3} parent=5 // pred_region
      %s197 = ssub.s32 %s12, 1
      %p198 = scmp.lt.s32.totalorder %s17, 1
      %s199 = scalar_select %p198, %s17, 1
      %s200 = smul.addr %s199, 4
      %s201 = smul.addr %s200, 2
      %s202 = scalar_lea.vmem %s0, %s201
      %p203 = pneg %p38
      %p204 = pneg %p35
      %p205 = pneg %p59
      %p206 = pneg %p56
      %p207 = pneg %p80
      %p208 = pneg %p77
      %p209 = pneg %p106
      %p210 = pneg %p103
      %p211 = scmp.lt.s32.totalorder %s17, 1
      %s212 = scalar_select %p211, %s17, 1
      %s213 = smul.addr %s212, 3
      %s214 = smul.addr %s213, 4
      %s215 = scalar_lea.vmem %s3, %s214
      %p216 = pneg %p132
      %p217 = pneg %p129
      %p218 = scmp.lt.s32.totalorder %s17, 1
      %s219 = scalar_select %p218, %s17, 1
      %s220 = smul.addr %s219, 8
      %s221 = scalar_lea.vmem %s4, %s220
      %p222 = pneg %p158
      %p223 = pneg %p155
      %p224 = scmp.lt.s32.totalorder %s17, 1
      %s225 = scalar_select %p224, %s17, 1
      %s226 = smul.addr %s225, 8
      %s227 = scalar_lea.vmem %s5, %s226
      %p228 = scmp.lt.s32.totalorder %s17, 1
      %s229 = scalar_select %p228, %s17, 1
      %s230 = smul.addr %s229, 4
      %s231 = smul.addr %s230, 2
      %s232 = scalar_lea.vmem %s0, %s231
      %p233 = scmp.lt.s32.totalorder %s17, 1
      %s234 = scalar_select %p233, %s17, 1
      %s235 = smul.addr %s234, 3
      %s236 = smul.addr %s235, 4
      %s237 = scalar_lea.vmem %s3, %s236
      %p238 = scmp.lt.s32.totalorder %s17, 1
      %s239 = scalar_select %p238, %s17, 1
      %s240 = smul.addr %s239, 8
      %s241 = scalar_lea.vmem %s4, %s240
      %p242 = scmp.lt.s32.totalorder %s17, 1
      %s243 = scalar_select %p242, %s17, 1
      %s244 = smul.addr %s243, 8
      %s245 = scalar_lea.vmem %s5, %s244
      %v247 = vld [vmem:[%s232] sm:$0xff]
      %v248 = vld [vmem:[%s1] sm:$0xf]
      %s249 = scalar_lea.vmem %s1, 4
      %v250 = vld [vmem:[%s249] sm:$0xf]
      %v252 = vcombine.high %v247, %v247
      %v254 = vunpack.c.l.s4 1983009808
      %v255 = vunpack.c.0.s8 %v254
      %v256 = vlaneseq
      %v257 = vshrl.u32 %v256, 7
      %v258 = vsub.s32 %v255, %v257
      %v259 = vrot.slane %v247, %v258
      %v261 = vunpack.c.l.s4 1983009808
      %v262 = vunpack.c.0.s8 %v261
      %v263 = vlaneseq
      %v264 = vshrl.u32 %v263, 7
      %v265 = vsub.s32 %v262, %v264
      %v266 = vrot.slane %v252, %v265
      %v267 = vcombine.high %v259, %v259
      %268 = vrot.lane.b32.xlu0 %v259, 127
      %v269 = vpop.permute.xlu0 %268
      %270 = vrot.lane.b32.xlu0 %v267, 127
      %v271 = vpop.permute.xlu0 %270
      %272 = vrot.lane.b32.xlu0 %v266, 127
      %v273 = vpop.permute.xlu0 %272
      %vm274 = vcmask 1039360
      %v275 = vsel %vm274, %v269, %v271
      %v276 = vsel %vm274, %v271, %v273
      %vm277 = vcmask 31744
      %v279 = vsel %vm277, %v250, 0
      %vm281 = vcmask 1041408
      %v283 = vsel %vm281, %v275, 0
      %v286 = vsel %vm281, %v276, 0
      %v289 = vsel %vm281, %v273, 0
      %291 = vmatprep.subr.bf16.mxu0 %v286
      %292 = vmatpush1.bf16.msra.mxu0 %v283
      %293 = vmatprep.subr.bf16.mxu0 0
      %294 = vmatpush1.bf16.msra.mxu0 0
      %295 = vmatprep.subr.bf16.mxu0 0
      %296 = vmatpush1.bf16.msra.mxu0 0
      %297 = vmatprep.subr.bf16.mxu0 0
      %298 = vmatpush1.bf16.msra.mxu0 0
      %299 = vmatprep.subr.bf16.mxu0 0
      %300 = vmatpush1.bf16.msra.mxu0 0
      %301 = vmatprep.subr.bf16.mxu0 0
      %302 = vmatpush1.bf16.msra.mxu0 0
      %303 = vmatprep.subr.bf16.mxu0 0
      %304 = vmatpush1.bf16.msra.mxu0 0
      %305 = vmatprep.subr.bf16.mxu0 0
      %306 = vmatpush1.bf16.msra.mxu0 0
      %307 = vmatprep.subr.bf16.mxu0 0
      %308 = vmatpush1.bf16.msra.mxu0 0
      %309 = vmatprep.subr.bf16.mxu0 0
      %310 = vmatpush1.bf16.msra.mxu0 0
      %311 = vmatprep.subr.bf16.mxu0 0
      %312 = vmatpush1.bf16.msra.mxu0 0
      %313 = vmatprep.subr.bf16.mxu0 0
      %314 = vmatpush1.bf16.msra.mxu0 0
      %315 = vmatprep.subr.bf16.mxu0 0
      %316 = vmatpush1.bf16.msra.mxu0 0
      %317 = vmatprep.subr.bf16.mxu0 0
      %318 = vmatpush1.bf16.msra.mxu0 0
      %319 = vmatprep.subr.bf16.mxu0 0
      %320 = vmatpush1.bf16.msra.mxu0 0
      %321 = vmatprep.subr.bf16.mxu0 0
      %322 = vmatpush1.bf16.msra.mxu0 0
      %323 = vmatprep.mubr.bf16.mxu0 0
      %324 = vmatmul.mubr.bf16.gmra.mrb[0].mxu0 %v279
      %v325 = vpop.f32.mrb[0].mxu0
      %v326 = vadd.f32 0.0, %v325
      %v327 = vpop.f32.mrb[0].mxu0
      %v328 = vadd.f32 0.0, %v327
      %v329 = vpop.f32.mrb[0].mxu0
      %v330 = vpop.f32.mrb[0].mxu0
      %331 = vdwg.mxu0
      %332 = vmatprep.subr.bf16.mxu0 0
      %333 = vmatpush1.bf16.msra.mxu0 %v289
      %334 = vmatprep.subr.bf16.mxu0 0
      %335 = vmatpush1.bf16.msra.mxu0 0
      %336 = vmatprep.subr.bf16.mxu0 0
      %337 = vmatpush1.bf16.msra.mxu0 0
      %338 = vmatprep.subr.bf16.mxu0 0
      %339 = vmatpush1.bf16.msra.mxu0 0
      %340 = vmatprep.subr.bf16.mxu0 0
      %341 = vmatpush1.bf16.msra.mxu0 0
      %342 = vmatprep.subr.bf16.mxu0 0
      %343 = vmatpush1.bf16.msra.mxu0 0
      %344 = vmatprep.subr.bf16.mxu0 0
      %345 = vmatpush1.bf16.msra.mxu0 0
      %346 = vmatprep.subr.bf16.mxu0 0
      %347 = vmatpush1.bf16.msra.mxu0 0
      %348 = vmatprep.subr.bf16.mxu0 0
      %349 = vmatpush1.bf16.msra.mxu0 0
      %350 = vmatprep.subr.bf16.mxu0 0
      %351 = vmatpush1.bf16.msra.mxu0 0
      %352 = vmatprep.subr.bf16.mxu0 0
      %353 = vmatpush1.bf16.msra.mxu0 0
      %354 = vmatprep.subr.bf16.mxu0 0
      %355 = vmatpush1.bf16.msra.mxu0 0
      %356 = vmatprep.subr.bf16.mxu0 0
      %357 = vmatpush1.bf16.msra.mxu0 0
      %358 = vmatprep.subr.bf16.mxu0 0
      %359 = vmatpush1.bf16.msra.mxu0 0
      %360 = vmatprep.subr.bf16.mxu0 0
      %361 = vmatpush1.bf16.msra.mxu0 0
      %362 = vmatprep.subr.bf16.mxu0 0
      %363 = vmatpush1.bf16.msra.mxu0 0
      %364 = vmatprep.mubr.bf16.mxu0 0
      %365 = vmatmul.mubr.bf16.gmra.mrb[0].mxu0 %v279
      %v366 = vpop.f32.mrb[0].mxu0
      %v367 = vadd.f32 0.0, %v366
      %v368 = vpop.f32.mrb[0].mxu0
      %v369 = vpop.f32.mrb[0].mxu0
      %v370 = vpop.f32.mrb[0].mxu0
      %371 = vdwg.mxu0
      %v373 = vsel %vm277, %v248, 0
      %v376 = vsel %vm281, %v259, 0
      %v379 = vsel %vm281, %v267, 0
      %v382 = vsel %vm281, %v266, 0
      %384 = vmatprep.subr.bf16.mxu0 %v379
      %385 = vmatpush1.bf16.msra.mxu0 %v376
      %386 = vmatprep.subr.bf16.mxu0 0
      %387 = vmatpush1.bf16.msra.mxu0 0
      %388 = vmatprep.subr.bf16.mxu0 0
      %389 = vmatpush1.bf16.msra.mxu0 0
      %390 = vmatprep.subr.bf16.mxu0 0
      %391 = vmatpush1.bf16.msra.mxu0 0
      %392 = vmatprep.subr.bf16.mxu0 0
      %393 = vmatpush1.bf16.msra.mxu0 0
      %394 = vmatprep.subr.bf16.mxu0 0
      %395 = vmatpush1.bf16.msra.mxu0 0
      %396 = vmatprep.subr.bf16.mxu0 0
      %397 = vmatpush1.bf16.msra.mxu0 0
      %398 = vmatprep.subr.bf16.mxu0 0
      %399 = vmatpush1.bf16.msra.mxu0 0
      %400 = vmatprep.subr.bf16.mxu0 0
      %401 = vmatpush1.bf16.msra.mxu0 0
      %402 = vmatprep.subr.bf16.mxu0 0
      %403 = vmatpush1.bf16.msra.mxu0 0
      %404 = vmatprep.subr.bf16.mxu0 0
      %405 = vmatpush1.bf16.msra.mxu0 0
      %406 = vmatprep.subr.bf16.mxu0 0
      %407 = vmatpush1.bf16.msra.mxu0 0
      %408 = vmatprep.subr.bf16.mxu0 0
      %409 = vmatpush1.bf16.msra.mxu0 0
      %410 = vmatprep.subr.bf16.mxu0 0
      %411 = vmatpush1.bf16.msra.mxu0 0
      %412 = vmatprep.subr.bf16.mxu0 0
      %413 = vmatpush1.bf16.msra.mxu0 0
      %414 = vmatprep.subr.bf16.mxu0 0
      %415 = vmatpush1.bf16.msra.mxu0 0
      %416 = vmatprep.mubr.bf16.mxu0 0
      %417 = vmatmul.mubr.bf16.gmra.mrb[0].mxu0 %v373
      %v418 = vpop.f32.mrb[0].mxu0
      %v419 = vadd.f32 %v326, %v418
      %v420 = vpop.f32.mrb[0].mxu0
      %v421 = vadd.f32 %v328, %v420
      %v422 = vpop.f32.mrb[0].mxu0
      %v423 = vpop.f32.mrb[0].mxu0
      %424 = vdwg.mxu0
      %425 = vmatprep.subr.bf16.mxu0 0
      %426 = vmatpush1.bf16.msra.mxu0 %v382
      %427 = vmatprep.subr.bf16.mxu0 0
      %428 = vmatpush1.bf16.msra.mxu0 0
      %429 = vmatprep.subr.bf16.mxu0 0
      %430 = vmatpush1.bf16.msra.mxu0 0
      %431 = vmatprep.subr.bf16.mxu0 0
      %432 = vmatpush1.bf16.msra.mxu0 0
      %433 = vmatprep.subr.bf16.mxu0 0
      %434 = vmatpush1.bf16.msra.mxu0 0
      %435 = vmatprep.subr.bf16.mxu0 0
      %436 = vmatpush1.bf16.msra.mxu0 0
      %437 = vmatprep.subr.bf16.mxu0 0
      %438 = vmatpush1.bf16.msra.mxu0 0
      %439 = vmatprep.subr.bf16.mxu0 0
      %440 = vmatpush1.bf16.msra.mxu0 0
      %441 = vmatprep.subr.bf16.mxu0 0
      %442 = vmatpush1.bf16.msra.mxu0 0
      %443 = vmatprep.subr.bf16.mxu0 0
      %444 = vmatpush1.bf16.msra.mxu0 0
      %445 = vmatprep.subr.bf16.mxu0 0
      %446 = vmatpush1.bf16.msra.mxu0 0
      %447 = vmatprep.subr.bf16.mxu0 0
      %448 = vmatpush1.bf16.msra.mxu0 0
      %449 = vmatprep.subr.bf16.mxu0 0
      %450 = vmatpush1.bf16.msra.mxu0 0
      %451 = vmatprep.subr.bf16.mxu0 0
      %452 = vmatpush1.bf16.msra.mxu0 0
      %453 = vmatprep.subr.bf16.mxu0 0
      %454 = vmatpush1.bf16.msra.mxu0 0
      %455 = vmatprep.subr.bf16.mxu0 0
      %456 = vmatpush1.bf16.msra.mxu0 0
      %457 = vmatprep.mubr.bf16.mxu0 0
      %458 = vmatmul.mubr.bf16.gmra.mrb[0].mxu0 %v373
      %v459 = vpop.f32.mrb[0].mxu0
      %v460 = vadd.f32 %v367, %v459
      %v461 = vpop.f32.mrb[0].mxu0
      %v462 = vpop.f32.mrb[0].mxu0
      %v463 = vpop.f32.mrb[0].mxu0
      %464 = vdwg.mxu0
      %s465 = scalar_lea.vmem %s1, 8
      %v466 = vld [vmem:[%s465] sm:$0xf]
      %467 = vrot.lane.b32.xlu0 %v259, 126
      %v468 = vpop.permute.xlu0 %467
      %469 = vrot.lane.b32.xlu0 %v267, 126
      %v470 = vpop.permute.xlu0 %469
      %471 = vrot.lane.b32.xlu0 %v266, 126
      %v472 = vpop.permute.xlu0 %471
      %vm473 = vcmask 1031168
      %v474 = vsel %vm473, %v468, %v470
      %v475 = vsel %vm473, %v470, %v472
      %v477 = vsel %vm277, %v466, 0
      %v480 = vsel %vm281, %v474, 0
      %v483 = vsel %vm281, %v475, 0
      %v486 = vsel %vm281, %v472, 0
      %488 = vmatprep.subr.bf16.mxu0 %v483
      %489 = vmatpush1.bf16.msra.mxu0 %v480
      %490 = vmatprep.subr.bf16.mxu0 0
      %491 = vmatpush1.bf16.msra.mxu0 0
      %492 = vmatprep.subr.bf16.mxu0 0
      %493 = vmatpush1.bf16.msra.mxu0 0
      %494 = vmatprep.subr.bf16.mxu0 0
      %495 = vmatpush1.bf16.msra.mxu0 0
      %496 = vmatprep.subr.bf16.mxu0 0
      %497 = vmatpush1.bf16.msra.mxu0 0
      %498 = vmatprep.subr.bf16.mxu0 0
      %499 = vmatpush1.bf16.msra.mxu0 0
      %500 = vmatprep.subr.bf16.mxu0 0
      %501 = vmatpush1.bf16.msra.mxu0 0
      %502 = vmatprep.subr.bf16.mxu0 0
      %503 = vmatpush1.bf16.msra.mxu0 0
      %504 = vmatprep.subr.bf16.mxu0 0
      %505 = vmatpush1.bf16.msra.mxu0 0
      %506 = vmatprep.subr.bf16.mxu0 0
      %507 = vmatpush1.bf16.msra.mxu0 0
      %508 = vmatprep.subr.bf16.mxu0 0
      %509 = vmatpush1.bf16.msra.mxu0 0
      %510 = vmatprep.subr.bf16.mxu0 0
      %511 = vmatpush1.bf16.msra.mxu0 0
      %512 = vmatprep.subr.bf16.mxu0 0
      %513 = vmatpush1.bf16.msra.mxu0 0
      %514 = vmatprep.subr.bf16.mxu0 0
      %515 = vmatpush1.bf16.msra.mxu0 0
      %516 = vmatprep.subr.bf16.mxu0 0
      %517 = vmatpush1.bf16.msra.mxu0 0
      %518 = vmatprep.subr.bf16.mxu0 0
      %519 = vmatpush1.bf16.msra.mxu0 0
      %520 = vmatprep.mubr.bf16.mxu0 0
      %521 = vmatmul.mubr.bf16.gmra.mrb[0].mxu0 %v477
      %v522 = vpop.f32.mrb[0].mxu0
      %v523 = vadd.f32 0.0, %v522
      %v524 = vpop.f32.mrb[0].mxu0
      %v525 = vadd.f32 0.0, %v524
      %v526 = vpop.f32.mrb[0].mxu0
      %v527 = vpop.f32.mrb[0].mxu0
      %528 = vdwg.mxu0
      %529 = vmatprep.subr.bf16.mxu0 0
      %530 = vmatpush1.bf16.msra.mxu0 %v486
      %531 = vmatprep.subr.bf16.mxu0 0
      %532 = vmatpush1.bf16.msra.mxu0 0
      %533 = vmatprep.subr.bf16.mxu0 0
      %534 = vmatpush1.bf16.msra.mxu0 0
      %535 = vmatprep.subr.bf16.mxu0 0
      %536 = vmatpush1.bf16.msra.mxu0 0
      %537 = vmatprep.subr.bf16.mxu0 0
      %538 = vmatpush1.bf16.msra.mxu0 0
      %539 = vmatprep.subr.bf16.mxu0 0
      %540 = vmatpush1.bf16.msra.mxu0 0
      %541 = vmatprep.subr.bf16.mxu0 0
      %542 = vmatpush1.bf16.msra.mxu0 0
      %543 = vmatprep.subr.bf16.mxu0 0
      %544 = vmatpush1.bf16.msra.mxu0 0
      %545 = vmatprep.subr.bf16.mxu0 0
      %546 = vmatpush1.bf16.msra.mxu0 0
      %547 = vmatprep.subr.bf16.mxu0 0
      %548 = vmatpush1.bf16.msra.mxu0 0
      %549 = vmatprep.subr.bf16.mxu0 0
      %550 = vmatpush1.bf16.msra.mxu0 0
      %551 = vmatprep.subr.bf16.mxu0 0
      %552 = vmatpush1.bf16.msra.mxu0 0
      %553 = vmatprep.subr.bf16.mxu0 0
      %554 = vmatpush1.bf16.msra.mxu0 0
      %555 = vmatprep.subr.bf16.mxu0 0
      %556 = vmatpush1.bf16.msra.mxu0 0
      %557 = vmatprep.subr.bf16.mxu0 0
      %558 = vmatpush1.bf16.msra.mxu0 0
      %559 = vmatprep.subr.bf16.mxu0 0
      %560 = vmatpush1.bf16.msra.mxu0 0
      %561 = vmatprep.mubr.bf16.mxu0 0
      %562 = vmatmul.mubr.bf16.gmra.mrb[0].mxu0 %v477
      %v563 = vpop.f32.mrb[0].mxu0
      %v564 = vadd.f32 0.0, %v563
      %v565 = vpop.f32.mrb[0].mxu0
      %v566 = vpop.f32.mrb[0].mxu0
      %v567 = vpop.f32.mrb[0].mxu0
      %568 = vdwg.mxu0
      %v569 = vadd.f32 %v419, %v523
      %v570 = vadd.f32 %v421, %v525
      %v571 = vadd.f32 %v460, %v564
      %s572 = scalar_lea.vmem %s1, 12
      %v573 = vld [vmem:[%s572] sm:$0xf]
      %574 = vrot.lane.b32.xlu0 %v259, 110
      %v575 = vpop.permute.xlu0 %574
      %576 = vrot.lane.b32.xlu0 %v267, 110
      %v577 = vpop.permute.xlu0 %576
      %578 = vrot.lane.b32.xlu0 %v266, 110
      %v579 = vpop.permute.xlu0 %578
      %vm580 = vcmask 900096
      %v581 = vsel %vm580, %v575, %v577
      %v582 = vsel %vm580, %v577, %v579
      %v584 = vsel %vm277, %v573, 0
      %v587 = vsel %vm281, %v581, 0
      %v590 = vsel %vm281, %v582, 0
      %v593 = vsel %vm281, %v579, 0
      %595 = vmatprep.subr.bf16.mxu0 %v590
      %596 = vmatpush1.bf16.msra.mxu0 %v587
      %597 = vmatprep.subr.bf16.mxu0 0
      %598 = vmatpush1.bf16.msra.mxu0 0
      %599 = vmatprep.subr.bf16.mxu0 0
      %600 = vmatpush1.bf16.msra.mxu0 0
      %601 = vmatprep.subr.bf16.mxu0 0
      %602 = vmatpush1.bf16.msra.mxu0 0
      %603 = vmatprep.subr.bf16.mxu0 0
      %604 = vmatpush1.bf16.msra.mxu0 0
      %605 = vmatprep.subr.bf16.mxu0 0
      %606 = vmatpush1.bf16.msra.mxu0 0
      %607 = vmatprep.subr.bf16.mxu0 0
      %608 = vmatpush1.bf16.msra.mxu0 0
      %609 = vmatprep.subr.bf16.mxu0 0
      %610 = vmatpush1.bf16.msra.mxu0 0
      %611 = vmatprep.subr.bf16.mxu0 0
      %612 = vmatpush1.bf16.msra.mxu0 0
      %613 = vmatprep.subr.bf16.mxu0 0
      %614 = vmatpush1.bf16.msra.mxu0 0
      %615 = vmatprep.subr.bf16.mxu0 0
      %616 = vmatpush1.bf16.msra.mxu0 0
      %617 = vmatprep.subr.bf16.mxu0 0
      %618 = vmatpush1.bf16.msra.mxu0 0
      %619 = vmatprep.subr.bf16.mxu0 0
      %620 = vmatpush1.bf16.msra.mxu0 0
      %621 = vmatprep.subr.bf16.mxu0 0
      %622 = vmatpush1.bf16.msra.mxu0 0
      %623 = vmatprep.subr.bf16.mxu0 0
      %624 = vmatpush1.bf16.msra.mxu0 0
      %625 = vmatprep.subr.bf16.mxu0 0
      %626 = vmatpush1.bf16.msra.mxu0 0
      %627 = vmatprep.mubr.bf16.mxu0 0
      %628 = vmatmul.mubr.bf16.gmra.mrb[0].mxu0 %v584
      %v629 = vpop.f32.mrb[0].mxu0
      %v630 = vadd.f32 0.0, %v629
      %v631 = vpop.f32.mrb[0].mxu0
      %v632 = vadd.f32 0.0, %v631
      %v633 = vpop.f32.mrb[0].mxu0
      %v634 = vpop.f32.mrb[0].mxu0
      %635 = vdwg.mxu0
      %636 = vmatprep.subr.bf16.mxu0 0
      %637 = vmatpush1.bf16.msra.mxu0 %v593
      %638 = vmatprep.subr.bf16.mxu0 0
      %639 = vmatpush1.bf16.msra.mxu0 0
      %640 = vmatprep.subr.bf16.mxu0 0
      %641 = vmatpush1.bf16.msra.mxu0 0
      %642 = vmatprep.subr.bf16.mxu0 0
      %643 = vmatpush1.bf16.msra.mxu0 0
      %644 = vmatprep.subr.bf16.mxu0 0
      %645 = vmatpush1.bf16.msra.mxu0 0
      %646 = vmatprep.subr.bf16.mxu0 0
      %647 = vmatpush1.bf16.msra.mxu0 0
      %648 = vmatprep.subr.bf16.mxu0 0
      %649 = vmatpush1.bf16.msra.mxu0 0
      %650 = vmatprep.subr.bf16.mxu0 0
      %651 = vmatpush1.bf16.msra.mxu0 0
      %652 = vmatprep.subr.bf16.mxu0 0
      %653 = vmatpush1.bf16.msra.mxu0 0
      %654 = vmatprep.subr.bf16.mxu0 0
      %655 = vmatpush1.bf16.msra.mxu0 0
      %656 = vmatprep.subr.bf16.mxu0 0
      %657 = vmatpush1.bf16.msra.mxu0 0
      %658 = vmatprep.subr.bf16.mxu0 0
      %659 = vmatpush1.bf16.msra.mxu0 0
      %660 = vmatprep.subr.bf16.mxu0 0
      %661 = vmatpush1.bf16.msra.mxu0 0
      %662 = vmatprep.subr.bf16.mxu0 0
      %663 = vmatpush1.bf16.msra.mxu0 0
      %664 = vmatprep.subr.bf16.mxu0 0
      %665 = vmatpush1.bf16.msra.mxu0 0
      %666 = vmatprep.subr.bf16.mxu0 0
      %667 = vmatpush1.bf16.msra.mxu0 0
      %668 = vmatprep.mubr.bf16.mxu0 0
      %669 = vmatmul.mubr.bf16.gmra.mrb[0].mxu0 %v584
      %v670 = vpop.f32.mrb[0].mxu0
      %v671 = vadd.f32 0.0, %v670
      %v672 = vpop.f32.mrb[0].mxu0
      %v673 = vpop.f32.mrb[0].mxu0
      %v674 = vpop.f32.mrb[0].mxu0
      %675 = vdwg.mxu0
      %v676 = vadd.f32 %v569, %v630
      %v677 = vadd.f32 %v570, %v632
      %v678 = vadd.f32 %v571, %v671
      %s679 = scalar_lea.vmem %s1, 16
      %v680 = vld [vmem:[%s679] sm:$0xf]
      %681 = vrot.lane.b32.xlu0 %v259, 109
      %v682 = vpop.permute.xlu0 %681
      %683 = vrot.lane.b32.xlu0 %v267, 109
      %v684 = vpop.permute.xlu0 %683
      %685 = vrot.lane.b32.xlu0 %v266, 109
      %v686 = vpop.permute.xlu0 %685
      %vm687 = vcmask 891904
      %v688 = vsel %vm687, %v682, %v684
      %v689 = vsel %vm687, %v684, %v686
      %v691 = vsel %vm277, %v680, 0
      %v694 = vsel %vm281, %v688, 0
      %v697 = vsel %vm281, %v689, 0
      %v700 = vsel %vm281, %v686, 0
      %702 = vmatprep.subr.bf16.mxu0 %v697
      %703 = vmatpush1.bf16.msra.mxu0 %v694
      %704 = vmatprep.subr.bf16.mxu0 0
      %705 = vmatpush1.bf16.msra.mxu0 0
      %706 = vmatprep.subr.bf16.mxu0 0
      %707 = vmatpush1.bf16.msra.mxu0 0
      %708 = vmatprep.subr.bf16.mxu0 0
      %709 = vmatpush1.bf16.msra.mxu0 0
      %710 = vmatprep.subr.bf16.mxu0 0
      %711 = vmatpush1.bf16.msra.mxu0 0
      %712 = vmatprep.subr.bf16.mxu0 0
      %713 = vmatpush1.bf16.msra.mxu0 0
      %714 = vmatprep.subr.bf16.mxu0 0
      %715 = vmatpush1.bf16.msra.mxu0 0
      %716 = vmatprep.subr.bf16.mxu0 0
      %717 = vmatpush1.bf16.msra.mxu0 0
      %718 = vmatprep.subr.bf16.mxu0 0
      %719 = vmatpush1.bf16.msra.mxu0 0
      %720 = vmatprep.subr.bf16.mxu0 0
      %721 = vmatpush1.bf16.msra.mxu0 0
      %722 = vmatprep.subr.bf16.mxu0 0
      %723 = vmatpush1.bf16.msra.mxu0 0
      %724 = vmatprep.subr.bf16.mxu0 0
      %725 = vmatpush1.bf16.msra.mxu0 0
      %726 = vmatprep.subr.bf16.mxu0 0
      %727 = vmatpush1.bf16.msra.mxu0 0
      %728 = vmatprep.subr.bf16.mxu0 0
      %729 = vmatpush1.bf16.msra.mxu0 0
      %730 = vmatprep.subr.bf16.mxu0 0
      %731 = vmatpush1.bf16.msra.mxu0 0
      %732 = vmatprep.subr.bf16.mxu0 0
      %733 = vmatpush1.bf16.msra.mxu0 0
      %734 = vmatprep.mubr.bf16.mxu0 0
      %735 = vmatmul.mubr.bf16.gmra.mrb[0].mxu0 %v691
      %v736 = vpop.f32.mrb[0].mxu0
      %v737 = vadd.f32 0.0, %v736
      %v738 = vpop.f32.mrb[0].mxu0
      %v739 = vadd.f32 0.0, %v738
      %v740 = vpop.f32.mrb[0].mxu0
      %v741 = vpop.f32.mrb[0].mxu0
      %742 = vdwg.mxu0
      %743 = vmatprep.subr.bf16.mxu0 0
      %744 = vmatpush1.bf16.msra.mxu0 %v700
      %745 = vmatprep.subr.bf16.mxu0 0
      %746 = vmatpush1.bf16.msra.mxu0 0
      %747 = vmatprep.subr.bf16.mxu0 0
      %748 = vmatpush1.bf16.msra.mxu0 0
      %749 = vmatprep.subr.bf16.mxu0 0
      %750 = vmatpush1.bf16.msra.mxu0 0
      %751 = vmatprep.subr.bf16.mxu0 0
      %752 = vmatpush1.bf16.msra.mxu0 0
      %753 = vmatprep.subr.bf16.mxu0 0
      %754 = vmatpush1.bf16.msra.mxu0 0
      %755 = vmatprep.subr.bf16.mxu0 0
      %756 = vmatpush1.bf16.msra.mxu0 0
      %757 = vmatprep.subr.bf16.mxu0 0
      %758 = vmatpush1.bf16.msra.mxu0 0
      %759 = vmatprep.subr.bf16.mxu0 0
      %760 = vmatpush1.bf16.msra.mxu0 0
      %761 = vmatprep.subr.bf16.mxu0 0
      %762 = vmatpush1.bf16.msra.mxu0 0
      %763 = vmatprep.subr.bf16.mxu0 0
      %764 = vmatpush1.bf16.msra.mxu0 0
      %765 = vmatprep.subr.bf16.mxu0 0
      %766 = vmatpush1.bf16.msra.mxu0 0
      %767 = vmatprep.subr.bf16.mxu0 0
      %768 = vmatpush1.bf16.msra.mxu0 0
      %769 = vmatprep.subr.bf16.mxu0 0
      %770 = vmatpush1.bf16.msra.mxu0 0
      %771 = vmatprep.subr.bf16.mxu0 0
      %772 = vmatpush1.bf16.msra.mxu0 0
      %773 = vmatprep.subr.bf16.mxu0 0
      %774 = vmatpush1.bf16.msra.mxu0 0
      %775 = vmatprep.mubr.bf16.mxu0 0
      %776 = vmatmul.mubr.bf16.gmra.mrb[0].mxu0 %v691
      %v777 = vpop.f32.mrb[0].mxu0
      %v778 = vadd.f32 0.0, %v777
      %v779 = vpop.f32.mrb[0].mxu0
      %v780 = vpop.f32.mrb[0].mxu0
      %v781 = vpop.f32.mrb[0].mxu0
      %782 = vdwg.mxu0
      %v783 = vadd.f32 %v676, %v737
      %v784 = vadd.f32 %v677, %v739
      %v785 = vadd.f32 %v678, %v778
      %s786 = scalar_lea.vmem %s1, 20
      %v787 = vld [vmem:[%s786] sm:$0xf]
      %788 = vrot.lane.b32.xlu0 %v259, 108
      %v789 = vpop.permute.xlu0 %788
      %790 = vrot.lane.b32.xlu0 %v267, 108
      %v791 = vpop.permute.xlu0 %790
      %792 = vrot.lane.b32.xlu0 %v266, 108
      %v793 = vpop.permute.xlu0 %792
      %vm794 = vcmask 883712
      %v795 = vsel %vm794, %v789, %v791
      %v796 = vsel %vm794, %v791, %v793
      %v798 = vsel %vm277, %v787, 0
      %v801 = vsel %vm281, %v795, 0
      %v804 = vsel %vm281, %v796, 0
      %v807 = vsel %vm281, %v793, 0
      %809 = vmatprep.subr.bf16.mxu0 %v804
      %810 = vmatpush1.bf16.msra.mxu0 %v801
      %811 = vmatprep.subr.bf16.mxu0 0
      %812 = vmatpush1.bf16.msra.mxu0 0
      %813 = vmatprep.subr.bf16.mxu0 0
      %814 = vmatpush1.bf16.msra.mxu0 0
      %815 = vmatprep.subr.bf16.mxu0 0
      %816 = vmatpush1.bf16.msra.mxu0 0
      %817 = vmatprep.subr.bf16.mxu0 0
      %818 = vmatpush1.bf16.msra.mxu0 0
      %819 = vmatprep.subr.bf16.mxu0 0
      %820 = vmatpush1.bf16.msra.mxu0 0
      %821 = vmatprep.subr.bf16.mxu0 0
      %822 = vmatpush1.bf16.msra.mxu0 0
      %823 = vmatprep.subr.bf16.mxu0 0
      %824 = vmatpush1.bf16.msra.mxu0 0
      %825 = vmatprep.subr.bf16.mxu0 0
      %826 = vmatpush1.bf16.msra.mxu0 0
      %827 = vmatprep.subr.bf16.mxu0 0
      %828 = vmatpush1.bf16.msra.mxu0 0
      %829 = vmatprep.subr.bf16.mxu0 0
      %830 = vmatpush1.bf16.msra.mxu0 0
      %831 = vmatprep.subr.bf16.mxu0 0
      %832 = vmatpush1.bf16.msra.mxu0 0
      %833 = vmatprep.subr.bf16.mxu0 0
      %834 = vmatpush1.bf16.msra.mxu0 0
      %835 = vmatprep.subr.bf16.mxu0 0
      %836 = vmatpush1.bf16.msra.mxu0 0
      %837 = vmatprep.subr.bf16.mxu0 0
      %838 = vmatpush1.bf16.msra.mxu0 0
      %839 = vmatprep.subr.bf16.mxu0 0
      %840 = vmatpush1.bf16.msra.mxu0 0
      %841 = vmatprep.mubr.bf16.mxu0 0
      %842 = vmatmul.mubr.bf16.gmra.mrb[0].mxu0 %v798
      %v843 = vpop.f32.mrb[0].mxu0
      %v844 = vadd.f32 0.0, %v843
      %v845 = vpop.f32.mrb[0].mxu0
      %v846 = vadd.f32 0.0, %v845
      %v847 = vpop.f32.mrb[0].mxu0
      %v848 = vpop.f32.mrb[0].mxu0
      %849 = vdwg.mxu0
      %850 = vmatprep.subr.bf16.mxu0 0
      %851 = vmatpush1.bf16.msra.mxu0 %v807
      %852 = vmatprep.subr.bf16.mxu0 0
      %853 = vmatpush1.bf16.msra.mxu0 0
      %854 = vmatprep.subr.bf16.mxu0 0
      %855 = vmatpush1.bf16.msra.mxu0 0
      %856 = vmatprep.subr.bf16.mxu0 0
      %857 = vmatpush1.bf16.msra.mxu0 0
      %858 = vmatprep.subr.bf16.mxu0 0
      %859 = vmatpush1.bf16.msra.mxu0 0
      %860 = vmatprep.subr.bf16.mxu0 0
      %861 = vmatpush1.bf16.msra.mxu0 0
      %862 = vmatprep.subr.bf16.mxu0 0
      %863 = vmatpush1.bf16.msra.mxu0 0
      %864 = vmatprep.subr.bf16.mxu0 0
      %865 = vmatpush1.bf16.msra.mxu0 0
      %866 = vmatprep.subr.bf16.mxu0 0
      %867 = vmatpush1.bf16.msra.mxu0 0
      %868 = vmatprep.subr.bf16.mxu0 0
      %869 = vmatpush1.bf16.msra.mxu0 0
      %870 = vmatprep.subr.bf16.mxu0 0
      %871 = vmatpush1.bf16.msra.mxu0 0
      %872 = vmatprep.subr.bf16.mxu0 0
      %873 = vmatpush1.bf16.msra.mxu0 0
      %874 = vmatprep.subr.bf16.mxu0 0
      %875 = vmatpush1.bf16.msra.mxu0 0
      %876 = vmatprep.subr.bf16.mxu0 0
      %877 = vmatpush1.bf16.msra.mxu0 0
      %878 = vmatprep.subr.bf16.mxu0 0
      %879 = vmatpush1.bf16.msra.mxu0 0
      %880 = vmatprep.subr.bf16.mxu0 0
      %881 = vmatpush1.bf16.msra.mxu0 0
      %882 = vmatprep.mubr.bf16.mxu0 0
      %883 = vmatmul.mubr.bf16.gmra.mrb[0].mxu0 %v798
      %v884 = vpop.f32.mrb[0].mxu0
      %v885 = vadd.f32 0.0, %v884
      %v886 = vpop.f32.mrb[0].mxu0
      %v887 = vpop.f32.mrb[0].mxu0
      %v888 = vpop.f32.mrb[0].mxu0
      %889 = vdwg.mxu0
      %v890 = vadd.f32 %v783, %v844
      %v891 = vadd.f32 %v784, %v846
      %v892 = vadd.f32 %v785, %v885
      %s893 = scalar_lea.vmem %s1, 24
      %v894 = vld [vmem:[%s893] sm:$0xf]
      %v895 = vcombine.high %v266, %v266
      %896 = vrot.lane.b32.xlu0 %v259, 92
      %v897 = vpop.permute.xlu0 %896
      %898 = vrot.lane.b32.xlu0 %v267, 92
      %v899 = vpop.permute.xlu0 %898
      %900 = vrot.lane.b32.xlu0 %v266, 92
      %v901 = vpop.permute.xlu0 %900
      %902 = vrot.lane.b32.xlu0 %v895, 92
      %v903 = vpop.permute.xlu0 %902
      %vm904 = vcmask 752640
      %v905 = vsel %vm904, %v897, %v899
      %v906 = vsel %vm904, %v899, %v901
      %v907 = vsel %vm904, %v901, %v903
      %v909 = vsel %vm277, %v894, 0
      %v912 = vsel %vm281, %v905, 0
      %v915 = vsel %vm281, %v906, 0
      %v918 = vsel %vm281, %v907, 0
      %920 = vmatprep.subr.bf16.mxu0 %v915
      %921 = vmatpush1.bf16.msra.mxu0 %v912
      %922 = vmatprep.subr.bf16.mxu0 0
      %923 = vmatpush1.bf16.msra.mxu0 0
      %924 = vmatprep.subr.bf16.mxu0 0
      %925 = vmatpush1.bf16.msra.mxu0 0
      %926 = vmatprep.subr.bf16.mxu0 0
      %927 = vmatpush1.bf16.msra.mxu0 0
      %928 = vmatprep.subr.bf16.mxu0 0
      %929 = vmatpush1.bf16.msra.mxu0 0
      %930 = vmatprep.subr.bf16.mxu0 0
      %931 = vmatpush1.bf16.msra.mxu0 0
      %932 = vmatprep.subr.bf16.mxu0 0
      %933 = vmatpush1.bf16.msra.mxu0 0
      %934 = vmatprep.subr.bf16.mxu0 0
      %935 = vmatpush1.bf16.msra.mxu0 0
      %936 = vmatprep.subr.bf16.mxu0 0
      %937 = vmatpush1.bf16.msra.mxu0 0
      %938 = vmatprep.subr.bf16.mxu0 0
      %939 = vmatpush1.bf16.msra.mxu0 0
      %940 = vmatprep.subr.bf16.mxu0 0
      %941 = vmatpush1.bf16.msra.mxu0 0
      %942 = vmatprep.subr.bf16.mxu0 0
      %943 = vmatpush1.bf16.msra.mxu0 0
      %944 = vmatprep.subr.bf16.mxu0 0
      %945 = vmatpush1.bf16.msra.mxu0 0
      %946 = vmatprep.subr.bf16.mxu0 0
      %947 = vmatpush1.bf16.msra.mxu0 0
      %948 = vmatprep.subr.bf16.mxu0 0
      %949 = vmatpush1.bf16.msra.mxu0 0
      %950 = vmatprep.subr.bf16.mxu0 0
      %951 = vmatpush1.bf16.msra.mxu0 0
      %952 = vmatprep.mubr.bf16.mxu0 0
      %953 = vmatmul.mubr.bf16.gmra.mrb[0].mxu0 %v909
      %v954 = vpop.f32.mrb[0].mxu0
      %v955 = vadd.f32 0.0, %v954
      %v956 = vpop.f32.mrb[0].mxu0
      %v957 = vadd.f32 0.0, %v956
      %v958 = vpop.f32.mrb[0].mxu0
      %v959 = vpop.f32.mrb[0].mxu0
      %960 = vdwg.mxu0
      %961 = vmatprep.subr.bf16.mxu0 0
      %962 = vmatpush1.bf16.msra.mxu0 %v918
      %963 = vmatprep.subr.bf16.mxu0 0
      %964 = vmatpush1.bf16.msra.mxu0 0
      %965 = vmatprep.subr.bf16.mxu0 0
      %966 = vmatpush1.bf16.msra.mxu0 0
      %967 = vmatprep.subr.bf16.mxu0 0
      %968 = vmatpush1.bf16.msra.mxu0 0
      %969 = vmatprep.subr.bf16.mxu0 0
      %970 = vmatpush1.bf16.msra.mxu0 0
      %971 = vmatprep.subr.bf16.mxu0 0
      %972 = vmatpush1.bf16.msra.mxu0 0
      %973 = vmatprep.subr.bf16.mxu0 0
      %974 = vmatpush1.bf16.msra.mxu0 0
      %975 = vmatprep.subr.bf16.mxu0 0
      %976 = vmatpush1.bf16.msra.mxu0 0
      %977 = vmatprep.subr.bf16.mxu0 0
      %978 = vmatpush1.bf16.msra.mxu0 0
      %979 = vmatprep.subr.bf16.mxu0 0
      %980 = vmatpush1.bf16.msra.mxu0 0
      %981 = vmatprep.subr.bf16.mxu0 0
      %982 = vmatpush1.bf16.msra.mxu0 0
      %983 = vmatprep.subr.bf16.mxu0 0
      %984 = vmatpush1.bf16.msra.mxu0 0
      %985 = vmatprep.subr.bf16.mxu0 0
      %986 = vmatpush1.bf16.msra.mxu0 0
      %987 = vmatprep.subr.bf16.mxu0 0
      %988 = vmatpush1.bf16.msra.mxu0 0
      %989 = vmatprep.subr.bf16.mxu0 0
      %990 = vmatpush1.bf16.msra.mxu0 0
      %991 = vmatprep.subr.bf16.mxu0 0
      %992 = vmatpush1.bf16.msra.mxu0 0
      %993 = vmatprep.mubr.bf16.mxu0 0
      %994 = vmatmul.mubr.bf16.gmra.mrb[0].mxu0 %v909
      %v995 = vpop.f32.mrb[0].mxu0
      %v996 = vadd.f32 0.0, %v995
      %v997 = vpop.f32.mrb[0].mxu0
      %v998 = vpop.f32.mrb[0].mxu0
      %v999 = vpop.f32.mrb[0].mxu0
      %1000 = vdwg.mxu0
      %v1001 = vadd.f32 %v890, %v955
      %v1002 = vadd.f32 %v891, %v957
      %v1003 = vadd.f32 %v892, %v996
      %s1004 = scalar_lea.vmem %s1, 28
      %v1005 = vld [vmem:[%s1004] sm:$0xf]
      %1006 = vrot.lane.b32.xlu0 %v259, 91
      %v1007 = vpop.permute.xlu0 %1006
      %1008 = vrot.lane.b32.xlu0 %v267, 91
      %v1009 = vpop.permute.xlu0 %1008
      %1010 = vrot.lane.b32.xlu0 %v266, 91
      %v1011 = vpop.permute.xlu0 %1010
      %1012 = vrot.lane.b32.xlu0 %v895, 91
      %v1013 = vpop.permute.xlu0 %1012
      %vm1014 = vcmask 744448
      %v1015 = vsel %vm1014, %v1007, %v1009
      %v1016 = vsel %vm1014, %v1009, %v1011
      %v1017 = vsel %vm1014, %v1011, %v1013
      %v1019 = vsel %vm277, %v1005, 0
      %v1022 = vsel %vm281, %v1015, 0
      %v1025 = vsel %vm281, %v1016, 0
      %v1028 = vsel %vm281, %v1017, 0
      %1030 = vmatprep.subr.bf16.mxu0 %v1025
      %1031 = vmatpush1.bf16.msra.mxu0 %v1022
      %1032 = vmatprep.subr.bf16.mxu0 0
      %1033 = vmatpush1.bf16.msra.mxu0 0
      %1034 = vmatprep.subr.bf16.mxu0 0
      %1035 = vmatpush1.bf16.msra.mxu0 0
      %1036 = vmatprep.subr.bf16.mxu0 0
      %1037 = vmatpush1.bf16.msra.mxu0 0
      %1038 = vmatprep.subr.bf16.mxu0 0
      %1039 = vmatpush1.bf16.msra.mxu0 0
      %1040 = vmatprep.subr.bf16.mxu0 0
      %1041 = vmatpush1.bf16.msra.mxu0 0
      %1042 = vmatprep.subr.bf16.mxu0 0
      %1043 = vmatpush1.bf16.msra.mxu0 0
      %1044 = vmatprep.subr.bf16.mxu0 0
      %1045 = vmatpush1.bf16.msra.mxu0 0
      %1046 = vmatprep.subr.bf16.mxu0 0
      %1047 = vmatpush1.bf16.msra.mxu0 0
      %1048 = vmatprep.subr.bf16.mxu0 0
      %1049 = vmatpush1.bf16.msra.mxu0 0
      %1050 = vmatprep.subr.bf16.mxu0 0
      %1051 = vmatpush1.bf16.msra.mxu0 0
      %1052 = vmatprep.subr.bf16.mxu0 0
      %1053 = vmatpush1.bf16.msra.mxu0 0
      %1054 = vmatprep.subr.bf16.mxu0 0
      %1055 = vmatpush1.bf16.msra.mxu0 0
      %1056 = vmatprep.subr.bf16.mxu0 0
      %1057 = vmatpush1.bf16.msra.mxu0 0
      %1058 = vmatprep.subr.bf16.mxu0 0
      %1059 = vmatpush1.bf16.msra.mxu0 0
      %1060 = vmatprep.subr.bf16.mxu0 0
      %1061 = vmatpush1.bf16.msra.mxu0 0
      %1062 = vmatprep.mubr.bf16.mxu0 0
      %1063 = vmatmul.mubr.bf16.gmra.mrb[0].mxu0 %v1019
      %v1064 = vpop.f32.mrb[0].mxu0
      %v1065 = vadd.f32 0.0, %v1064
      %v1066 = vpop.f32.mrb[0].mxu0
      %v1067 = vadd.f32 0.0, %v1066
      %v1068 = vpop.f32.mrb[0].mxu0
      %v1069 = vpop.f32.mrb[0].mxu0
      %1070 = vdwg.mxu0
      %1071 = vmatprep.subr.bf16.mxu0 0
      %1072 = vmatpush1.bf16.msra.mxu0 %v1028
      %1073 = vmatprep.subr.bf16.mxu0 0
      %1074 = vmatpush1.bf16.msra.mxu0 0
      %1075 = vmatprep.subr.bf16.mxu0 0
      %1076 = vmatpush1.bf16.msra.mxu0 0
      %1077 = vmatprep.subr.bf16.mxu0 0
      %1078 = vmatpush1.bf16.msra.mxu0 0
      %1079 = vmatprep.subr.bf16.mxu0 0
      %1080 = vmatpush1.bf16.msra.mxu0 0
      %1081 = vmatprep.subr.bf16.mxu0 0
      %1082 = vmatpush1.bf16.msra.mxu0 0
      %1083 = vmatprep.subr.bf16.mxu0 0
      %1084 = vmatpush1.bf16.msra.mxu0 0
      %1085 = vmatprep.subr.bf16.mxu0 0
      %1086 = vmatpush1.bf16.msra.mxu0 0
      %1087 = vmatprep.subr.bf16.mxu0 0
      %1088 = vmatpush1.bf16.msra.mxu0 0
      %1089 = vmatprep.subr.bf16.mxu0 0
      %1090 = vmatpush1.bf16.msra.mxu0 0
      %1091 = vmatprep.subr.bf16.mxu0 0
      %1092 = vmatpush1.bf16.msra.mxu0 0
      %1093 = vmatprep.subr.bf16.mxu0 0
      %1094 = vmatpush1.bf16.msra.mxu0 0
      %1095 = vmatprep.subr.bf16.mxu0 0
      %1096 = vmatpush1.bf16.msra.mxu0 0
      %1097 = vmatprep.subr.bf16.mxu0 0
      %1098 = vmatpush1.bf16.msra.mxu0 0
      %1099 = vmatprep.subr.bf16.mxu0 0
      %1100 = vmatpush1.bf16.msra.mxu0 0
      %1101 = vmatprep.subr.bf16.mxu0 0
      %1102 = vmatpush1.bf16.msra.mxu0 0
      %1103 = vmatprep.mubr.bf16.mxu0 0
      %1104 = vmatmul.mubr.bf16.gmra.mrb[0].mxu0 %v1019
      %v1105 = vpop.f32.mrb[0].mxu0
      %v1106 = vadd.f32 0.0, %v1105
      %v1107 = vpop.f32.mrb[0].mxu0
      %v1108 = vpop.f32.mrb[0].mxu0
      %v1109 = vpop.f32.mrb[0].mxu0
      %1110 = vdwg.mxu0
      %v1111 = vadd.f32 %v1001, %v1065
      %v1112 = vadd.f32 %v1002, %v1067
      %v1113 = vadd.f32 %v1003, %v1106
      %s1114 = scalar_lea.vmem %s1, 32
      %v1115 = vld [vmem:[%s1114] sm:$0xf]
      %1116 = vrot.lane.b32.xlu0 %v259, 90
      %v1117 = vpop.permute.xlu0 %1116
      %1118 = vrot.lane.b32.xlu0 %v267, 90
      %v1119 = vpop.permute.xlu0 %1118
      %1120 = vrot.lane.b32.xlu0 %v266, 90
      %v1121 = vpop.permute.xlu0 %1120
      %1122 = vrot.lane.b32.xlu0 %v895, 90
      %v1123 = vpop.permute.xlu0 %1122
      %vm1124 = vcmask 736256
      %v1125 = vsel %vm1124, %v1117, %v1119
      %v1126 = vsel %vm1124, %v1119, %v1121
      %v1127 = vsel %vm1124, %v1121, %v1123
      %v1129 = vsel %vm277, %v1115, 0
      %v1132 = vsel %vm281, %v1125, 0
      %v1135 = vsel %vm281, %v1126, 0
      %v1138 = vsel %vm281, %v1127, 0
      %1140 = vmatprep.subr.bf16.mxu0 %v1135
      %1141 = vmatpush1.bf16.msra.mxu0 %v1132
      %1142 = vmatprep.subr.bf16.mxu0 0
      %1143 = vmatpush1.bf16.msra.mxu0 0
      %1144 = vmatprep.subr.bf16.mxu0 0
      %1145 = vmatpush1.bf16.msra.mxu0 0
      %1146 = vmatprep.subr.bf16.mxu0 0
      %1147 = vmatpush1.bf16.msra.mxu0 0
      %1148 = vmatprep.subr.bf16.mxu0 0
      %1149 = vmatpush1.bf16.msra.mxu0 0
      %1150 = vmatprep.subr.bf16.mxu0 0
      %1151 = vmatpush1.bf16.msra.mxu0 0
      %1152 = vmatprep.subr.bf16.mxu0 0
      %1153 = vmatpush1.bf16.msra.mxu0 0
      %1154 = vmatprep.subr.bf16.mxu0 0
      %1155 = vmatpush1.bf16.msra.mxu0 0
      %1156 = vmatprep.subr.bf16.mxu0 0
      %1157 = vmatpush1.bf16.msra.mxu0 0
      %1158 = vmatprep.subr.bf16.mxu0 0
      %1159 = vmatpush1.bf16.msra.mxu0 0
      %1160 = vmatprep.subr.bf16.mxu0 0
      %1161 = vmatpush1.bf16.msra.mxu0 0
      %1162 = vmatprep.subr.bf16.mxu0 0
      %1163 = vmatpush1.bf16.msra.mxu0 0
      %1164 = vmatprep.subr.bf16.mxu0 0
      %1165 = vmatpush1.bf16.msra.mxu0 0
      %1166 = vmatprep.subr.bf16.mxu0 0
      %1167 = vmatpush1.bf16.msra.mxu0 0
      %1168 = vmatprep.subr.bf16.mxu0 0
      %1169 = vmatpush1.bf16.msra.mxu0 0
      %1170 = vmatprep.subr.bf16.mxu0 0
      %1171 = vmatpush1.bf16.msra.mxu0 0
      %1172 = vmatprep.mubr.bf16.mxu0 0
      %1173 = vmatmul.mubr.bf16.gmra.mrb[0].mxu0 %v1129
      %v1174 = vpop.f32.mrb[0].mxu0
      %v1175 = vadd.f32 0.0, %v1174
      %v1176 = vpop.f32.mrb[0].mxu0
      %v1177 = vadd.f32 0.0, %v1176
      %v1178 = vpop.f32.mrb[0].mxu0
      %v1179 = vpop.f32.mrb[0].mxu0
      %1180 = vdwg.mxu0
      %1181 = vmatprep.subr.bf16.mxu0 0
      %1182 = vmatpush1.bf16.msra.mxu0 %v1138
      %1183 = vmatprep.subr.bf16.mxu0 0
      %1184 = vmatpush1.bf16.msra.mxu0 0
      %1185 = vmatprep.subr.bf16.mxu0 0
      %1186 = vmatpush1.bf16.msra.mxu0 0
      %1187 = vmatprep.subr.bf16.mxu0 0
      %1188 = vmatpush1.bf16.msra.mxu0 0
      %1189 = vmatprep.subr.bf16.mxu0 0
      %1190 = vmatpush1.bf16.msra.mxu0 0
      %1191 = vmatprep.subr.bf16.mxu0 0
      %1192 = vmatpush1.bf16.msra.mxu0 0
      %1193 = vmatprep.subr.bf16.mxu0 0
      %1194 = vmatpush1.bf16.msra.mxu0 0
      %1195 = vmatprep.subr.bf16.mxu0 0
      %1196 = vmatpush1.bf16.msra.mxu0 0
      %1197 = vmatprep.subr.bf16.mxu0 0
      %1198 = vmatpush1.bf16.msra.mxu0 0
      %1199 = vmatprep.subr.bf16.mxu0 0
      %1200 = vmatpush1.bf16.msra.mxu0 0
      %1201 = vmatprep.subr.bf16.mxu0 0
      %1202 = vmatpush1.bf16.msra.mxu0 0
      %1203 = vmatprep.subr.bf16.mxu0 0
      %1204 = vmatpush1.bf16.msra.mxu0 0
      %1205 = vmatprep.subr.bf16.mxu0 0
      %1206 = vmatpush1.bf16.msra.mxu0 0
      %1207 = vmatprep.subr.bf16.mxu0 0
      %1208 = vmatpush1.bf16.msra.mxu0 0
      %1209 = vmatprep.subr.bf16.mxu0 0
      %1210 = vmatpush1.bf16.msra.mxu0 0
      %1211 = vmatprep.subr.bf16.mxu0 0
      %1212 = vmatpush1.bf16.msra.mxu0 0
      %1213 = vmatprep.mubr.bf16.mxu0 0
      %1214 = vmatmul.mubr.bf16.gmra.mrb[0].mxu0 %v1129
      %v1215 = vpop.f32.mrb[0].mxu0
      %v1216 = vadd.f32 0.0, %v1215
      %v1217 = vpop.f32.mrb[0].mxu0
      %v1218 = vpop.f32.mrb[0].mxu0
      %v1219 = vpop.f32.mrb[0].mxu0
      %1220 = vdwg.mxu0
      %v1221 = vadd.f32 %v1111, %v1175
      %v1222 = vadd.f32 %v1112, %v1177
      %v1223 = vadd.f32 %v1113, %v1216
      %v1224 = vld [vmem:[%s2] sm:$0x7]
      %v1226 = vlaneseq
      %v1227 = vshrl.u32 %v1226, 7
      %v1228 = vsub.s32 0, %v1227
      %v1229 = vrot.slane %v1224, %v1228
      %v1230 = vlaneseq
      %v1231 = vshrl.u32 %v1230, 7
      %v1232 = vsub.s32 1, %v1231
      %v1233 = vrot.slane %v1224, %v1232
      %v1234 = vlaneseq
      %v1235 = vshrl.u32 %v1234, 7
      %v1236 = vsub.s32 2, %v1235
      %v1237 = vrot.slane %v1224, %v1236
      %v1241 = vmul.f32 %v1221, %v1229
      %v1242 = vmul.f32 %v1222, %v1233
      %v1243 = vmul.f32 %v1223, %v1237
      %v1244 = vpack.c.bf16 %v1241, %v1241
      %v1245 = vpack.c.bf16 %v1242, %v1242
      %v1246 = vpack.c.bf16 %v1243, %v1243
      %v1250 = vunpack.c.l.b16 %v1244
      %v1251 = vunpack.c.l.b16 %v1245
      %v1252 = vunpack.c.l.b16 %v1246
      %v1253 = vpack.c.b16 %v1251, %v1250
      %v1254 = vpack.c.b16 %v1252, %v1252
      %1257 = vst [vmem:[%s237] sm:$0xff] %v1253
      %vm1258 = vcmask 863232
      %1259 = vst.msk [vmem:[%s237 + $0x8] sm:$0xf] %vm1258, %v1254
      %v1260 = vadd.f32 %v1241, %v1242
      %vm1261 = vcmask 867328
      %v1262 = vsel %vm1261, %v1243, 0.0
      %v1263 = vadd.f32 %v1260, %v1262
      %1264 = vadd.xlane.f32.xlu0 %v1263
      %v1265 = vpop.xlane.xlu0 %1264
      %vm1266 = vcmask 7168
      %1267 = vst.msk [vmem:[%s241] sm:$0xff] %vm1266, %v1265
      %v1268 = vmul.f32 %v1241, %v1241
      %v1269 = vmul.f32 %v1242, %v1242
      %v1270 = vmul.f32 %v1243, %v1243
      %v1271 = vadd.f32 %v1268, %v1269
      %v1272 = vsel %vm1261, %v1270, 0.0
      %v1273 = vadd.f32 %v1271, %v1272
      %1274 = vadd.xlane.f32.xlu0 %v1273
      %v1275 = vpop.xlane.xlu0 %1274
      %1276 = vst.msk [vmem:[%s245] sm:$0xff] %vm1266, %v1275
      %p1277 = scmp.lt.s32.totalorder %s17, 1
      %s1278 = scalar_select %p1277, %s17, 1
      %s1279 = smul.addr %s1278, 3
      %s1280 = smul.addr %s1279, 4
      %s1281 = scalar_lea.vmem %s3, %s1280
      %p1282 = scmp.lt.s32.totalorder %s17, 1
      %s1283 = scalar_select %p1282, %s17, 1
      %s1284 = smul.addr %s1283, 8
      %s1285 = scalar_lea.vmem %s4, %s1284
      %p1286 = scmp.lt.s32.totalorder %s17, 1
      %s1287 = scalar_select %p1286, %s17, 1
      %s1288 = smul.addr %s1287, 8
      %s1289 = scalar_lea.vmem %s5, %s1288
      // Predicated region
      $region33: #{conv_block_forward.3} parent=31 // pred_check
        %p1290 = pneg %p103
      $region34: #{conv_block_forward.3} parent=31 // pred_check_branch
        %1292 = sbr.rel (%p1290) target = $region36
      $region35: #{conv_block_forward.3} parent=31 // pred_region
        _
      $region36: #{conv_block_forward.3} parent=31 // pred_fallthru
        _
      // Predicated region
      $region37: #{conv_block_forward.3} parent=31 // pred_check
        %p1293 = pneg %p129
      $region38: #{conv_block_forward.3} parent=31 // pred_check_branch
        %1295 = sbr.rel (%p1293) target = $region40
      $region39: #{conv_block_forward.3} parent=31 // pred_region
        _
      $region40: #{conv_block_forward.3} parent=31 // pred_fallthru
        _
      // Predicated region
      $region41: #{conv_block_forward.3} parent=31 // pred_check
        %p1296 = pneg %p155
      $region42: #{conv_block_forward.3} parent=31 // pred_check_branch
        %1298 = sbr.rel (%p1296) target = $region44
      $region43: #{conv_block_forward.3} parent=31 // pred_region
        _
      $region44: #{conv_block_forward.3} parent=31 // pred_fallthru
        _
    $region32: #{conv_block_forward.3} parent=5 // pred_fallthru
      _
    %p1299 = scmp.le.s32.totalorder 2, %s12
    // Predicated region
    $region45: #{conv_block_forward.3} parent=5 // pred_check
      %p1300 = pneg %p1299
    $region46: #{conv_block_forward.3} parent=5 // pred_check_branch
      %1302 = sbr.rel (%p1300) target = $region48
    $region47: #{conv_block_forward.3} parent=5 // pred_region
      %s1303 = ssub.s32 %s12, 2
      // Predicated region
      $region49: #{conv_block_forward.3} parent=47 // pred_check
        %p1304 = pneg %p109
      $region50: #{conv_block_forward.3} parent=47 // pred_check_branch
        %1306 = sbr.rel (%p1304) target = $region52
      $region51: #{conv_block_forward.3} parent=47 // pred_region
        %p1307 = scmp.lt.s32.totalorder %s18, 1
        %s1308 = scalar_select %p1307, %s18, 1
        %s1309 = smul.addr %s1308, 3
        %s1310 = smul.addr %s1309, 4
        %s1311 = scalar_lea.vmem %s3, %s1310
      $region52: #{conv_block_forward.3} parent=47 // pred_fallthru
        _
      // Predicated region
      $region53: #{conv_block_forward.3} parent=47 // pred_check
        %p1312 = pneg %p135
      $region54: #{conv_block_forward.3} parent=47 // pred_check_branch
        %1314 = sbr.rel (%p1312) target = $region56
      $region55: #{conv_block_forward.3} parent=47 // pred_region
        %p1315 = scmp.lt.s32.totalorder %s18, 1
        %s1316 = scalar_select %p1315, %s18, 1
        %s1317 = smul.addr %s1316, 8
        %s1318 = scalar_lea.vmem %s4, %s1317
      $region56: #{conv_block_forward.3} parent=47 // pred_fallthru
        _
      // Predicated region
      $region57: #{conv_block_forward.3} parent=47 // pred_check
        %p1319 = pneg %p161
      $region58: #{conv_block_forward.3} parent=47 // pred_check_branch
        %1321 = sbr.rel (%p1319) target = $region60
      $region59: #{conv_block_forward.3} parent=47 // pred_region
        %p1322 = scmp.lt.s32.totalorder %s18, 1
        %s1323 = scalar_select %p1322, %s18, 1
        %s1324 = smul.addr %s1323, 8
        %s1325 = scalar_lea.vmem %s5, %s1324
      $region60: #{conv_block_forward.3} parent=47 // pred_fallthru
        _
    $region48: #{conv_block_forward.3} parent=5 // pred_fallthru
      _
  $region6: #{conv_block_forward.3} parent=0 // loop_footer
    %s16 = sadd.s32 1, %s12
  $region7: #{conv_block_forward.3} parent=0 // loop_footer_branch
    %11 = sbr.rel target = $region3
  $region8: #{conv_block_forward.3} parent=0 // loop_exit
    _

// kernel: conv_block_forward.5
$region0: #{conv_block_forward.5}
  #allocation0 [shape = 'u32[]', space=smem, size = 0x4, offset = 0x4, fixed_abs, tag = 'smem constant byte address 0x4 - core index']
  #allocation1 [shape = 'u32[144,128]{1,0:T(1,128)}', space=vmem, size = 0x12000, scoped, tag = 'internal scratch']
  %s0 = inlined_call_operand.vmem [shape: bf16[2,4,8,64], index: 0, kind: input, shape index: {}]
  %s1 = inlined_call_operand.vmem [shape: f32[8,1], index: 1, kind: input, shape index: {}]
  %s2 = inlined_call_operand.vmem [shape: f32[8,1], index: 2, kind: input, shape index: {}]
  %s3 = inlined_call_operand.vmem [shape: f32[2,8,64], index: 3, kind: output, shape index: {}]
  %s4 = sld [smem:[#allocation0]]
  $region45: #{conv_block_forward.5} parent=0
    _
  %s6 = ssub.s32 1, %s4
  %s7 = scalar_select 0, %s6, %s4
  loop: start=0, step=1, limit=4
  $region2: #{conv_block_forward.5} parent=0 // loop_pre_header
    _
  $region3: #{conv_block_forward.5} parent=0 // loop_header
    %s9 = sphi 0, %s13
    %p10 = scmp.ge.s32.totalorder %s9, 4
    %s19 = sphi 0, %s21
    %s22 = sphi 0, %s19
    %s23 = sphi 0, %s22
    %s39 = sphi 0, %s23
    %s43 = sphi 0, %s43
    %s45 = sphi 0, %s43
    %s46 = sphi 0, %s45
    %s60 = sphi 0, %s46
    %s64 = sphi 0, %s64
    %s66 = sphi 0, %s64
    %s67 = sphi 0, %s66
    %s81 = sphi 0, %s67
    %s87 = sphi 0, %s89
    %s90 = sphi 0, %s87
    %s91 = sphi 0, %s90
    %s107 = sphi 0, %s91
  $region4: #{conv_block_forward.5} parent=0 // loop_header_branch
    %12 = sbr.rel (%p10) target = $region8
  $region5: #{conv_block_forward.5} parent=0 // loop_body
    %s14 = ssub.s32 %s9, 1
    %s15 = ssub.s32 %s9, 2
    %s16 = sadd.s32 %s9, 1
    %s17 = ssub.s32 %s9, %s16
    %p18 = scmp.eq.s32.totalorder %s17, 0
    %s20 = sadd.s32 %s19, 1
    %s21 = scalar_select %p18, %s19, %s20
    %p24 = pneg %p18
    %p25 = scmp.eq.s32.totalorder %s9, 1
    %p26 = por %p24, %p25
    %p27 = scmp.ne.s32.totalorder %s19, %s22
    %p28 = scmp.eq.s32.totalorder %s9, 0
    %p29 = por %p27, %p28
    %p30 = scmp.ne.s32.totalorder %s19, %s22
    %p31 = scmp.eq.s32.totalorder %s14, 1
    %p32 = por %p30, %p31
    %p33 = scmp.ne.s32.totalorder %s22, %s23
    %p34 = scmp.eq.s32.totalorder %s14, 0
    %p35 = por %p33, %p34
    %p36 = scmp.ne.s32.totalorder %s22, %s23
    %p37 = scmp.eq.s32.totalorder %s15, 1
    %p38 = por %p36, %p37
    %p40 = scmp.ne.s32.totalorder %s23, %s39
    %p41 = scmp.eq.s32.totalorder %s15, 0
    %p42 = por %p40, %p41
    %s44 = sadd.s32 %s43, 1
    %p47 = scmp.eq.s32.totalorder %s9, 1
    %p48 = scmp.ne.s32.totalorder %s43, %s45
    %p49 = scmp.eq.s32.totalorder %s9, 0
    %p50 = por %p48, %p49
    %p51 = scmp.ne.s32.totalorder %s43, %s45
    %p52 = scmp.eq.s32.totalorder %s14, 1
    %p53 = por %p51, %p52
    %p54 = scmp.ne.s32.totalorder %s45, %s46
    %p55 = scmp.eq.s32.totalorder %s14, 0
    %p56 = por %p54, %p55
    %p57 = scmp.ne.s32.totalorder %s45, %s46
    %p58 = scmp.eq.s32.totalorder %s15, 1
    %p59 = por %p57, %p58
    %p61 = scmp.ne.s32.totalorder %s46, %s60
    %p62 = scmp.eq.s32.totalorder %s15, 0
    %p63 = por %p61, %p62
    %s65 = sadd.s32 %s64, 1
    %p68 = scmp.eq.s32.totalorder %s9, 1
    %p69 = scmp.ne.s32.totalorder %s64, %s66
    %p70 = scmp.eq.s32.totalorder %s9, 0
    %p71 = por %p69, %p70
    %p72 = scmp.ne.s32.totalorder %s64, %s66
    %p73 = scmp.eq.s32.totalorder %s14, 1
    %p74 = por %p72, %p73
    %p75 = scmp.ne.s32.totalorder %s66, %s67
    %p76 = scmp.eq.s32.totalorder %s14, 0
    %p77 = por %p75, %p76
    %p78 = scmp.ne.s32.totalorder %s66, %s67
    %p79 = scmp.eq.s32.totalorder %s15, 1
    %p80 = por %p78, %p79
    %p82 = scmp.ne.s32.totalorder %s67, %s81
    %p83 = scmp.eq.s32.totalorder %s15, 0
    %p84 = por %p82, %p83
    %s85 = ssub.s32 %s9, %s16
    %p86 = scmp.eq.s32.totalorder %s85, 0
    %s88 = sadd.s32 %s87, 1
    %s89 = scalar_select %p86, %s87, %s88
    %p92 = pneg %p86
    %p93 = scmp.eq.s32.totalorder %s9, 1
    %p94 = por %p92, %p93
    %p95 = scmp.ne.s32.totalorder %s87, %s90
    %p96 = scmp.eq.s32.totalorder %s9, 0
    %p97 = por %p95, %p96
    %p98 = scmp.ne.s32.totalorder %s87, %s90
    %p99 = scmp.eq.s32.totalorder %s14, 1
    %p100 = por %p98, %p99
    %p101 = scmp.ne.s32.totalorder %s90, %s91
    %p102 = scmp.eq.s32.totalorder %s14, 0
    %p103 = por %p101, %p102
    %p104 = scmp.ne.s32.totalorder %s90, %s91
    %p105 = scmp.eq.s32.totalorder %s15, 1
    %p106 = por %p104, %p105
    %p108 = scmp.ne.s32.totalorder %s91, %s107
    %p109 = scmp.eq.s32.totalorder %s15, 0
    %p110 = por %p108, %p109
    %p111 = scmp.le.s32.totalorder 1, %s9
    %p112 = scmp.lt.s32.totalorder %s9, 3
    %p113 = pnand %p111, %p112
    %p114 = pneg %p113
    // Predicated region
    $region9: #{conv_block_forward.5} parent=5 // pred_check
      _
    $region10: #{conv_block_forward.5} parent=5 // pred_check_branch
      %116 = sbr.rel (%p113) target = $region12
    $region11: #{conv_block_forward.5} parent=5 // pred_region
      %s117 = ssub.s32 %s9, 1
      // Predicated region
      $region13: #{conv_block_forward.5} parent=11 // pred_check
        %p118 = pneg %p56
      $region14: #{conv_block_forward.5} parent=11 // pred_check_branch
        %120 = sbr.rel (%p118) target = $region16
      $region15: #{conv_block_forward.5} parent=11 // pred_region
        _
      $region16: #{conv_block_forward.5} parent=11 // pred_fallthru
        _
      // Predicated region
      $region17: #{conv_block_forward.5} parent=11 // pred_check
        %p121 = pneg %p77
      $region18: #{conv_block_forward.5} parent=11 // pred_check_branch
        %123 = sbr.rel (%p121) target = $region20
      $region19: #{conv_block_forward.5} parent=11 // pred_region
        _
      $region20: #{conv_block_forward.5} parent=11 // pred_fallthru
        _
    $region12: #{conv_block_forward.5} parent=5 // pred_fallthru
      _
    %p124 = scmp.lt.s32.totalorder %s9, 2
    // Predicated region
    $region21: #{conv_block_forward.5} parent=5 // pred_check
      %p125 = pneg %p124
    $region22: #{conv_block_forward.5} parent=5 // pred_check_branch
      %127 = sbr.rel (%p125) target = $region24
    $region23: #{conv_block_forward.5} parent=5 // pred_region
      // Predicated region
      $region25: #{conv_block_forward.5} parent=23 // pred_check
        %p128 = pneg %p29
      $region26: #{conv_block_forward.5} parent=23 // pred_check_branch
        %130 = sbr.rel (%p128) target = $region28
      $region27: #{conv_block_forward.5} parent=23 // pred_region
        %p131 = scmp.lt.s32.totalorder %s9, 1
        %s132 = scalar_select %p131, %s9, 1
        %s133 = smul.addr %s132, 4
        %s134 = smul.addr %s133, 4
        %s135 = scalar_lea.vmem %s0, %s134
      $region28: #{conv_block_forward.5} parent=23 // pred_fallthru
        _
    $region24: #{conv_block_forward.5} parent=5 // pred_fallthru
      _
    %p136 = scmp.le.s32.totalorder 1, %s9
    %p137 = scmp.lt.s32.totalorder %s9, 3
    %p138 = pnand %p136, %p137
    %p139 = pneg %p138
    // Predicated region
    $region29: #{conv_block_forward.5} parent=5 // pred_check
      _
    $region30: #{conv_block_forward.5} parent=5 // pred_check_branch
      %141 = sbr.rel (%p138) target = $region32
    $region31: #{conv_block_forward.5} parent=5 // pred_region
      %s142 = ssub.s32 %s9, 1
      %p143 = scmp.lt.s32.totalorder %s14, 1
      %s144 = scalar_select %p143, %s14, 1
      %s145 = smul.addr %s144, 4
      %s146 = smul.addr %s145, 4
      %s147 = scalar_lea.vmem %s0, %s146
      %p148 = pneg %p35
      %p149 = pneg %p32
      %p150 = pneg %p56
      %p151 = pneg %p53
      %p152 = pneg %p77
      %p153 = pneg %p74
      %p154 = pneg %p103
      %p155 = pneg %p100
      %p156 = scmp.lt.s32.totalorder %s14, 1
      %s157 = scalar_select %p156, %s14, 1
      %s158 = smul.addr %s157, 8
      %s159 = scalar_lea.vmem %s3, %s158
      %p160 = scmp.lt.s32.totalorder %s14, 1
      %s161 = scalar_select %p160, %s14, 1
      %s162 = smul.addr %s161, 4
      %s163 = smul.addr %s162, 4
      %s164 = scalar_lea.vmem %s0, %s163
      %p165 = scmp.lt.s32.totalorder %s14, 1
      %s166 = scalar_select %p165, %s14, 1
      %s167 = smul.addr %s166, 8
      %s168 = scalar_lea.vmem %s3, %s167
      %v169 = vld [vmem:[%s1] sm:$0xff]
      %v170 = vld [vmem:[%s2] sm:$0xff]
      %v171 = vld [vmem:[%s164] sm:$0xf]
      %v172 = vunpack.c.l.bf16 %v171
      %174 = vset.pattern.permute.xlu0 0
      %175 = vperm.xlu0 %174, %v169
      %v176 = vpop.permute.xlu0 %175
      %v178 = vmul.f32 %v172, %v176
      %180 = vset.pattern.permute.xlu0 0
      %181 = vperm.xlu0 %180, %v170
      %v182 = vpop.permute.xlu0 %181
      %v184 = vadd.f32 %v178, %v182
      %v185 = vmax.f32 %v184, 0.0
      %s186 = scalar_lea.vmem %s164, 4
      %v187 = vld [vmem:[%s186] sm:$0xf]
      %v188 = vunpack.c.l.bf16 %v187
      %v189 = vmul.f32 %v188, %v176
      %v190 = vadd.f32 %v189, %v182
      %v191 = vmax.f32 %v190, 0.0
      %v192 = vadd.f32 %v185, %v191
      %s193 = scalar_lea.vmem %s164, 8
      %v194 = vld [vmem:[%s193] sm:$0xf]
      %v195 = vunpack.c.l.bf16 %v194
      %v196 = vmul.f32 %v195, %v176
      %v197 = vadd.f32 %v196, %v182
      %v198 = vmax.f32 %v197, 0.0
      %v199 = vadd.f32 %v192, %v198
      %s200 = scalar_lea.vmem %s164, 12
      %v201 = vld [vmem:[%s200] sm:$0xf]
      %v202 = vunpack.c.l.bf16 %v201
      %v203 = vmul.f32 %v202, %v176
      %v204 = vadd.f32 %v203, %v182
      %v205 = vmax.f32 %v204, 0.0
      %v206 = vadd.f32 %v199, %v205
      %v207 = vmul.f32 %v206, 0.25
      %vm208 = vcmask 523264
      %209 = vst.msk [vmem:[%s168] sm:$0xff] %vm208, %v207
      %p210 = scmp.lt.s32.totalorder %s14, 1
      %s211 = scalar_select %p210, %s14, 1
      %s212 = smul.addr %s211, 8
      %s213 = scalar_lea.vmem %s3, %s212
      // Predicated region
      $region33: #{conv_block_forward.5} parent=31 // pred_check
        %p214 = pneg %p100
      $region34: #{conv_block_forward.5} parent=31 // pred_check_branch
        %216 = sbr.rel (%p214) target = $region36
      $region35: #{conv_block_forward.5} parent=31 // pred_region
        _
      $region36: #{conv_block_forward.5} parent=31 // pred_fallthru
        _
    $region32: #{conv_block_forward.5} parent=5 // pred_fallthru
      _
    %p217 = scmp.le.s32.totalorder 2, %s9
    // Predicated region
    $region37: #{conv_block_forward.5} parent=5 // pred_check
      %p218 = pneg %p217
    $region38: #{conv_block_forward.5} parent=5 // pred_check_branch
      %220 = sbr.rel (%p218) target = $region40
    $region39: #{conv_block_forward.5} parent=5 // pred_region
      %s221 = ssub.s32 %s9, 2
      // Predicated region
      $region41: #{conv_block_forward.5} parent=39 // pred_check
        %p222 = pneg %p106
      $region42: #{conv_block_forward.5} parent=39 // pred_check_branch
        %224 = sbr.rel (%p222) target = $region44
      $region43: #{conv_block_forward.5} parent=39 // pred_region
        %p225 = scmp.lt.s32.totalorder %s15, 1
        %s226 = scalar_select %p225, %s15, 1
        %s227 = smul.addr %s226, 8
        %s228 = scalar_lea.vmem %s3, %s227
      $region44: #{conv_block_forward.5} parent=39 // pred_fallthru
        _
    $region40: #{conv_block_forward.5} parent=5 // pred_fallthru
      _
  $region6: #{conv_block_forward.5} parent=0 // loop_footer
    %s13 = sadd.s32 1, %s9
  $region7: #{conv_block_forward.5} parent=0 // loop_footer_branch
    %8 = sbr.rel target = $region3
  $region8: #{conv_block_forward.5} parent=0 // loop_exit
    _

</llo_original>
